<compile_context>
chip_gen: v7x
topology: tpu7x:2x2x1
jax: 0.10.0
libtpu: 0.0.40
codegen_flags: <defaults>
</compile_context>

<pallas_src>
import math
from functools import partial

import jax
import jax.numpy as jnp
from jax.experimental import pallas as pl
from jax.experimental.pallas import tpu as pltpu  # noqa: F401  (imported per template)

# ------------------------------ configuration ------------------------------
IMAGE_SIZE = 32
PATCH = 4
NUM_HEADS = 2
BN_EPS = 1e-5
LN_EPS = 1e-6                       # reference: partial(nn.LayerNorm, eps=1e-06)
SEQ = (IMAGE_SIZE // PATCH) ** 2 + 1            # 65 tokens (CLS + 64 patches)
SEQ_PAD = ((SEQ + 7) // 8) * 8                  # 72: per-image sublane-aligned stride

GENOTYPE_NORMAL = [("attn", 0), ("skip_connect", 1),
                   ("skip_connect", 2), ("attn", 1)]
GENOTYPE_CONCAT = [2, 3]
MULTIPLIER = len(GENOTYPE_CONCAT)               # final_combiner == 'concat'


# --------------------------- in-kernel building blocks ----------------------
def _layernorm(x, g, b):
    mean = jnp.mean(x, axis=-1, keepdims=True)
    xc = x - mean
    var = jnp.mean(xc * xc, axis=-1, keepdims=True)
    return xc * jax.lax.rsqrt(var + LN_EPS) * g + b


def _relu_conv_bn(chunks, w_ref, b_ref):
    """ReLUConvBN (ReLU -> 1x1 conv bias=False -> eval-mode BN folded into w,b).
    `chunks` is a list of (R, C_i) slabs standing for their channel concat; the
    concat is folded into row-blocks of w (offsets are multiples of 16)."""
    off = 0
    acc = None
    for ch in chunks:
        c_in = ch.shape[1]
        part = jnp.dot(jnp.maximum(ch, 0.0).astype(jnp.bfloat16),
                       w_ref[off:off + c_in, :],
                       preferred_element_type=jnp.float32)
        acc = part if acc is None else acc + part
        off += c_in
    return acc + b_ref[...]


def _attn_rows(q_rows, k_rows, vp_rows, out_b):
    """Attention core on pre-projected operands.
      q_rows : (rows, C) f32  q projection (softmax scale + bias folded), all heads in lanes
      k_rows : (S, C)    f32  k projection, all heads in lanes
      vp_rows: list[H] of (S, C) f32  per-head V with out_proj already folded in
      out_b  : (1, C)    f32
    Per-head scores use a lane-mask trick: zeroing the other head's lanes of q
    makes the full-lane contraction equal q_h @ k_h^T with no lane slicing."""
    rows, C = q_rows.shape
    dh = C // NUM_HEADS
    lane = jax.lax.broadcasted_iota(jnp.int32, (rows, C), 1)
    acc = None
    for h in range(NUM_HEADS):                                   # unrolled (H=2)
        q_h = jnp.where((lane >= h * dh) & (lane < (h + 1) * dh), q_rows, 0.0)
        s = jax.lax.dot_general(q_h, k_rows, (((1,), (1,)), ((), ())),
                                preferred_element_type=jnp.float32)      # (rows, S)
        m = jnp.max(s, axis=-1, keepdims=True)
        p = jnp.exp(s - m)
        p = p * pl.reciprocal(jnp.sum(p, axis=-1, keepdims=True), approx=True)
        contrib = jnp.dot(p.astype(jnp.bfloat16),
                          vp_rows[h].astype(jnp.bfloat16),
                          preferred_element_type=jnp.float32)            # (rows, C)
        acc = contrib if acc is None else acc + contrib
    return acc + out_b


def _mha_full(x, ap, B):
    """Full-row self-attention on the batch-stacked slab x: (B*SEQ_PAD, C) f32.
    Projections run once on the whole slab; QK^T / softmax / PV per batch."""
    x_bf = x.astype(jnp.bfloat16)
    q_all = jnp.dot(x_bf, ap["q_w"][...], preferred_element_type=jnp.float32) + ap["q_b"][...]
    k_all = jnp.dot(x_bf, ap["k_w"][...], preferred_element_type=jnp.float32) + ap["k_b"][...]
    vp_all = [jnp.dot(x_bf, ap["vp_w"][h], preferred_element_type=jnp.float32) + ap["vp_b"][h]
              for h in range(NUM_HEADS)]
    outs = []
    for b in range(B):
        off = b * SEQ_PAD
        o = _attn_rows(q_all[off:off + SEQ, :],
                       k_all[off:off + SEQ, :],
                       [v[off:off + SEQ, :] for v in vp_all],
                       ap["out_b"][...])                                  # (SEQ, C)
        outs.append(jnp.pad(o, ((0, SEQ_PAD - SEQ), (0, 0))))
    return jnp.concatenate(outs, axis=0)                                  # (B*SEQ_PAD, C)


def _mha_cls(x, ap, B):
    """CLS-query-only self-attention (final cell): K/V' from the full slab,
    q projected from each image's CLS row only. Returns list of (1, C) per batch."""
    x_bf = x.astype(jnp.bfloat16)
    k_all = jnp.dot(x_bf, ap["k_w"][...], preferred_element_type=jnp.float32) + ap["k_b"][...]
    vp_all = [jnp.dot(x_bf, ap["vp_w"][h], preferred_element_type=jnp.float32) + ap["vp_b"][h]
              for h in range(NUM_HEADS)]
    outs = []
    for b in range(B):
        off = b * SEQ_PAD
        xq = x[off:off + 1, :].astype(jnp.bfloat16)                       # (1, C)
        q = jnp.dot(xq, ap["q_w"][...], preferred_element_type=jnp.float32) + ap["q_b"][...]
        outs.append(_attn_rows(q, k_all[off:off + SEQ, :],
                               [v[off:off + SEQ, :] for v in vp_all],
                               ap["out_b"][...]))
    return outs


def _cell_full(s0_chunks, s1_chunks, cell, B):
    """ViTCell with full-row outputs (only needed when the result feeds another cell)."""
    s0 = _layernorm(_relu_conv_bn(s0_chunks, cell["pre0_w"], cell["pre0_b"]),
                    cell["ln_g"][...], cell["ln_b"][...])
    s1 = _layernorm(_relu_conv_bn(s1_chunks, cell["pre1_w"], cell["pre1_b"]),
                    cell["ln_g"][...], cell["ln_b"][...])
    states = [s0, s1]
    attn_it = iter(cell["attn"])
    for i in range(len(GENOTYPE_NORMAL) // 2):
        n1, i1 = GENOTYPE_NORMAL[2 * i]
        n2, i2 = GENOTYPE_NORMAL[2 * i + 1]
        h1 = states[i1]
        h2 = states[i2]
        if n1 == "attn":
            h1 = _mha_full(h1, next(attn_it), B)
        # else: skip_connect == Identity
        if n2 == "attn":
            h2 = _mha_full(h2, next(attn_it), B)
        # else: the reference DISCARDS op2(h2) for non-attn op2 -> h2 unchanged
        states.append(h1 + h2)
    return [states[i] for i in GENOTYPE_CONCAT]


def _cell_cls(s0_chunks, s1_chunks, cell, B):
    """Final ViTCell: only the CLS row of the concat output feeds the classifier,
    so all node states are kept as per-batch (1, C) rows; full rows are kept only
    for states 0/1 as attention K/V sources."""
    s0 = _layernorm(_relu_conv_bn(s0_chunks, cell["pre0_w"], cell["pre0_b"]),
                    cell["ln_g"][...], cell["ln_b"][...])
    s1 = _layernorm(_relu_conv_bn(s1_chunks, cell["pre1_w"], cell["pre1_b"]),
                    cell["ln_g"][...], cell["ln_b"][...])
    full = [s0, s1]
    cls = [[s0[b * SEQ_PAD:b * SEQ_PAD + 1, :] for b in range(B)],
           [s1[b * SEQ_PAD:b * SEQ_PAD + 1, :] for b in range(B)]]
    attn_it = iter(cell["attn"])
    for i in range(len(GENOTYPE_NORMAL) // 2):
        n1, i1 = GENOTYPE_NORMAL[2 * i]
        n2, i2 = GENOTYPE_NORMAL[2 * i + 1]
        if n1 == "attn":
            assert i1 < 2  # TODO(synk): CLS shortcut assumes attn inputs are states 0/1
            h1 = _mha_cls(full[i1], next(attn_it), B)
        else:
            h1 = cls[i1]
        if n2 == "attn":
            assert i2 < 2
            h2 = _mha_cls(full[i2], next(attn_it), B)
        else:
            h2 = cls[i2]                         # reference discards non-attn op2(h2)
        cls.append([h1[b] + h2[b] for b in range(B)])
    return [cls[i] for i in GENOTYPE_CONCAT]


# ------------------------------ the fused kernel -----------------------------
def _vit_fused_kernel(*refs, B, layers):
    out_ref = refs[-1]                           # (B, num_classes)
    it = iter(refs[:-1])

    patches_ref = next(it)                       # (B*SEQ_PAD, 3*P*P) bf16; CLS + pad rows zero
    cls_tok_ref = next(it)                       # (1, C) f32
    stem_w_ref = next(it)                        # (3*P*P, C) bf16
    stem_b_ref = next(it)                        # (1, C) f32

    cells = []
    for _ in range(layers):
        cell = {"pre0_w": next(it), "pre0_b": next(it),
                "pre1_w": next(it), "pre1_b": next(it),
                "ln_g": next(it), "ln_b": next(it), "attn": []}
        for name, _ in GENOTYPE_NORMAL:
            if name == "attn":
                cell["attn"].append({"q_w": next(it), "q_b": next(it),
                                     "k_w": next(it), "k_b": next(it),
                                     "vp_w": next(it), "vp_b": next(it),
                                     "out_b": next(it)})
        cells.append(cell)

    cls_w_ref = next(it)                         # (MULT*C, num_classes) bf16
    cls_b_ref = next(it)                         # (1, num_classes) f32

    R = patches_ref.shape[0]                     # B * SEQ_PAD
    C = stem_w_ref.shape[1]

    # stem Conv2d(3,C,4,4) == patches @ W + b (one matmul for the whole batch);
    # then every image's CLS row (row SEQ_PAD*b) is replaced by the class token.
    tok = jnp.dot(patches_ref[...], stem_w_ref[...],
                  preferred_element_type=jnp.float32) + stem_b_ref[...]
    row = jax.lax.broadcasted_iota(jnp.int32, (R, C), 0)
    is_cls = row == 0
    for b in range(1, B):
        is_cls = jnp.logical_or(is_cls, row == b * SEQ_PAD)
    tok = jnp.where(is_cls, jnp.broadcast_to(cls_tok_ref[...], (R, C)), tok)

    s0_chunks = [tok]
    s1_chunks = [tok]
    cls_chunks = None
    for li, cell in enumerate(cells):
        if li < layers - 1:
            s0_chunks, s1_chunks = s1_chunks, _cell_full(s0_chunks, s1_chunks, cell, B)
        else:
            cls_chunks = _cell_cls(s0_chunks, s1_chunks, cell, B)

    # classifier on the class token; chunk-folded (no lane concat is ever built)
    for b in range(B):
        off = 0
        logits = None
        for chunk in cls_chunks:
            c_in = chunk[b].shape[1]
            part = jnp.dot(chunk[b].astype(jnp.bfloat16),
                           cls_w_ref[off:off + c_in, :],
                           preferred_element_type=jnp.float32)
            logits = part if logits is None else logits + part
            off += c_in
        out_ref[b:b + 1, :] = logits + cls_b_ref[...]


# ------------------------------ forward wrapper ------------------------------
def vit_forward(params, x):
    """x: (B, 3, 32, 32) NCHW -> (logits, None). Entire network = ONE pallas_call."""
    B = x.shape[0]
    n_hw = IMAGE_SIZE // PATCH                                    # 8
    C = params["stem_w"].shape[1]
    layers = len(params["cells"])
    num_classes = params["cls_w"].shape[1]

    # patch extraction is pure layout (XLA). One zero row per image for the CLS
    # slot plus 7 pad rows, so every image starts at a sublane-aligned offset
    # (SEQ_PAD=72) inside the single batch-stacked (B*72, 48) slab.
    patches = (x.reshape(B, 3, n_hw, PATCH, n_hw, PATCH)
                .transpose(0, 2, 4, 1, 3, 5)
                .reshape(B, n_hw * n_hw, 3 * PATCH * PATCH))
    patches = jnp.pad(patches, ((0, 0), (1, SEQ_PAD - SEQ), (0, 0)))
    patches = patches.reshape(B * SEQ_PAD, 3 * PATCH * PATCH).astype(jnp.bfloat16)

    flat = [patches,
            params["class_token"].reshape(1, C),
            params["stem_w"], params["stem_b"]]
    for cp in params["cells"]:
        flat += [cp["pre0"]["w"], cp["pre0"]["b"],
                 cp["pre1"]["w"], cp["pre1"]["b"],
                 cp["ln1_g"], cp["ln1_b"]]
        for op in cp["ops"]:
            if op is not None:
                flat += [op["q_w"], op["q_b"], op["k_w"], op["k_b"],
                         op["vp_w"], op["vp_b"], op["out_b"]]
    flat += [params["cls_w"], params["cls_b"]]
    # (params["pos_embedding"] exists but is unused, matching the reference)

    logits = pl.pallas_call(
        partial(_vit_fused_kernel, B=B, layers=layers),
        out_shape=jax.ShapeDtypeStruct((B, num_classes), jnp.float32),
    )(*flat)
    return logits, None


# ------------------------------ parameter init -------------------------------
def _make_preprocess(key, c_in, c_out):
    k1, k2, k3 = jax.random.split(key, 3)
    w = jax.random.normal(k1, (c_out, c_in), jnp.float32) * math.sqrt(2.0 / c_in)
    gamma = 1.0 + 0.1 * jax.random.normal(k2, (c_out,), jnp.float32)
    beta = 0.1 * jax.random.normal(k3, (c_out,), jnp.float32)
    mean = jnp.zeros((c_out,), jnp.float32)      # fresh BN running stats
    var = jnp.ones((c_out,), jnp.float32)
    scale = gamma / jnp.sqrt(var + BN_EPS)
    return {"w": (w.T * scale[None, :]).astype(jnp.bfloat16),  # (c_in, c_out), BN folded
            "b": ((0.0 - mean) * scale + beta).reshape(1, c_out)}


def _make_attention(key, c):
    """nn.MultiheadAttention(c, NUM_HEADS) params, pre-folded for the kernel:
       * 1/sqrt(dh) softmax scale folded into the q projection (weight + bias),
       * out_proj folded into the v projection per head (V'_h = V_h @ Wout_h),
       * weights pre-cast to bf16 (MXU-native); biases kept in f32."""
    k1, k2, k3, k4 = jax.random.split(key, 4)
    s = 1.0 / math.sqrt(c)
    dh = c // NUM_HEADS
    in_wT = s * jax.random.normal(k1, (c, 3 * c), jnp.float32)    # == in_proj_weight.T
    in_b = 0.01 * jax.random.normal(k2, (3 * c,), jnp.float32)
    out_wT = s * jax.random.normal(k3, (c, c), jnp.float32)       # == out_proj.weight.T
    out_b = 0.01 * jax.random.normal(k4, (c,), jnp.float32)
    scale = 1.0 / math.sqrt(dh)
    q_w = in_wT[:, 0:c] * scale
    q_b = in_b[0:c] * scale
    k_w = in_wT[:, c:2 * c]
    k_b = in_b[c:2 * c]
    v_w = in_wT[:, 2 * c:3 * c]
    v_b = in_b[2 * c:3 * c]
    vp_w = jnp.stack([v_w[:, h * dh:(h + 1) * dh] @ out_wT[h * dh:(h + 1) * dh, :]
                      for h in range(NUM_HEADS)], axis=0)                    # (H, c, c)
    vp_b = jnp.stack([(v_b[h * dh:(h + 1) * dh] @ out_wT[h * dh:(h + 1) * dh, :])
                      .reshape(1, c) for h in range(NUM_HEADS)], axis=0)     # (H, 1, c)
    return {"q_w": q_w.astype(jnp.bfloat16), "q_b": q_b.reshape(1, c),
            "k_w": k_w.astype(jnp.bfloat16), "k_b": k_b.reshape(1, c),
            "vp_w": vp_w.astype(jnp.bfloat16), "vp_b": vp_b,
            "out_b": out_b.reshape(1, c)}


def init_params(key, C=16, num_classes=10, layers=1):
    kit = iter(jax.random.split(key, 64))
    fan_in = 3 * PATCH * PATCH
    params = {
        "stem_w": (math.sqrt(1.0 / fan_in)
                   * jax.random.normal(next(kit), (fan_in, C), jnp.float32)
                   ).astype(jnp.bfloat16),
        "stem_b": 0.01 * jax.random.normal(next(kit), (1, C), jnp.float32),
        "class_token": jnp.zeros((1, 1, C), jnp.float32),
        # created-but-unused in forward(), faithful to the reference:
        "pos_embedding": 0.02 * jax.random.normal(next(kit), (1, SEQ, C), jnp.float32),
    }
    cells = []
    c_pp, c_p, c_cur = C, C, C
    for _ in range(layers):
        cp = {"pre0": _make_preprocess(next(kit), c_pp, c_cur),
              "pre1": _make_preprocess(next(kit), c_p, c_cur),
              "ln1_g": jnp.ones((1, c_cur), jnp.float32),
              "ln1_b": jnp.zeros((1, c_cur), jnp.float32),
              "ops": []}
        for name, _ in GENOTYPE_NORMAL:
            cp["ops"].append(_make_attention(next(kit), c_cur)
                             if name == "attn" else None)
        cells.append(cp)
        c_pp, c_p = c_p, MULTIPLIER * c_cur
    params["cells"] = cells
    params["cls_w"] = (1.0 / math.sqrt(c_p)
                       * jax.random.normal(next(kit), (c_p, num_classes), jnp.float32)
                       ).astype(jnp.bfloat16)
    params["cls_b"] = jnp.zeros((1, num_classes), jnp.float32)
    return params


# ------------------------------ main ----------------------------------------
if __name__ == "__main__":
    key = jax.random.PRNGKey(0)
    k_params, k_x = jax.random.split(key)
    params = init_params(k_params, C=16, num_classes=10, layers=1)
    x = jax.random.normal(k_x, (2, 3, IMAGE_SIZE, IMAGE_SIZE), jnp.float32)

    fwd = jax.jit(vit_forward)
    logits, logits_aux = fwd(params, x)
    jax.block_until_ready(logits)
    assert logits.shape == (2, 10) and logits_aux is None
    assert bool(jnp.all(jnp.isfinite(logits)))
    print("KERNEL_OK")
</pallas_src>

<mosaic_0001>
module attributes {stable_mosaic.version = 11 : i64} {
  func.func @_vit_fused_kernel(%arg0: memref<144x48xbf16, #tpu.memory_space<vmem>>, %arg1: memref<1x16xf32, #tpu.memory_space<vmem>>, %arg2: memref<48x16xbf16, #tpu.memory_space<vmem>>, %arg3: memref<1x16xf32, #tpu.memory_space<vmem>>, %arg4: memref<16x16xbf16, #tpu.memory_space<vmem>>, %arg5: memref<1x16xf32, #tpu.memory_space<vmem>>, %arg6: memref<16x16xbf16, #tpu.memory_space<vmem>>, %arg7: memref<1x16xf32, #tpu.memory_space<vmem>>, %arg8: memref<1x16xf32, #tpu.memory_space<vmem>>, %arg9: memref<1x16xf32, #tpu.memory_space<vmem>>, %arg10: memref<16x16xbf16, #tpu.memory_space<vmem>>, %arg11: memref<1x16xf32, #tpu.memory_space<vmem>>, %arg12: memref<16x16xbf16, #tpu.memory_space<vmem>>, %arg13: memref<1x16xf32, #tpu.memory_space<vmem>>, %arg14: memref<2x16x16xbf16, #tpu.memory_space<vmem>>, %arg15: memref<2x1x16xf32, #tpu.memory_space<vmem>>, %arg16: memref<1x16xf32, #tpu.memory_space<vmem>>, %arg17: memref<16x16xbf16, #tpu.memory_space<vmem>>, %arg18: memref<1x16xf32, #tpu.memory_space<vmem>>, %arg19: memref<16x16xbf16, #tpu.memory_space<vmem>>, %arg20: memref<1x16xf32, #tpu.memory_space<vmem>>, %arg21: memref<2x16x16xbf16, #tpu.memory_space<vmem>>, %arg22: memref<2x1x16xf32, #tpu.memory_space<vmem>>, %arg23: memref<1x16xf32, #tpu.memory_space<vmem>>, %arg24: memref<32x10xbf16, #tpu.memory_space<vmem>>, %arg25: memref<1x10xf32, #tpu.memory_space<vmem>>, %arg26: memref<2x10xf32, #tpu.memory_space<vmem>>) attributes {dimension_semantics = [], scalar_prefetch = 0 : i64, scratch_operands = 0 : i64, tpu.core_type = #tpu.core_type<tc>} {
    %c0 = arith.constant 0 : index
    %c0_0 = arith.constant 0 : index
    %0 = vector.load %arg0[%c0, %c0_0] : memref<144x48xbf16, #tpu.memory_space<vmem>>, vector<144x48xbf16>
    %c0_1 = arith.constant 0 : index
    %c0_2 = arith.constant 0 : index
    %1 = vector.load %arg2[%c0_1, %c0_2] : memref<48x16xbf16, #tpu.memory_space<vmem>>, vector<48x16xbf16>
    %cst = arith.constant dense<0.000000e+00> : vector<144x16xf32>
    %2 = tpu.matmul %0, %1, %cst {dimension_numbers = #tpu.dot_dimension_numbers<[1], [0], [0], [1], [0, 0, 1, 1], [], []>} : vector<144x48xbf16>, vector<48x16xbf16>, vector<144x16xf32> -> vector<144x16xf32>
    %c0_3 = arith.constant 0 : index
    %c0_4 = arith.constant 0 : index
    %3 = vector.load %arg3[%c0_3, %c0_4] : memref<1x16xf32, #tpu.memory_space<vmem>>, vector<1x16xf32>
    %4 = vector.broadcast %3 : vector<1x16xf32> to vector<144x16xf32>
    %5 = arith.addf %2, %4 : vector<144x16xf32>
    %6 = tpu.iota {dimensions = array<i32: 0>} : vector<144x16xi32>
    %c0_i32 = arith.constant 0 : i32
    %7 = vector.broadcast %c0_i32 : i32 to vector<144x16xi32>
    %8 = arith.cmpi eq, %6, %7 : vector<144x16xi32>
    %c72_i32 = arith.constant 72 : i32
    %9 = vector.broadcast %c72_i32 : i32 to vector<144x16xi32>
    %10 = arith.cmpi eq, %6, %9 : vector<144x16xi32>
    %11 = arith.ori %8, %10 : vector<144x16xi1>
    %c0_5 = arith.constant 0 : index
    %c0_6 = arith.constant 0 : index
    %12 = vector.load %arg1[%c0_5, %c0_6] : memref<1x16xf32, #tpu.memory_space<vmem>>, vector<1x16xf32>
    %13 = vector.shape_cast %12 : vector<1x16xf32> to vector<1x16xf32>
    %14 = vector.broadcast %13 : vector<1x16xf32> to vector<144x16xf32>
    %15 = arith.select %11, %14, %5 : vector<144x16xi1>, vector<144x16xf32>
    %cst_7 = arith.constant 0.000000e+00 : f32
    %16 = vector.broadcast %cst_7 : f32 to vector<144x16xf32>
    %17 = arith.maximumf %15, %16 : vector<144x16xf32>
    %18 = arith.truncf %17 : vector<144x16xf32> to vector<144x16xbf16>
    %c0_8 = arith.constant 0 : index
    %c0_9 = arith.constant 0 : index
    %19 = vector.load %arg4[%c0_8, %c0_9] : memref<16x16xbf16, #tpu.memory_space<vmem>>, vector<16x16xbf16>
    %cst_10 = arith.constant dense<0.000000e+00> : vector<144x16xf32>
    %20 = tpu.matmul %18, %19, %cst_10 {dimension_numbers = #tpu.dot_dimension_numbers<[1], [0], [0], [1], [0, 0, 1, 1], [], []>} : vector<144x16xbf16>, vector<16x16xbf16>, vector<144x16xf32> -> vector<144x16xf32>
    %c0_11 = arith.constant 0 : index
    %c0_12 = arith.constant 0 : index
    %21 = vector.load %arg5[%c0_11, %c0_12] : memref<1x16xf32, #tpu.memory_space<vmem>>, vector<1x16xf32>
    %22 = vector.broadcast %21 : vector<1x16xf32> to vector<144x16xf32>
    %23 = arith.addf %20, %22 : vector<144x16xf32>
    %c0_13 = arith.constant 0 : index
    %c0_14 = arith.constant 0 : index
    %24 = vector.load %arg8[%c0_13, %c0_14] : memref<1x16xf32, #tpu.memory_space<vmem>>, vector<1x16xf32>
    %c0_15 = arith.constant 0 : index
    %c0_16 = arith.constant 0 : index
    %25 = vector.load %arg9[%c0_15, %c0_16] : memref<1x16xf32, #tpu.memory_space<vmem>>, vector<1x16xf32>
    %cst_17 = arith.constant dense<0.000000e+00> : vector<144xf32>
    %26 = vector.multi_reduction <add>, %23, %cst_17 [1] : vector<144x16xf32> to vector<144xf32>
    %27 = vector.shape_cast %26 : vector<144xf32> to vector<144x1xf32>
    %cst_18 = arith.constant 1.600000e+01 : f32
    %28 = vector.broadcast %cst_18 : f32 to vector<144x1xf32>
    %29 = arith.divf %27, %28 : vector<144x1xf32>
    %30 = vector.broadcast %29 : vector<144x1xf32> to vector<144x16xf32>
    %31 = arith.subf %23, %30 : vector<144x16xf32>
    %32 = arith.mulf %31, %31 : vector<144x16xf32>
    %cst_19 = arith.constant dense<0.000000e+00> : vector<144xf32>
    %33 = vector.multi_reduction <add>, %32, %cst_19 [1] : vector<144x16xf32> to vector<144xf32>
    %34 = vector.shape_cast %33 : vector<144xf32> to vector<144x1xf32>
    %cst_20 = arith.constant 1.600000e+01 : f32
    %35 = vector.broadcast %cst_20 : f32 to vector<144x1xf32>
    %36 = arith.divf %34, %35 : vector<144x1xf32>
    %cst_21 = arith.constant 9.99999997E-7 : f32
    %37 = vector.broadcast %cst_21 : f32 to vector<144x1xf32>
    %38 = arith.addf %36, %37 : vector<144x1xf32>
    %39 = math.rsqrt %38 : vector<144x1xf32>
    %40 = vector.broadcast %39 : vector<144x1xf32> to vector<144x16xf32>
    %41 = arith.mulf %31, %40 : vector<144x16xf32>
    %42 = vector.broadcast %24 : vector<1x16xf32> to vector<144x16xf32>
    %43 = arith.mulf %41, %42 : vector<144x16xf32>
    %44 = vector.broadcast %25 : vector<1x16xf32> to vector<144x16xf32>
    %45 = arith.addf %43, %44 : vector<144x16xf32>
    %cst_22 = arith.constant 0.000000e+00 : f32
    %46 = vector.broadcast %cst_22 : f32 to vector<144x16xf32>
    %47 = arith.maximumf %15, %46 : vector<144x16xf32>
    %48 = arith.truncf %47 : vector<144x16xf32> to vector<144x16xbf16>
    %c0_23 = arith.constant 0 : index
    %c0_24 = arith.constant 0 : index
    %49 = vector.load %arg6[%c0_23, %c0_24] : memref<16x16xbf16, #tpu.memory_space<vmem>>, vector<16x16xbf16>
    %cst_25 = arith.constant dense<0.000000e+00> : vector<144x16xf32>
    %50 = tpu.matmul %48, %49, %cst_25 {dimension_numbers = #tpu.dot_dimension_numbers<[1], [0], [0], [1], [0, 0, 1, 1], [], []>} : vector<144x16xbf16>, vector<16x16xbf16>, vector<144x16xf32> -> vector<144x16xf32>
    %c0_26 = arith.constant 0 : index
    %c0_27 = arith.constant 0 : index
    %51 = vector.load %arg7[%c0_26, %c0_27] : memref<1x16xf32, #tpu.memory_space<vmem>>, vector<1x16xf32>
    %52 = vector.broadcast %51 : vector<1x16xf32> to vector<144x16xf32>
    %53 = arith.addf %50, %52 : vector<144x16xf32>
    %c0_28 = arith.constant 0 : index
    %c0_29 = arith.constant 0 : index
    %54 = vector.load %arg8[%c0_28, %c0_29] : memref<1x16xf32, #tpu.memory_space<vmem>>, vector<1x16xf32>
    %c0_30 = arith.constant 0 : index
    %c0_31 = arith.constant 0 : index
    %55 = vector.load %arg9[%c0_30, %c0_31] : memref<1x16xf32, #tpu.memory_space<vmem>>, vector<1x16xf32>
    %cst_32 = arith.constant dense<0.000000e+00> : vector<144xf32>
    %56 = vector.multi_reduction <add>, %53, %cst_32 [1] : vector<144x16xf32> to vector<144xf32>
    %57 = vector.shape_cast %56 : vector<144xf32> to vector<144x1xf32>
    %cst_33 = arith.constant 1.600000e+01 : f32
    %58 = vector.broadcast %cst_33 : f32 to vector<144x1xf32>
    %59 = arith.divf %57, %58 : vector<144x1xf32>
    %60 = vector.broadcast %59 : vector<144x1xf32> to vector<144x16xf32>
    %61 = arith.subf %53, %60 : vector<144x16xf32>
    %62 = arith.mulf %61, %61 : vector<144x16xf32>
    %cst_34 = arith.constant dense<0.000000e+00> : vector<144xf32>
    %63 = vector.multi_reduction <add>, %62, %cst_34 [1] : vector<144x16xf32> to vector<144xf32>
    %64 = vector.shape_cast %63 : vector<144xf32> to vector<144x1xf32>
    %cst_35 = arith.constant 1.600000e+01 : f32
    %65 = vector.broadcast %cst_35 : f32 to vector<144x1xf32>
    %66 = arith.divf %64, %65 : vector<144x1xf32>
    %cst_36 = arith.constant 9.99999997E-7 : f32
    %67 = vector.broadcast %cst_36 : f32 to vector<144x1xf32>
    %68 = arith.addf %66, %67 : vector<144x1xf32>
    %69 = math.rsqrt %68 : vector<144x1xf32>
    %70 = vector.broadcast %69 : vector<144x1xf32> to vector<144x16xf32>
    %71 = arith.mulf %61, %70 : vector<144x16xf32>
    %72 = vector.broadcast %54 : vector<1x16xf32> to vector<144x16xf32>
    %73 = arith.mulf %71, %72 : vector<144x16xf32>
    %74 = vector.broadcast %55 : vector<1x16xf32> to vector<144x16xf32>
    %75 = arith.addf %73, %74 : vector<144x16xf32>
    %76 = vector.extract_strided_slice %75 {offsets = [0, 0], sizes = [1, 16], strides = [1, 1]} : vector<144x16xf32> to vector<1x16xf32>
    %77 = vector.extract_strided_slice %75 {offsets = [72, 0], sizes = [1, 16], strides = [1, 1]} : vector<144x16xf32> to vector<1x16xf32>
    %78 = arith.truncf %45 : vector<144x16xf32> to vector<144x16xbf16>
    %c0_37 = arith.constant 0 : index
    %c0_38 = arith.constant 0 : index
    %79 = vector.load %arg12[%c0_37, %c0_38] : memref<16x16xbf16, #tpu.memory_space<vmem>>, vector<16x16xbf16>
    %cst_39 = arith.constant dense<0.000000e+00> : vector<144x16xf32>
    %80 = tpu.matmul %78, %79, %cst_39 {dimension_numbers = #tpu.dot_dimension_numbers<[1], [0], [0], [1], [0, 0, 1, 1], [], []>} : vector<144x16xbf16>, vector<16x16xbf16>, vector<144x16xf32> -> vector<144x16xf32>
    %c0_40 = arith.constant 0 : index
    %c0_41 = arith.constant 0 : index
    %81 = vector.load %arg13[%c0_40, %c0_41] : memref<1x16xf32, #tpu.memory_space<vmem>>, vector<1x16xf32>
    %82 = vector.broadcast %81 : vector<1x16xf32> to vector<144x16xf32>
    %83 = arith.addf %80, %82 : vector<144x16xf32>
    %c0_42 = arith.constant 0 : index
    %c0_43 = arith.constant 0 : index
    %c0_44 = arith.constant 0 : index
    %84 = vector.load %arg14[%c0_42, %c0_43, %c0_44] : memref<2x16x16xbf16, #tpu.memory_space<vmem>>, vector<1x16x16xbf16>
    %85 = vector.shape_cast %84 : vector<1x16x16xbf16> to vector<16x16xbf16>
    %cst_45 = arith.constant dense<0.000000e+00> : vector<144x16xf32>
    %86 = tpu.matmul %78, %85, %cst_45 {dimension_numbers = #tpu.dot_dimension_numbers<[1], [0], [0], [1], [0, 0, 1, 1], [], []>} : vector<144x16xbf16>, vector<16x16xbf16>, vector<144x16xf32> -> vector<144x16xf32>
    %c0_46 = arith.constant 0 : index
    %c0_47 = arith.constant 0 : index
    %c0_48 = arith.constant 0 : index
    %87 = vector.load %arg15[%c0_46, %c0_47, %c0_48] : memref<2x1x16xf32, #tpu.memory_space<vmem>>, vector<1x1x16xf32>
    %88 = vector.shape_cast %87 : vector<1x1x16xf32> to vector<1x16xf32>
    %89 = vector.broadcast %88 : vector<1x16xf32> to vector<144x16xf32>
    %90 = arith.addf %86, %89 : vector<144x16xf32>
    %c1 = arith.constant 1 : index
    %c0_49 = arith.constant 0 : index
    %c0_50 = arith.constant 0 : index
    %91 = vector.load %arg14[%c1, %c0_49, %c0_50] : memref<2x16x16xbf16, #tpu.memory_space<vmem>>, vector<1x16x16xbf16>
    %92 = vector.shape_cast %91 : vector<1x16x16xbf16> to vector<16x16xbf16>
    %cst_51 = arith.constant dense<0.000000e+00> : vector<144x16xf32>
    %93 = tpu.matmul %78, %92, %cst_51 {dimension_numbers = #tpu.dot_dimension_numbers<[1], [0], [0], [1], [0, 0, 1, 1], [], []>} : vector<144x16xbf16>, vector<16x16xbf16>, vector<144x16xf32> -> vector<144x16xf32>
    %c1_52 = arith.constant 1 : index
    %c0_53 = arith.constant 0 : index
    %c0_54 = arith.constant 0 : index
    %94 = vector.load %arg15[%c1_52, %c0_53, %c0_54] : memref<2x1x16xf32, #tpu.memory_space<vmem>>, vector<1x1x16xf32>
    %95 = vector.shape_cast %94 : vector<1x1x16xf32> to vector<1x16xf32>
    %96 = vector.broadcast %95 : vector<1x16xf32> to vector<144x16xf32>
    %97 = arith.addf %93, %96 : vector<144x16xf32>
    %98 = vector.extract_strided_slice %45 {offsets = [0, 0], sizes = [1, 16], strides = [1, 1]} : vector<144x16xf32> to vector<1x16xf32>
    %99 = arith.truncf %98 : vector<1x16xf32> to vector<1x16xbf16>
    %c0_55 = arith.constant 0 : index
    %c0_56 = arith.constant 0 : index
    %100 = vector.load %arg10[%c0_55, %c0_56] : memref<16x16xbf16, #tpu.memory_space<vmem>>, vector<16x16xbf16>
    %cst_57 = arith.constant dense<0.000000e+00> : vector<1x16xf32>
    %101 = tpu.matmul %99, %100, %cst_57 {dimension_numbers = #tpu.dot_dimension_numbers<[1], [0], [0], [1], [0, 0, 1, 1], [], []>} : vector<1x16xbf16>, vector<16x16xbf16>, vector<1x16xf32> -> vector<1x16xf32>
    %c0_58 = arith.constant 0 : index
    %c0_59 = arith.constant 0 : index
    %102 = vector.load %arg11[%c0_58, %c0_59] : memref<1x16xf32, #tpu.memory_space<vmem>>, vector<1x16xf32>
    %103 = arith.addf %101, %102 : vector<1x16xf32>
    %104 = vector.extract_strided_slice %83 {offsets = [0, 0], sizes = [65, 16], strides = [1, 1]} : vector<144x16xf32> to vector<65x16xf32>
    %105 = vector.extract_strided_slice %90 {offsets = [0, 0], sizes = [65, 16], strides = [1, 1]} : vector<144x16xf32> to vector<65x16xf32>
    %106 = vector.extract_strided_slice %97 {offsets = [0, 0], sizes = [65, 16], strides = [1, 1]} : vector<144x16xf32> to vector<65x16xf32>
    %c0_60 = arith.constant 0 : index
    %c0_61 = arith.constant 0 : index
    %107 = vector.load %arg16[%c0_60, %c0_61] : memref<1x16xf32, #tpu.memory_space<vmem>>, vector<1x16xf32>
    %108 = tpu.iota {dimensions = array<i32: 1>} : vector<1x16xi32>
    %c0_i32_62 = arith.constant 0 : i32
    %109 = vector.broadcast %c0_i32_62 : i32 to vector<1x16xi32>
    %110 = arith.cmpi sge, %108, %109 : vector<1x16xi32>
    %c8_i32 = arith.constant 8 : i32
    %111 = vector.broadcast %c8_i32 : i32 to vector<1x16xi32>
    %112 = arith.cmpi slt, %108, %111 : vector<1x16xi32>
    %113 = arith.andi %110, %112 : vector<1x16xi1>
    %cst_63 = arith.constant 0.000000e+00 : f32
    %114 = vector.broadcast %cst_63 : f32 to vector<1x16xf32>
    %115 = arith.select %113, %103, %114 : vector<1x16xi1>, vector<1x16xf32>
    %cst_64 = arith.constant dense<0.000000e+00> : vector<1x65xf32>
    %116 = tpu.matmul %115, %104, %cst_64 {dimension_numbers = #tpu.dot_dimension_numbers<[1], [1], [0], [0], [0, 0, 1, 0], [], []>} : vector<1x16xf32>, vector<65x16xf32>, vector<1x65xf32> -> vector<1x65xf32>
    %cst_65 = arith.constant dense<0xFF800000> : vector<1xf32>
    %117 = vector.multi_reduction <maximumf>, %116, %cst_65 [1] : vector<1x65xf32> to vector<1xf32>
    %118 = vector.shape_cast %117 : vector<1xf32> to vector<1x1xf32>
    %119 = vector.broadcast %118 : vector<1x1xf32> to vector<1x65xf32>
    %120 = arith.subf %116, %119 : vector<1x65xf32>
    %121 = math.exp %120 : vector<1x65xf32>
    %cst_66 = arith.constant dense<0.000000e+00> : vector<1xf32>
    %122 = vector.multi_reduction <add>, %121, %cst_66 [1] : vector<1x65xf32> to vector<1xf32>
    %123 = vector.shape_cast %122 : vector<1xf32> to vector<1x1xf32>
    %124 = tpu.reciprocal %123 {approx = true} : vector<1x1xf32> -> vector<1x1xf32>
    %125 = vector.broadcast %124 : vector<1x1xf32> to vector<1x65xf32>
    %126 = arith.mulf %121, %125 : vector<1x65xf32>
    %127 = arith.truncf %126 : vector<1x65xf32> to vector<1x65xbf16>
    %128 = arith.truncf %105 : vector<65x16xf32> to vector<65x16xbf16>
    %cst_67 = arith.constant dense<0.000000e+00> : vector<1x16xf32>
    %129 = tpu.matmul %127, %128, %cst_67 {dimension_numbers = #tpu.dot_dimension_numbers<[1], [0], [0], [1], [0, 0, 1, 1], [], []>} : vector<1x65xbf16>, vector<65x16xbf16>, vector<1x16xf32> -> vector<1x16xf32>
    %c8_i32_68 = arith.constant 8 : i32
    %130 = vector.broadcast %c8_i32_68 : i32 to vector<1x16xi32>
    %131 = arith.cmpi sge, %108, %130 : vector<1x16xi32>
    %c16_i32 = arith.constant 16 : i32
    %132 = vector.broadcast %c16_i32 : i32 to vector<1x16xi32>
    %133 = arith.cmpi slt, %108, %132 : vector<1x16xi32>
    %134 = arith.andi %131, %133 : vector<1x16xi1>
    %cst_69 = arith.constant 0.000000e+00 : f32
    %135 = vector.broadcast %cst_69 : f32 to vector<1x16xf32>
    %136 = arith.select %134, %103, %135 : vector<1x16xi1>, vector<1x16xf32>
    %cst_70 = arith.constant dense<0.000000e+00> : vector<1x65xf32>
    %137 = tpu.matmul %136, %104, %cst_70 {dimension_numbers = #tpu.dot_dimension_numbers<[1], [1], [0], [0], [0, 0, 1, 0], [], []>} : vector<1x16xf32>, vector<65x16xf32>, vector<1x65xf32> -> vector<1x65xf32>
    %cst_71 = arith.constant dense<0xFF800000> : vector<1xf32>
    %138 = vector.multi_reduction <maximumf>, %137, %cst_71 [1] : vector<1x65xf32> to vector<1xf32>
    %139 = vector.shape_cast %138 : vector<1xf32> to vector<1x1xf32>
    %140 = vector.broadcast %139 : vector<1x1xf32> to vector<1x65xf32>
    %141 = arith.subf %137, %140 : vector<1x65xf32>
    %142 = math.exp %141 : vector<1x65xf32>
    %cst_72 = arith.constant dense<0.000000e+00> : vector<1xf32>
    %143 = vector.multi_reduction <add>, %142, %cst_72 [1] : vector<1x65xf32> to vector<1xf32>
    %144 = vector.shape_cast %143 : vector<1xf32> to vector<1x1xf32>
    %145 = tpu.reciprocal %144 {approx = true} : vector<1x1xf32> -> vector<1x1xf32>
    %146 = vector.broadcast %145 : vector<1x1xf32> to vector<1x65xf32>
    %147 = arith.mulf %142, %146 : vector<1x65xf32>
    %148 = arith.truncf %147 : vector<1x65xf32> to vector<1x65xbf16>
    %149 = arith.truncf %106 : vector<65x16xf32> to vector<65x16xbf16>
    %cst_73 = arith.constant dense<0.000000e+00> : vector<1x16xf32>
    %150 = tpu.matmul %148, %149, %cst_73 {dimension_numbers = #tpu.dot_dimension_numbers<[1], [0], [0], [1], [0, 0, 1, 1], [], []>} : vector<1x65xbf16>, vector<65x16xbf16>, vector<1x16xf32> -> vector<1x16xf32>
    %151 = arith.addf %129, %150 : vector<1x16xf32>
    %152 = arith.addf %151, %107 : vector<1x16xf32>
    %153 = vector.extract_strided_slice %45 {offsets = [72, 0], sizes = [1, 16], strides = [1, 1]} : vector<144x16xf32> to vector<1x16xf32>
    %154 = arith.truncf %153 : vector<1x16xf32> to vector<1x16xbf16>
    %c0_74 = arith.constant 0 : index
    %c0_75 = arith.constant 0 : index
    %155 = vector.load %arg10[%c0_74, %c0_75] : memref<16x16xbf16, #tpu.memory_space<vmem>>, vector<16x16xbf16>
    %cst_76 = arith.constant dense<0.000000e+00> : vector<1x16xf32>
    %156 = tpu.matmul %154, %155, %cst_76 {dimension_numbers = #tpu.dot_dimension_numbers<[1], [0], [0], [1], [0, 0, 1, 1], [], []>} : vector<1x16xbf16>, vector<16x16xbf16>, vector<1x16xf32> -> vector<1x16xf32>
    %c0_77 = arith.constant 0 : index
    %c0_78 = arith.constant 0 : index
    %157 = vector.load %arg11[%c0_77, %c0_78] : memref<1x16xf32, #tpu.memory_space<vmem>>, vector<1x16xf32>
    %158 = arith.addf %156, %157 : vector<1x16xf32>
    %159 = vector.extract_strided_slice %83 {offsets = [72, 0], sizes = [65, 16], strides = [1, 1]} : vector<144x16xf32> to vector<65x16xf32>
    %160 = vector.extract_strided_slice %90 {offsets = [72, 0], sizes = [65, 16], strides = [1, 1]} : vector<144x16xf32> to vector<65x16xf32>
    %161 = vector.extract_strided_slice %97 {offsets = [72, 0], sizes = [65, 16], strides = [1, 1]} : vector<144x16xf32> to vector<65x16xf32>
    %c0_79 = arith.constant 0 : index
    %c0_80 = arith.constant 0 : index
    %162 = vector.load %arg16[%c0_79, %c0_80] : memref<1x16xf32, #tpu.memory_space<vmem>>, vector<1x16xf32>
    %163 = tpu.iota {dimensions = array<i32: 1>} : vector<1x16xi32>
    %c0_i32_81 = arith.constant 0 : i32
    %164 = vector.broadcast %c0_i32_81 : i32 to vector<1x16xi32>
    %165 = arith.cmpi sge, %163, %164 : vector<1x16xi32>
    %c8_i32_82 = arith.constant 8 : i32
    %166 = vector.broadcast %c8_i32_82 : i32 to vector<1x16xi32>
    %167 = arith.cmpi slt, %163, %166 : vector<1x16xi32>
    %168 = arith.andi %165, %167 : vector<1x16xi1>
    %cst_83 = arith.constant 0.000000e+00 : f32
    %169 = vector.broadcast %cst_83 : f32 to vector<1x16xf32>
    %170 = arith.select %168, %158, %169 : vector<1x16xi1>, vector<1x16xf32>
    %cst_84 = arith.constant dense<0.000000e+00> : vector<1x65xf32>
    %171 = tpu.matmul %170, %159, %cst_84 {dimension_numbers = #tpu.dot_dimension_numbers<[1], [1], [0], [0], [0, 0, 1, 0], [], []>} : vector<1x16xf32>, vector<65x16xf32>, vector<1x65xf32> -> vector<1x65xf32>
    %cst_85 = arith.constant dense<0xFF800000> : vector<1xf32>
    %172 = vector.multi_reduction <maximumf>, %171, %cst_85 [1] : vector<1x65xf32> to vector<1xf32>
    %173 = vector.shape_cast %172 : vector<1xf32> to vector<1x1xf32>
    %174 = vector.broadcast %173 : vector<1x1xf32> to vector<1x65xf32>
    %175 = arith.subf %171, %174 : vector<1x65xf32>
    %176 = math.exp %175 : vector<1x65xf32>
    %cst_86 = arith.constant dense<0.000000e+00> : vector<1xf32>
    %177 = vector.multi_reduction <add>, %176, %cst_86 [1] : vector<1x65xf32> to vector<1xf32>
    %178 = vector.shape_cast %177 : vector<1xf32> to vector<1x1xf32>
    %179 = tpu.reciprocal %178 {approx = true} : vector<1x1xf32> -> vector<1x1xf32>
    %180 = vector.broadcast %179 : vector<1x1xf32> to vector<1x65xf32>
    %181 = arith.mulf %176, %180 : vector<1x65xf32>
    %182 = arith.truncf %181 : vector<1x65xf32> to vector<1x65xbf16>
    %183 = arith.truncf %160 : vector<65x16xf32> to vector<65x16xbf16>
    %cst_87 = arith.constant dense<0.000000e+00> : vector<1x16xf32>
    %184 = tpu.matmul %182, %183, %cst_87 {dimension_numbers = #tpu.dot_dimension_numbers<[1], [0], [0], [1], [0, 0, 1, 1], [], []>} : vector<1x65xbf16>, vector<65x16xbf16>, vector<1x16xf32> -> vector<1x16xf32>
    %c8_i32_88 = arith.constant 8 : i32
    %185 = vector.broadcast %c8_i32_88 : i32 to vector<1x16xi32>
    %186 = arith.cmpi sge, %163, %185 : vector<1x16xi32>
    %c16_i32_89 = arith.constant 16 : i32
    %187 = vector.broadcast %c16_i32_89 : i32 to vector<1x16xi32>
    %188 = arith.cmpi slt, %163, %187 : vector<1x16xi32>
    %189 = arith.andi %186, %188 : vector<1x16xi1>
    %cst_90 = arith.constant 0.000000e+00 : f32
    %190 = vector.broadcast %cst_90 : f32 to vector<1x16xf32>
    %191 = arith.select %189, %158, %190 : vector<1x16xi1>, vector<1x16xf32>
    %cst_91 = arith.constant dense<0.000000e+00> : vector<1x65xf32>
    %192 = tpu.matmul %191, %159, %cst_91 {dimension_numbers = #tpu.dot_dimension_numbers<[1], [1], [0], [0], [0, 0, 1, 0], [], []>} : vector<1x16xf32>, vector<65x16xf32>, vector<1x65xf32> -> vector<1x65xf32>
    %cst_92 = arith.constant dense<0xFF800000> : vector<1xf32>
    %193 = vector.multi_reduction <maximumf>, %192, %cst_92 [1] : vector<1x65xf32> to vector<1xf32>
    %194 = vector.shape_cast %193 : vector<1xf32> to vector<1x1xf32>
    %195 = vector.broadcast %194 : vector<1x1xf32> to vector<1x65xf32>
    %196 = arith.subf %192, %195 : vector<1x65xf32>
    %197 = math.exp %196 : vector<1x65xf32>
    %cst_93 = arith.constant dense<0.000000e+00> : vector<1xf32>
    %198 = vector.multi_reduction <add>, %197, %cst_93 [1] : vector<1x65xf32> to vector<1xf32>
    %199 = vector.shape_cast %198 : vector<1xf32> to vector<1x1xf32>
    %200 = tpu.reciprocal %199 {approx = true} : vector<1x1xf32> -> vector<1x1xf32>
    %201 = vector.broadcast %200 : vector<1x1xf32> to vector<1x65xf32>
    %202 = arith.mulf %197, %201 : vector<1x65xf32>
    %203 = arith.truncf %202 : vector<1x65xf32> to vector<1x65xbf16>
    %204 = arith.truncf %161 : vector<65x16xf32> to vector<65x16xbf16>
    %cst_94 = arith.constant dense<0.000000e+00> : vector<1x16xf32>
    %205 = tpu.matmul %203, %204, %cst_94 {dimension_numbers = #tpu.dot_dimension_numbers<[1], [0], [0], [1], [0, 0, 1, 1], [], []>} : vector<1x65xbf16>, vector<65x16xbf16>, vector<1x16xf32> -> vector<1x16xf32>
    %206 = arith.addf %184, %205 : vector<1x16xf32>
    %207 = arith.addf %206, %162 : vector<1x16xf32>
    %208 = arith.addf %152, %76 : vector<1x16xf32>
    %209 = arith.addf %207, %77 : vector<1x16xf32>
    %210 = arith.truncf %75 : vector<144x16xf32> to vector<144x16xbf16>
    %c0_95 = arith.constant 0 : index
    %c0_96 = arith.constant 0 : index
    %211 = vector.load %arg19[%c0_95, %c0_96] : memref<16x16xbf16, #tpu.memory_space<vmem>>, vector<16x16xbf16>
    %cst_97 = arith.constant dense<0.000000e+00> : vector<144x16xf32>
    %212 = tpu.matmul %210, %211, %cst_97 {dimension_numbers = #tpu.dot_dimension_numbers<[1], [0], [0], [1], [0, 0, 1, 1], [], []>} : vector<144x16xbf16>, vector<16x16xbf16>, vector<144x16xf32> -> vector<144x16xf32>
    %c0_98 = arith.constant 0 : index
    %c0_99 = arith.constant 0 : index
    %213 = vector.load %arg20[%c0_98, %c0_99] : memref<1x16xf32, #tpu.memory_space<vmem>>, vector<1x16xf32>
    %214 = vector.broadcast %213 : vector<1x16xf32> to vector<144x16xf32>
    %215 = arith.addf %212, %214 : vector<144x16xf32>
    %c0_100 = arith.constant 0 : index
    %c0_101 = arith.constant 0 : index
    %c0_102 = arith.constant 0 : index
    %216 = vector.load %arg21[%c0_100, %c0_101, %c0_102] : memref<2x16x16xbf16, #tpu.memory_space<vmem>>, vector<1x16x16xbf16>
    %217 = vector.shape_cast %216 : vector<1x16x16xbf16> to vector<16x16xbf16>
    %cst_103 = arith.constant dense<0.000000e+00> : vector<144x16xf32>
    %218 = tpu.matmul %210, %217, %cst_103 {dimension_numbers = #tpu.dot_dimension_numbers<[1], [0], [0], [1], [0, 0, 1, 1], [], []>} : vector<144x16xbf16>, vector<16x16xbf16>, vector<144x16xf32> -> vector<144x16xf32>
    %c0_104 = arith.constant 0 : index
    %c0_105 = arith.constant 0 : index
    %c0_106 = arith.constant 0 : index
    %219 = vector.load %arg22[%c0_104, %c0_105, %c0_106] : memref<2x1x16xf32, #tpu.memory_space<vmem>>, vector<1x1x16xf32>
    %220 = vector.shape_cast %219 : vector<1x1x16xf32> to vector<1x16xf32>
    %221 = vector.broadcast %220 : vector<1x16xf32> to vector<144x16xf32>
    %222 = arith.addf %218, %221 : vector<144x16xf32>
    %c1_107 = arith.constant 1 : index
    %c0_108 = arith.constant 0 : index
    %c0_109 = arith.constant 0 : index
    %223 = vector.load %arg21[%c1_107, %c0_108, %c0_109] : memref<2x16x16xbf16, #tpu.memory_space<vmem>>, vector<1x16x16xbf16>
    %224 = vector.shape_cast %223 : vector<1x16x16xbf16> to vector<16x16xbf16>
    %cst_110 = arith.constant dense<0.000000e+00> : vector<144x16xf32>
    %225 = tpu.matmul %210, %224, %cst_110 {dimension_numbers = #tpu.dot_dimension_numbers<[1], [0], [0], [1], [0, 0, 1, 1], [], []>} : vector<144x16xbf16>, vector<16x16xbf16>, vector<144x16xf32> -> vector<144x16xf32>
    %c1_111 = arith.constant 1 : index
    %c0_112 = arith.constant 0 : index
    %c0_113 = arith.constant 0 : index
    %226 = vector.load %arg22[%c1_111, %c0_112, %c0_113] : memref<2x1x16xf32, #tpu.memory_space<vmem>>, vector<1x1x16xf32>
    %227 = vector.shape_cast %226 : vector<1x1x16xf32> to vector<1x16xf32>
    %228 = vector.broadcast %227 : vector<1x16xf32> to vector<144x16xf32>
    %229 = arith.addf %225, %228 : vector<144x16xf32>
    %230 = vector.extract_strided_slice %75 {offsets = [0, 0], sizes = [1, 16], strides = [1, 1]} : vector<144x16xf32> to vector<1x16xf32>
    %231 = arith.truncf %230 : vector<1x16xf32> to vector<1x16xbf16>
    %c0_114 = arith.constant 0 : index
    %c0_115 = arith.constant 0 : index
    %232 = vector.load %arg17[%c0_114, %c0_115] : memref<16x16xbf16, #tpu.memory_space<vmem>>, vector<16x16xbf16>
    %cst_116 = arith.constant dense<0.000000e+00> : vector<1x16xf32>
    %233 = tpu.matmul %231, %232, %cst_116 {dimension_numbers = #tpu.dot_dimension_numbers<[1], [0], [0], [1], [0, 0, 1, 1], [], []>} : vector<1x16xbf16>, vector<16x16xbf16>, vector<1x16xf32> -> vector<1x16xf32>
    %c0_117 = arith.constant 0 : index
    %c0_118 = arith.constant 0 : index
    %234 = vector.load %arg18[%c0_117, %c0_118] : memref<1x16xf32, #tpu.memory_space<vmem>>, vector<1x16xf32>
    %235 = arith.addf %233, %234 : vector<1x16xf32>
    %236 = vector.extract_strided_slice %215 {offsets = [0, 0], sizes = [65, 16], strides = [1, 1]} : vector<144x16xf32> to vector<65x16xf32>
    %237 = vector.extract_strided_slice %222 {offsets = [0, 0], sizes = [65, 16], strides = [1, 1]} : vector<144x16xf32> to vector<65x16xf32>
    %238 = vector.extract_strided_slice %229 {offsets = [0, 0], sizes = [65, 16], strides = [1, 1]} : vector<144x16xf32> to vector<65x16xf32>
    %c0_119 = arith.constant 0 : index
    %c0_120 = arith.constant 0 : index
    %239 = vector.load %arg23[%c0_119, %c0_120] : memref<1x16xf32, #tpu.memory_space<vmem>>, vector<1x16xf32>
    %240 = tpu.iota {dimensions = array<i32: 1>} : vector<1x16xi32>
    %c0_i32_121 = arith.constant 0 : i32
    %241 = vector.broadcast %c0_i32_121 : i32 to vector<1x16xi32>
    %242 = arith.cmpi sge, %240, %241 : vector<1x16xi32>
    %c8_i32_122 = arith.constant 8 : i32
    %243 = vector.broadcast %c8_i32_122 : i32 to vector<1x16xi32>
    %244 = arith.cmpi slt, %240, %243 : vector<1x16xi32>
    %245 = arith.andi %242, %244 : vector<1x16xi1>
    %cst_123 = arith.constant 0.000000e+00 : f32
    %246 = vector.broadcast %cst_123 : f32 to vector<1x16xf32>
    %247 = arith.select %245, %235, %246 : vector<1x16xi1>, vector<1x16xf32>
    %cst_124 = arith.constant dense<0.000000e+00> : vector<1x65xf32>
    %248 = tpu.matmul %247, %236, %cst_124 {dimension_numbers = #tpu.dot_dimension_numbers<[1], [1], [0], [0], [0, 0, 1, 0], [], []>} : vector<1x16xf32>, vector<65x16xf32>, vector<1x65xf32> -> vector<1x65xf32>
    %cst_125 = arith.constant dense<0xFF800000> : vector<1xf32>
    %249 = vector.multi_reduction <maximumf>, %248, %cst_125 [1] : vector<1x65xf32> to vector<1xf32>
    %250 = vector.shape_cast %249 : vector<1xf32> to vector<1x1xf32>
    %251 = vector.broadcast %250 : vector<1x1xf32> to vector<1x65xf32>
    %252 = arith.subf %248, %251 : vector<1x65xf32>
    %253 = math.exp %252 : vector<1x65xf32>
    %cst_126 = arith.constant dense<0.000000e+00> : vector<1xf32>
    %254 = vector.multi_reduction <add>, %253, %cst_126 [1] : vector<1x65xf32> to vector<1xf32>
    %255 = vector.shape_cast %254 : vector<1xf32> to vector<1x1xf32>
    %256 = tpu.reciprocal %255 {approx = true} : vector<1x1xf32> -> vector<1x1xf32>
    %257 = vector.broadcast %256 : vector<1x1xf32> to vector<1x65xf32>
    %258 = arith.mulf %253, %257 : vector<1x65xf32>
    %259 = arith.truncf %258 : vector<1x65xf32> to vector<1x65xbf16>
    %260 = arith.truncf %237 : vector<65x16xf32> to vector<65x16xbf16>
    %cst_127 = arith.constant dense<0.000000e+00> : vector<1x16xf32>
    %261 = tpu.matmul %259, %260, %cst_127 {dimension_numbers = #tpu.dot_dimension_numbers<[1], [0], [0], [1], [0, 0, 1, 1], [], []>} : vector<1x65xbf16>, vector<65x16xbf16>, vector<1x16xf32> -> vector<1x16xf32>
    %c8_i32_128 = arith.constant 8 : i32
    %262 = vector.broadcast %c8_i32_128 : i32 to vector<1x16xi32>
    %263 = arith.cmpi sge, %240, %262 : vector<1x16xi32>
    %c16_i32_129 = arith.constant 16 : i32
    %264 = vector.broadcast %c16_i32_129 : i32 to vector<1x16xi32>
    %265 = arith.cmpi slt, %240, %264 : vector<1x16xi32>
    %266 = arith.andi %263, %265 : vector<1x16xi1>
    %cst_130 = arith.constant 0.000000e+00 : f32
    %267 = vector.broadcast %cst_130 : f32 to vector<1x16xf32>
    %268 = arith.select %266, %235, %267 : vector<1x16xi1>, vector<1x16xf32>
    %cst_131 = arith.constant dense<0.000000e+00> : vector<1x65xf32>
    %269 = tpu.matmul %268, %236, %cst_131 {dimension_numbers = #tpu.dot_dimension_numbers<[1], [1], [0], [0], [0, 0, 1, 0], [], []>} : vector<1x16xf32>, vector<65x16xf32>, vector<1x65xf32> -> vector<1x65xf32>
    %cst_132 = arith.constant dense<0xFF800000> : vector<1xf32>
    %270 = vector.multi_reduction <maximumf>, %269, %cst_132 [1] : vector<1x65xf32> to vector<1xf32>
    %271 = vector.shape_cast %270 : vector<1xf32> to vector<1x1xf32>
    %272 = vector.broadcast %271 : vector<1x1xf32> to vector<1x65xf32>
    %273 = arith.subf %269, %272 : vector<1x65xf32>
    %274 = math.exp %273 : vector<1x65xf32>
    %cst_133 = arith.constant dense<0.000000e+00> : vector<1xf32>
    %275 = vector.multi_reduction <add>, %274, %cst_133 [1] : vector<1x65xf32> to vector<1xf32>
    %276 = vector.shape_cast %275 : vector<1xf32> to vector<1x1xf32>
    %277 = tpu.reciprocal %276 {approx = true} : vector<1x1xf32> -> vector<1x1xf32>
    %278 = vector.broadcast %277 : vector<1x1xf32> to vector<1x65xf32>
    %279 = arith.mulf %274, %278 : vector<1x65xf32>
    %280 = arith.truncf %279 : vector<1x65xf32> to vector<1x65xbf16>
    %281 = arith.truncf %238 : vector<65x16xf32> to vector<65x16xbf16>
    %cst_134 = arith.constant dense<0.000000e+00> : vector<1x16xf32>
    %282 = tpu.matmul %280, %281, %cst_134 {dimension_numbers = #tpu.dot_dimension_numbers<[1], [0], [0], [1], [0, 0, 1, 1], [], []>} : vector<1x65xbf16>, vector<65x16xbf16>, vector<1x16xf32> -> vector<1x16xf32>
    %283 = arith.addf %261, %282 : vector<1x16xf32>
    %284 = arith.addf %283, %239 : vector<1x16xf32>
    %285 = vector.extract_strided_slice %75 {offsets = [72, 0], sizes = [1, 16], strides = [1, 1]} : vector<144x16xf32> to vector<1x16xf32>
    %286 = arith.truncf %285 : vector<1x16xf32> to vector<1x16xbf16>
    %c0_135 = arith.constant 0 : index
    %c0_136 = arith.constant 0 : index
    %287 = vector.load %arg17[%c0_135, %c0_136] : memref<16x16xbf16, #tpu.memory_space<vmem>>, vector<16x16xbf16>
    %cst_137 = arith.constant dense<0.000000e+00> : vector<1x16xf32>
    %288 = tpu.matmul %286, %287, %cst_137 {dimension_numbers = #tpu.dot_dimension_numbers<[1], [0], [0], [1], [0, 0, 1, 1], [], []>} : vector<1x16xbf16>, vector<16x16xbf16>, vector<1x16xf32> -> vector<1x16xf32>
    %c0_138 = arith.constant 0 : index
    %c0_139 = arith.constant 0 : index
    %289 = vector.load %arg18[%c0_138, %c0_139] : memref<1x16xf32, #tpu.memory_space<vmem>>, vector<1x16xf32>
    %290 = arith.addf %288, %289 : vector<1x16xf32>
    %291 = vector.extract_strided_slice %215 {offsets = [72, 0], sizes = [65, 16], strides = [1, 1]} : vector<144x16xf32> to vector<65x16xf32>
    %292 = vector.extract_strided_slice %222 {offsets = [72, 0], sizes = [65, 16], strides = [1, 1]} : vector<144x16xf32> to vector<65x16xf32>
    %293 = vector.extract_strided_slice %229 {offsets = [72, 0], sizes = [65, 16], strides = [1, 1]} : vector<144x16xf32> to vector<65x16xf32>
    %c0_140 = arith.constant 0 : index
    %c0_141 = arith.constant 0 : index
    %294 = vector.load %arg23[%c0_140, %c0_141] : memref<1x16xf32, #tpu.memory_space<vmem>>, vector<1x16xf32>
    %295 = tpu.iota {dimensions = array<i32: 1>} : vector<1x16xi32>
    %c0_i32_142 = arith.constant 0 : i32
    %296 = vector.broadcast %c0_i32_142 : i32 to vector<1x16xi32>
    %297 = arith.cmpi sge, %295, %296 : vector<1x16xi32>
    %c8_i32_143 = arith.constant 8 : i32
    %298 = vector.broadcast %c8_i32_143 : i32 to vector<1x16xi32>
    %299 = arith.cmpi slt, %295, %298 : vector<1x16xi32>
    %300 = arith.andi %297, %299 : vector<1x16xi1>
    %cst_144 = arith.constant 0.000000e+00 : f32
    %301 = vector.broadcast %cst_144 : f32 to vector<1x16xf32>
    %302 = arith.select %300, %290, %301 : vector<1x16xi1>, vector<1x16xf32>
    %cst_145 = arith.constant dense<0.000000e+00> : vector<1x65xf32>
    %303 = tpu.matmul %302, %291, %cst_145 {dimension_numbers = #tpu.dot_dimension_numbers<[1], [1], [0], [0], [0, 0, 1, 0], [], []>} : vector<1x16xf32>, vector<65x16xf32>, vector<1x65xf32> -> vector<1x65xf32>
    %cst_146 = arith.constant dense<0xFF800000> : vector<1xf32>
    %304 = vector.multi_reduction <maximumf>, %303, %cst_146 [1] : vector<1x65xf32> to vector<1xf32>
    %305 = vector.shape_cast %304 : vector<1xf32> to vector<1x1xf32>
    %306 = vector.broadcast %305 : vector<1x1xf32> to vector<1x65xf32>
    %307 = arith.subf %303, %306 : vector<1x65xf32>
    %308 = math.exp %307 : vector<1x65xf32>
    %cst_147 = arith.constant dense<0.000000e+00> : vector<1xf32>
    %309 = vector.multi_reduction <add>, %308, %cst_147 [1] : vector<1x65xf32> to vector<1xf32>
    %310 = vector.shape_cast %309 : vector<1xf32> to vector<1x1xf32>
    %311 = tpu.reciprocal %310 {approx = true} : vector<1x1xf32> -> vector<1x1xf32>
    %312 = vector.broadcast %311 : vector<1x1xf32> to vector<1x65xf32>
    %313 = arith.mulf %308, %312 : vector<1x65xf32>
    %314 = arith.truncf %313 : vector<1x65xf32> to vector<1x65xbf16>
    %315 = arith.truncf %292 : vector<65x16xf32> to vector<65x16xbf16>
    %cst_148 = arith.constant dense<0.000000e+00> : vector<1x16xf32>
    %316 = tpu.matmul %314, %315, %cst_148 {dimension_numbers = #tpu.dot_dimension_numbers<[1], [0], [0], [1], [0, 0, 1, 1], [], []>} : vector<1x65xbf16>, vector<65x16xbf16>, vector<1x16xf32> -> vector<1x16xf32>
    %c8_i32_149 = arith.constant 8 : i32
    %317 = vector.broadcast %c8_i32_149 : i32 to vector<1x16xi32>
    %318 = arith.cmpi sge, %295, %317 : vector<1x16xi32>
    %c16_i32_150 = arith.constant 16 : i32
    %319 = vector.broadcast %c16_i32_150 : i32 to vector<1x16xi32>
    %320 = arith.cmpi slt, %295, %319 : vector<1x16xi32>
    %321 = arith.andi %318, %320 : vector<1x16xi1>
    %cst_151 = arith.constant 0.000000e+00 : f32
    %322 = vector.broadcast %cst_151 : f32 to vector<1x16xf32>
    %323 = arith.select %321, %290, %322 : vector<1x16xi1>, vector<1x16xf32>
    %cst_152 = arith.constant dense<0.000000e+00> : vector<1x65xf32>
    %324 = tpu.matmul %323, %291, %cst_152 {dimension_numbers = #tpu.dot_dimension_numbers<[1], [1], [0], [0], [0, 0, 1, 0], [], []>} : vector<1x16xf32>, vector<65x16xf32>, vector<1x65xf32> -> vector<1x65xf32>
    %cst_153 = arith.constant dense<0xFF800000> : vector<1xf32>
    %325 = vector.multi_reduction <maximumf>, %324, %cst_153 [1] : vector<1x65xf32> to vector<1xf32>
    %326 = vector.shape_cast %325 : vector<1xf32> to vector<1x1xf32>
    %327 = vector.broadcast %326 : vector<1x1xf32> to vector<1x65xf32>
    %328 = arith.subf %324, %327 : vector<1x65xf32>
    %329 = math.exp %328 : vector<1x65xf32>
    %cst_154 = arith.constant dense<0.000000e+00> : vector<1xf32>
    %330 = vector.multi_reduction <add>, %329, %cst_154 [1] : vector<1x65xf32> to vector<1xf32>
    %331 = vector.shape_cast %330 : vector<1xf32> to vector<1x1xf32>
    %332 = tpu.reciprocal %331 {approx = true} : vector<1x1xf32> -> vector<1x1xf32>
    %333 = vector.broadcast %332 : vector<1x1xf32> to vector<1x65xf32>
    %334 = arith.mulf %329, %333 : vector<1x65xf32>
    %335 = arith.truncf %334 : vector<1x65xf32> to vector<1x65xbf16>
    %336 = arith.truncf %293 : vector<65x16xf32> to vector<65x16xbf16>
    %cst_155 = arith.constant dense<0.000000e+00> : vector<1x16xf32>
    %337 = tpu.matmul %335, %336, %cst_155 {dimension_numbers = #tpu.dot_dimension_numbers<[1], [0], [0], [1], [0, 0, 1, 1], [], []>} : vector<1x65xbf16>, vector<65x16xbf16>, vector<1x16xf32> -> vector<1x16xf32>
    %338 = arith.addf %316, %337 : vector<1x16xf32>
    %339 = arith.addf %338, %294 : vector<1x16xf32>
    %340 = arith.addf %208, %284 : vector<1x16xf32>
    %341 = arith.addf %209, %339 : vector<1x16xf32>
    %342 = arith.truncf %208 : vector<1x16xf32> to vector<1x16xbf16>
    %c0_156 = arith.constant 0 : index
    %c0_157 = arith.constant 0 : index
    %343 = vector.load %arg24[%c0_156, %c0_157] : memref<32x10xbf16, #tpu.memory_space<vmem>>, vector<16x10xbf16>
    %cst_158 = arith.constant dense<0.000000e+00> : vector<1x10xf32>
    %344 = tpu.matmul %342, %343, %cst_158 {dimension_numbers = #tpu.dot_dimension_numbers<[1], [0], [0], [1], [0, 0, 1, 1], [], []>} : vector<1x16xbf16>, vector<16x10xbf16>, vector<1x10xf32> -> vector<1x10xf32>
    %345 = arith.truncf %340 : vector<1x16xf32> to vector<1x16xbf16>
    %c16 = arith.constant 16 : index
    %c0_159 = arith.constant 0 : index
    %346 = vector.load %arg24[%c16, %c0_159] : memref<32x10xbf16, #tpu.memory_space<vmem>>, vector<16x10xbf16>
    %cst_160 = arith.constant dense<0.000000e+00> : vector<1x10xf32>
    %347 = tpu.matmul %345, %346, %cst_160 {dimension_numbers = #tpu.dot_dimension_numbers<[1], [0], [0], [1], [0, 0, 1, 1], [], []>} : vector<1x16xbf16>, vector<16x10xbf16>, vector<1x10xf32> -> vector<1x10xf32>
    %348 = arith.addf %344, %347 : vector<1x10xf32>
    %c0_161 = arith.constant 0 : index
    %c0_162 = arith.constant 0 : index
    %349 = vector.load %arg25[%c0_161, %c0_162] : memref<1x10xf32, #tpu.memory_space<vmem>>, vector<1x10xf32>
    %350 = arith.addf %348, %349 : vector<1x10xf32>
    %c0_163 = arith.constant 0 : index
    %c0_164 = arith.constant 0 : index
    %351 = vector.load %arg26[%c0_163, %c0_164] : memref<2x10xf32, #tpu.memory_space<vmem>>, vector<1x10xf32>
    tpu.vector_store %arg26[%c0_163, %c0_164], %350 {strides = array<i32>} : memref<2x10xf32, #tpu.memory_space<vmem>>, vector<1x10xf32>,
    %352 = arith.truncf %209 : vector<1x16xf32> to vector<1x16xbf16>
    %c0_165 = arith.constant 0 : index
    %c0_166 = arith.constant 0 : index
    %353 = vector.load %arg24[%c0_165, %c0_166] : memref<32x10xbf16, #tpu.memory_space<vmem>>, vector<16x10xbf16>
    %cst_167 = arith.constant dense<0.000000e+00> : vector<1x10xf32>
    %354 = tpu.matmul %352, %353, %cst_167 {dimension_numbers = #tpu.dot_dimension_numbers<[1], [0], [0], [1], [0, 0, 1, 1], [], []>} : vector<1x16xbf16>, vector<16x10xbf16>, vector<1x10xf32> -> vector<1x10xf32>
    %355 = arith.truncf %341 : vector<1x16xf32> to vector<1x16xbf16>
    %c16_168 = arith.constant 16 : index
    %c0_169 = arith.constant 0 : index
    %356 = vector.load %arg24[%c16_168, %c0_169] : memref<32x10xbf16, #tpu.memory_space<vmem>>, vector<16x10xbf16>
    %cst_170 = arith.constant dense<0.000000e+00> : vector<1x10xf32>
    %357 = tpu.matmul %355, %356, %cst_170 {dimension_numbers = #tpu.dot_dimension_numbers<[1], [0], [0], [1], [0, 0, 1, 1], [], []>} : vector<1x16xbf16>, vector<16x10xbf16>, vector<1x10xf32> -> vector<1x10xf32>
    %358 = arith.addf %354, %357 : vector<1x10xf32>
    %c0_171 = arith.constant 0 : index
    %c0_172 = arith.constant 0 : index
    %359 = vector.load %arg25[%c0_171, %c0_172] : memref<1x10xf32, #tpu.memory_space<vmem>>, vector<1x10xf32>
    %360 = arith.addf %358, %359 : vector<1x10xf32>
    %c1_173 = arith.constant 1 : index
    %c0_174 = arith.constant 0 : index
    %361 = vector.load %arg26[%c1_173, %c0_174] : memref<2x10xf32, #tpu.memory_space<vmem>>, vector<1x10xf32>
    tpu.vector_store %arg26[%c1_173, %c0_174], %360 {strides = array<i32>} : memref<2x10xf32, #tpu.memory_space<vmem>>, vector<1x10xf32>,
    return
  }
}

</mosaic_0001>

<llo_original>
// kernel: vit_forward.1
$region0: #{vit_forward.1}
  #allocation0 [shape = 'u32[]', space=smem, size = 0x4, offset = 0x4, fixed_abs, tag = 'smem constant byte address 0x4 - core index']
  #allocation1 [shape = 'u32[144,128]{1,0:T(1,128)}', space=vmem, size = 0x12000, scoped, tag = 'internal scratch']
  %s0 = inlined_call_operand.vmem [shape: bf16[144,48], index: 0, kind: input, shape index: {}]
  %s1 = inlined_call_operand.vmem [shape: f32[1,16], index: 1, kind: input, shape index: {}]
  %s2 = inlined_call_operand.vmem [shape: bf16[48,16], index: 2, kind: input, shape index: {}]
  %s3 = inlined_call_operand.vmem [shape: f32[1,16], index: 3, kind: input, shape index: {}]
  %s4 = inlined_call_operand.vmem [shape: bf16[16,16], index: 4, kind: input, shape index: {}]
  %s5 = inlined_call_operand.vmem [shape: f32[1,16], index: 5, kind: input, shape index: {}]
  %s6 = inlined_call_operand.vmem [shape: bf16[16,16], index: 6, kind: input, shape index: {}]
  %s7 = inlined_call_operand.vmem [shape: f32[1,16], index: 7, kind: input, shape index: {}]
  %s8 = inlined_call_operand.vmem [shape: f32[1,16], index: 8, kind: input, shape index: {}]
  %s9 = inlined_call_operand.vmem [shape: f32[1,16], index: 9, kind: input, shape index: {}]
  %s10 = inlined_call_operand.vmem [shape: bf16[16,16], index: 10, kind: input, shape index: {}]
  %s11 = inlined_call_operand.vmem [shape: f32[1,16], index: 11, kind: input, shape index: {}]
  %s12 = inlined_call_operand.vmem [shape: bf16[16,16], index: 12, kind: input, shape index: {}]
  %s13 = inlined_call_operand.vmem [shape: f32[1,16], index: 13, kind: input, shape index: {}]
  %s14 = inlined_call_operand.vmem [shape: bf16[2,16,16], index: 14, kind: input, shape index: {}]
  %s15 = inlined_call_operand.vmem [shape: f32[2,1,16], index: 15, kind: input, shape index: {}]
  %s16 = inlined_call_operand.vmem [shape: f32[1,16], index: 16, kind: input, shape index: {}]
  %s17 = inlined_call_operand.vmem [shape: bf16[16,16], index: 17, kind: input, shape index: {}]
  %s18 = inlined_call_operand.vmem [shape: f32[1,16], index: 18, kind: input, shape index: {}]
  %s19 = inlined_call_operand.vmem [shape: bf16[16,16], index: 19, kind: input, shape index: {}]
  %s20 = inlined_call_operand.vmem [shape: f32[1,16], index: 20, kind: input, shape index: {}]
  %s21 = inlined_call_operand.vmem [shape: bf16[2,16,16], index: 21, kind: input, shape index: {}]
  %s22 = inlined_call_operand.vmem [shape: f32[2,1,16], index: 22, kind: input, shape index: {}]
  %s23 = inlined_call_operand.vmem [shape: f32[1,16], index: 23, kind: input, shape index: {}]
  %s24 = inlined_call_operand.vmem [shape: bf16[32,10], index: 24, kind: input, shape index: {}]
  %s25 = inlined_call_operand.vmem [shape: f32[1,10], index: 25, kind: input, shape index: {}]
  %s26 = inlined_call_operand.hbm [shape: f32[2,10], index: 26, kind: output, shape index: {}]
  %s27 = sld [smem:[#allocation0]]
  $region114: #{vit_forward.1} parent=0
    _
  %s29 = ssub.s32 1, %s27
  %s30 = scalar_select 0, %s29, %s27
  $region1: #{vit_forward.1} parent=0
    #allocation2 [shape = 'u8[1024]{0}', space=vmem, size = 0x400, scoped, tag = 'output window, operand 0, single buffered']
    #allocation3 [shape = 's32[1]{0}', space=sflag, size = 0x4, scoped, tag = 'scoped memory for vit_forward.1']
    %31 = vsyncpa [#allocation3], 0
    // Predicated region
    $region2: #{vit_forward.1} parent=1 // pred_check
      _
    $region3: #{vit_forward.1} parent=1 // pred_check_branch
      %33 = sbr.rel (0) target = $region5
    $region4: #{vit_forward.1} parent=1 // pred_region
      _
    $region5: #{vit_forward.1} parent=1 // pred_fallthru
      _
    // Predicated region
    $region6: #{vit_forward.1} parent=1 // pred_check
      _
    $region7: #{vit_forward.1} parent=1 // pred_check_branch
      %35 = sbr.rel (0) target = $region9
    $region8: #{vit_forward.1} parent=1 // pred_region
      _
    $region9: #{vit_forward.1} parent=1 // pred_fallthru
      _
    // Predicated region
    $region10: #{vit_forward.1} parent=1 // pred_check
      _
    $region11: #{vit_forward.1} parent=1 // pred_check_branch
      %37 = sbr.rel (0) target = $region13
    $region12: #{vit_forward.1} parent=1 // pred_region
      _
    $region13: #{vit_forward.1} parent=1 // pred_fallthru
      _
    // Predicated region
    $region14: #{vit_forward.1} parent=1 // pred_check
      _
    $region15: #{vit_forward.1} parent=1 // pred_check_branch
      %39 = sbr.rel (0) target = $region17
    $region16: #{vit_forward.1} parent=1 // pred_region
      _
    $region17: #{vit_forward.1} parent=1 // pred_fallthru
      _
    // Predicated region
    $region18: #{vit_forward.1} parent=1 // pred_check
      _
    $region19: #{vit_forward.1} parent=1 // pred_check_branch
      %41 = sbr.rel (0) target = $region21
    $region20: #{vit_forward.1} parent=1 // pred_region
      _
    $region21: #{vit_forward.1} parent=1 // pred_fallthru
      _
    // Predicated region
    $region22: #{vit_forward.1} parent=1 // pred_check
      _
    $region23: #{vit_forward.1} parent=1 // pred_check_branch
      %43 = sbr.rel (0) target = $region25
    $region24: #{vit_forward.1} parent=1 // pred_region
      _
    $region25: #{vit_forward.1} parent=1 // pred_fallthru
      _
    // Predicated region
    $region26: #{vit_forward.1} parent=1 // pred_check
      _
    $region27: #{vit_forward.1} parent=1 // pred_check_branch
      %45 = sbr.rel (0) target = $region29
    $region28: #{vit_forward.1} parent=1 // pred_region
      _
    $region29: #{vit_forward.1} parent=1 // pred_fallthru
      _
    // Predicated region
    $region30: #{vit_forward.1} parent=1 // pred_check
      _
    $region31: #{vit_forward.1} parent=1 // pred_check_branch
      %47 = sbr.rel (0) target = $region33
    $region32: #{vit_forward.1} parent=1 // pred_region
      _
    $region33: #{vit_forward.1} parent=1 // pred_fallthru
      _
    // Predicated region
    $region34: #{vit_forward.1} parent=1 // pred_check
      _
    $region35: #{vit_forward.1} parent=1 // pred_check_branch
      %49 = sbr.rel (0) target = $region37
    $region36: #{vit_forward.1} parent=1 // pred_region
      _
    $region37: #{vit_forward.1} parent=1 // pred_fallthru
      _
    // Predicated region
    $region38: #{vit_forward.1} parent=1 // pred_check
      _
    $region39: #{vit_forward.1} parent=1 // pred_check_branch
      %51 = sbr.rel (0) target = $region41
    $region40: #{vit_forward.1} parent=1 // pred_region
      _
    $region41: #{vit_forward.1} parent=1 // pred_fallthru
      _
    // Predicated region
    $region42: #{vit_forward.1} parent=1 // pred_check
      _
    $region43: #{vit_forward.1} parent=1 // pred_check_branch
      %53 = sbr.rel (0) target = $region45
    $region44: #{vit_forward.1} parent=1 // pred_region
      _
    $region45: #{vit_forward.1} parent=1 // pred_fallthru
      _
    // Predicated region
    $region46: #{vit_forward.1} parent=1 // pred_check
      _
    $region47: #{vit_forward.1} parent=1 // pred_check_branch
      %55 = sbr.rel (0) target = $region49
    $region48: #{vit_forward.1} parent=1 // pred_region
      _
    $region49: #{vit_forward.1} parent=1 // pred_fallthru
      _
    // Predicated region
    $region50: #{vit_forward.1} parent=1 // pred_check
      _
    $region51: #{vit_forward.1} parent=1 // pred_check_branch
      %57 = sbr.rel (0) target = $region53
    $region52: #{vit_forward.1} parent=1 // pred_region
      _
    $region53: #{vit_forward.1} parent=1 // pred_fallthru
      _
    // Predicated region
    $region54: #{vit_forward.1} parent=1 // pred_check
      _
    $region55: #{vit_forward.1} parent=1 // pred_check_branch
      %59 = sbr.rel (0) target = $region57
    $region56: #{vit_forward.1} parent=1 // pred_region
      _
    $region57: #{vit_forward.1} parent=1 // pred_fallthru
      _
    // Predicated region
    $region58: #{vit_forward.1} parent=1 // pred_check
      _
    $region59: #{vit_forward.1} parent=1 // pred_check_branch
      %61 = sbr.rel (0) target = $region61
    $region60: #{vit_forward.1} parent=1 // pred_region
      _
    $region61: #{vit_forward.1} parent=1 // pred_fallthru
      _
    // Predicated region
    $region62: #{vit_forward.1} parent=1 // pred_check
      _
    $region63: #{vit_forward.1} parent=1 // pred_check_branch
      %63 = sbr.rel (0) target = $region65
    $region64: #{vit_forward.1} parent=1 // pred_region
      _
    $region65: #{vit_forward.1} parent=1 // pred_fallthru
      _
    // Predicated region
    $region66: #{vit_forward.1} parent=1 // pred_check
      _
    $region67: #{vit_forward.1} parent=1 // pred_check_branch
      %65 = sbr.rel (0) target = $region69
    $region68: #{vit_forward.1} parent=1 // pred_region
      _
    $region69: #{vit_forward.1} parent=1 // pred_fallthru
      _
    // Predicated region
    $region70: #{vit_forward.1} parent=1 // pred_check
      _
    $region71: #{vit_forward.1} parent=1 // pred_check_branch
      %67 = sbr.rel (0) target = $region73
    $region72: #{vit_forward.1} parent=1 // pred_region
      _
    $region73: #{vit_forward.1} parent=1 // pred_fallthru
      _
    // Predicated region
    $region74: #{vit_forward.1} parent=1 // pred_check
      _
    $region75: #{vit_forward.1} parent=1 // pred_check_branch
      %69 = sbr.rel (0) target = $region77
    $region76: #{vit_forward.1} parent=1 // pred_region
      _
    $region77: #{vit_forward.1} parent=1 // pred_fallthru
      _
    // Predicated region
    $region78: #{vit_forward.1} parent=1 // pred_check
      _
    $region79: #{vit_forward.1} parent=1 // pred_check_branch
      %71 = sbr.rel (0) target = $region81
    $region80: #{vit_forward.1} parent=1 // pred_region
      _
    $region81: #{vit_forward.1} parent=1 // pred_fallthru
      _
    // Predicated region
    $region82: #{vit_forward.1} parent=1 // pred_check
      _
    $region83: #{vit_forward.1} parent=1 // pred_check_branch
      %73 = sbr.rel (0) target = $region85
    $region84: #{vit_forward.1} parent=1 // pred_region
      _
    $region85: #{vit_forward.1} parent=1 // pred_fallthru
      _
    // Predicated region
    $region86: #{vit_forward.1} parent=1 // pred_check
      _
    $region87: #{vit_forward.1} parent=1 // pred_check_branch
      %75 = sbr.rel (0) target = $region89
    $region88: #{vit_forward.1} parent=1 // pred_region
      _
    $region89: #{vit_forward.1} parent=1 // pred_fallthru
      _
    // Predicated region
    $region90: #{vit_forward.1} parent=1 // pred_check
      _
    $region91: #{vit_forward.1} parent=1 // pred_check_branch
      %77 = sbr.rel (0) target = $region93
    $region92: #{vit_forward.1} parent=1 // pred_region
      _
    $region93: #{vit_forward.1} parent=1 // pred_fallthru
      _
    // Predicated region
    $region94: #{vit_forward.1} parent=1 // pred_check
      _
    $region95: #{vit_forward.1} parent=1 // pred_check_branch
      %79 = sbr.rel (0) target = $region97
    $region96: #{vit_forward.1} parent=1 // pred_region
      _
    $region97: #{vit_forward.1} parent=1 // pred_fallthru
      _
    // Predicated region
    $region98: #{vit_forward.1} parent=1 // pred_check
      _
    $region99: #{vit_forward.1} parent=1 // pred_check_branch
      %81 = sbr.rel (0) target = $region101
    $region100: #{vit_forward.1} parent=1 // pred_region
      _
    $region101: #{vit_forward.1} parent=1 // pred_fallthru
      _
    // Predicated region
    $region102: #{vit_forward.1} parent=1 // pred_check
      _
    $region103: #{vit_forward.1} parent=1 // pred_check_branch
      %83 = sbr.rel (0) target = $region105
    $region104: #{vit_forward.1} parent=1 // pred_region
      _
    $region105: #{vit_forward.1} parent=1 // pred_fallthru
      _
    %v85 = vld [vmem:[%s0] sm:$0xf]
    %v86 = vld [vmem:[%s0 + $0x4] sm:$0xf]
    %v87 = vld [vmem:[%s0 + $0x8] sm:$0xf]
    %v88 = vld [vmem:[%s0 + $0xc] sm:$0xf]
    %v89 = vld [vmem:[%s0 + $0x10] sm:$0xf]
    %v90 = vld [vmem:[%s0 + $0x14] sm:$0xf]
    %v91 = vld [vmem:[%s0 + $0x18] sm:$0xf]
    %v92 = vld [vmem:[%s0 + $0x1c] sm:$0xf]
    %v93 = vld [vmem:[%s0 + $0x20] sm:$0xf]
    %v94 = vld [vmem:[%s0 + $0x24] sm:$0xf]
    %v95 = vld [vmem:[%s0 + $0x28] sm:$0xf]
    %v96 = vld [vmem:[%s0 + $0x2c] sm:$0xf]
    %v97 = vld [vmem:[%s0 + $0x30] sm:$0xf]
    %v98 = vld [vmem:[%s0 + $0x34] sm:$0xf]
    %v99 = vld [vmem:[%s0 + $0x38] sm:$0xf]
    %v100 = vld [vmem:[%s0 + $0x3c] sm:$0xf]
    %v101 = vld [vmem:[%s0 + $0x40] sm:$0xf]
    %v102 = vld [vmem:[%s0 + $0x44] sm:$0xf]
    %v103 = vld [vmem:[%s2] sm:$0xf]
    %v104 = vld [vmem:[%s2 + $0x4] sm:$0xf]
    %v105 = vld [vmem:[%s2 + $0x8] sm:$0xf]
    %v106 = vld [vmem:[%s2 + $0xc] sm:$0xf]
    %v107 = vld [vmem:[%s2 + $0x10] sm:$0xf]
    %v108 = vld [vmem:[%s2 + $0x14] sm:$0xf]
    %v109 = vld [vmem:[%s3] sm:$0x1]
    %v111 = vlaneseq
    %v112 = vshrl.u32 %v111, 7
    %v113 = vsub.s32 0, %v112
    %v114 = vrot.slane %v109, %v113
    %v134 = vunpack.c.l.b16 %v85
    %v135 = vunpack.c.l.b16 %v86
    %v136 = vunpack.c.l.b16 %v87
    %v137 = vunpack.c.l.b16 %v88
    %v138 = vunpack.c.l.b16 %v89
    %v139 = vunpack.c.l.b16 %v90
    %v140 = vunpack.c.l.b16 %v91
    %v141 = vunpack.c.l.b16 %v92
    %v142 = vunpack.c.l.b16 %v93
    %v143 = vunpack.c.l.b16 %v94
    %v144 = vunpack.c.l.b16 %v95
    %v145 = vunpack.c.l.b16 %v96
    %v146 = vunpack.c.l.b16 %v97
    %v147 = vunpack.c.l.b16 %v98
    %v148 = vunpack.c.l.b16 %v99
    %v149 = vunpack.c.l.b16 %v100
    %v150 = vunpack.c.l.b16 %v101
    %v151 = vunpack.c.l.b16 %v102
    %v152 = vpack.c.b16 %v135, %v134
    %v153 = vpack.c.b16 %v137, %v136
    %v154 = vpack.c.b16 %v139, %v138
    %v155 = vpack.c.b16 %v141, %v140
    %v156 = vpack.c.b16 %v143, %v142
    %v157 = vpack.c.b16 %v145, %v144
    %v158 = vpack.c.b16 %v147, %v146
    %v159 = vpack.c.b16 %v149, %v148
    %v160 = vpack.c.b16 %v151, %v150
    %v167 = vunpack.c.l.b16 %v103
    %v168 = vunpack.c.l.b16 %v104
    %v169 = vunpack.c.l.b16 %v105
    %v170 = vunpack.c.l.b16 %v106
    %v171 = vunpack.c.l.b16 %v107
    %v172 = vunpack.c.l.b16 %v108
    %v173 = vpack.c.b16 %v168, %v167
    %v174 = vpack.c.b16 %v170, %v169
    %v175 = vpack.c.b16 %v172, %v171
    %vm179 = vcmask 392192
    %v181 = vsel %vm179, %v152, 0
    %v184 = vsel %vm179, %v153, 0
    %v187 = vsel %vm179, %v154, 0
    %v190 = vsel %vm179, %v155, 0
    %v193 = vsel %vm179, %v156, 0
    %v196 = vsel %vm179, %v157, 0
    %v199 = vsel %vm179, %v158, 0
    %v202 = vsel %vm179, %v159, 0
    %v205 = vsel %vm179, %v160, 0
    %207 = vmatprep.subr.bf16.mxu0 0
    %208 = vmatpush1.bf16.msra.mxu0 %v173
    %209 = vmatprep.subr.bf16.mxu0 0
    %210 = vmatpush1.bf16.msra.mxu0 %v174
    %211 = vmatprep.subr.bf16.mxu0 0
    %212 = vmatpush1.bf16.msra.mxu0 %v175
    %213 = vmatprep.subr.bf16.mxu0 0
    %214 = vmatpush1.bf16.msra.mxu0 0
    %215 = vmatprep.subr.bf16.mxu0 0
    %216 = vmatpush1.bf16.msra.mxu0 0
    %217 = vmatprep.subr.bf16.mxu0 0
    %218 = vmatpush1.bf16.msra.mxu0 0
    %219 = vmatprep.subr.bf16.mxu0 0
    %220 = vmatpush1.bf16.msra.mxu0 0
    %221 = vmatprep.subr.bf16.mxu0 0
    %222 = vmatpush1.bf16.msra.mxu0 0
    %223 = vmatprep.subr.bf16.mxu0 0
    %224 = vmatpush1.bf16.msra.mxu0 0
    %225 = vmatprep.subr.bf16.mxu0 0
    %226 = vmatpush1.bf16.msra.mxu0 0
    %227 = vmatprep.subr.bf16.mxu0 0
    %228 = vmatpush1.bf16.msra.mxu0 0
    %229 = vmatprep.subr.bf16.mxu0 0
    %230 = vmatpush1.bf16.msra.mxu0 0
    %231 = vmatprep.subr.bf16.mxu0 0
    %232 = vmatpush1.bf16.msra.mxu0 0
    %233 = vmatprep.subr.bf16.mxu0 0
    %234 = vmatpush1.bf16.msra.mxu0 0
    %235 = vmatprep.subr.bf16.mxu0 0
    %236 = vmatpush1.bf16.msra.mxu0 0
    %237 = vmatprep.subr.bf16.mxu0 0
    %238 = vmatpush1.bf16.msra.mxu0 0
    %239 = vmatprep.mubr.bf16.mxu0 0
    %240 = vmatmul.mubr.bf16.gmra.mrb[0].mxu0 %v181
    %v241 = vpop.f32.mrb[0].mxu0
    %v242 = vadd.f32 %v114, %v241
    %v243 = vpop.f32.mrb[0].mxu0
    %v244 = vpop.f32.mrb[0].mxu0
    %v245 = vadd.f32 %v114, %v244
    %v246 = vpop.f32.mrb[0].mxu0
    %247 = vmatprep.mubr.bf16.mxu0 0
    %248 = vmatmul.mubr.bf16.gmra.mrb[0].mxu0 %v184
    %v249 = vpop.f32.mrb[0].mxu0
    %v250 = vadd.f32 %v114, %v249
    %v251 = vpop.f32.mrb[0].mxu0
    %v252 = vpop.f32.mrb[0].mxu0
    %v253 = vadd.f32 %v114, %v252
    %v254 = vpop.f32.mrb[0].mxu0
    %255 = vmatprep.mubr.bf16.mxu0 0
    %256 = vmatmul.mubr.bf16.gmra.mrb[0].mxu0 %v187
    %v257 = vpop.f32.mrb[0].mxu0
    %v258 = vadd.f32 %v114, %v257
    %v259 = vpop.f32.mrb[0].mxu0
    %v260 = vpop.f32.mrb[0].mxu0
    %v261 = vadd.f32 %v114, %v260
    %v262 = vpop.f32.mrb[0].mxu0
    %263 = vmatprep.mubr.bf16.mxu0 0
    %264 = vmatmul.mubr.bf16.gmra.mrb[0].mxu0 %v190
    %v265 = vpop.f32.mrb[0].mxu0
    %v266 = vadd.f32 %v114, %v265
    %v267 = vpop.f32.mrb[0].mxu0
    %v268 = vpop.f32.mrb[0].mxu0
    %v269 = vadd.f32 %v114, %v268
    %v270 = vpop.f32.mrb[0].mxu0
    %271 = vmatprep.mubr.bf16.mxu0 0
    %272 = vmatmul.mubr.bf16.gmra.mrb[0].mxu0 %v193
    %v273 = vpop.f32.mrb[0].mxu0
    %v274 = vadd.f32 %v114, %v273
    %v275 = vpop.f32.mrb[0].mxu0
    %v276 = vpop.f32.mrb[0].mxu0
    %v277 = vadd.f32 %v114, %v276
    %v278 = vpop.f32.mrb[0].mxu0
    %279 = vmatprep.mubr.bf16.mxu0 0
    %280 = vmatmul.mubr.bf16.gmra.mrb[0].mxu0 %v196
    %v281 = vpop.f32.mrb[0].mxu0
    %v282 = vadd.f32 %v114, %v281
    %v283 = vpop.f32.mrb[0].mxu0
    %v284 = vpop.f32.mrb[0].mxu0
    %v285 = vadd.f32 %v114, %v284
    %v286 = vpop.f32.mrb[0].mxu0
    %287 = vmatprep.mubr.bf16.mxu0 0
    %288 = vmatmul.mubr.bf16.gmra.mrb[0].mxu0 %v199
    %v289 = vpop.f32.mrb[0].mxu0
    %v290 = vadd.f32 %v114, %v289
    %v291 = vpop.f32.mrb[0].mxu0
    %v292 = vpop.f32.mrb[0].mxu0
    %v293 = vadd.f32 %v114, %v292
    %v294 = vpop.f32.mrb[0].mxu0
    %295 = vmatprep.mubr.bf16.mxu0 0
    %296 = vmatmul.mubr.bf16.gmra.mrb[0].mxu0 %v202
    %v297 = vpop.f32.mrb[0].mxu0
    %v298 = vadd.f32 %v114, %v297
    %v299 = vpop.f32.mrb[0].mxu0
    %v300 = vpop.f32.mrb[0].mxu0
    %v301 = vadd.f32 %v114, %v300
    %v302 = vpop.f32.mrb[0].mxu0
    %303 = vmatprep.mubr.bf16.mxu0 0
    %304 = vmatmul.mubr.bf16.gmra.mrb[0].mxu0 %v205
    %v305 = vpop.f32.mrb[0].mxu0
    %v306 = vadd.f32 %v114, %v305
    %v307 = vpop.f32.mrb[0].mxu0
    %v308 = vpop.f32.mrb[0].mxu0
    %v309 = vadd.f32 %v114, %v308
    %v310 = vpop.f32.mrb[0].mxu0
    %311 = vdwg.mxu0
    %v312 = vlaneseq
    %v313 = vshrl.u32 %v312, 7
    %v314 = vadd.s32 %v313, 8
    %v315 = vadd.s32 %v313, 16
    %v316 = vadd.s32 %v313, 24
    %v317 = vadd.s32 %v313, 32
    %v318 = vadd.s32 %v313, 40
    %v319 = vadd.s32 %v313, 48
    %v320 = vadd.s32 %v313, 56
    %v321 = vadd.s32 %v313, 64
    %v322 = vadd.s32 %v313, 72
    %v323 = vadd.s32 %v313, 80
    %v324 = vadd.s32 %v313, 88
    %v325 = vadd.s32 %v313, 96
    %v326 = vadd.s32 %v313, 104
    %v327 = vadd.s32 %v313, 112
    %v328 = vadd.s32 %v313, 120
    %v329 = vadd.s32 %v313, 128
    %v330 = vadd.s32 %v313, 136
    %vm331 = vcmp.eq.s32.totalorder %v313, 0
    %vm332 = vcmp.eq.s32.totalorder %v314, 0
    %vm333 = vcmp.eq.s32.totalorder %v315, 0
    %vm334 = vcmp.eq.s32.totalorder %v316, 0
    %vm335 = vcmp.eq.s32.totalorder %v317, 0
    %vm336 = vcmp.eq.s32.totalorder %v318, 0
    %vm337 = vcmp.eq.s32.totalorder %v319, 0
    %vm338 = vcmp.eq.s32.totalorder %v320, 0
    %vm339 = vcmp.eq.s32.totalorder %v321, 0
    %vm340 = vcmp.eq.s32.totalorder %v322, 0
    %vm341 = vcmp.eq.s32.totalorder %v323, 0
    %vm342 = vcmp.eq.s32.totalorder %v324, 0
    %vm343 = vcmp.eq.s32.totalorder %v325, 0
    %vm344 = vcmp.eq.s32.totalorder %v326, 0
    %vm345 = vcmp.eq.s32.totalorder %v327, 0
    %vm346 = vcmp.eq.s32.totalorder %v328, 0
    %vm347 = vcmp.eq.s32.totalorder %v329, 0
    %vm348 = vcmp.eq.s32.totalorder %v330, 0
    %vm349 = vcmp.eq.s32.totalorder %v313, 72
    %vm350 = vcmp.eq.s32.totalorder %v314, 72
    %vm351 = vcmp.eq.s32.totalorder %v315, 72
    %vm352 = vcmp.eq.s32.totalorder %v316, 72
    %vm353 = vcmp.eq.s32.totalorder %v317, 72
    %vm354 = vcmp.eq.s32.totalorder %v318, 72
    %vm355 = vcmp.eq.s32.totalorder %v319, 72
    %vm356 = vcmp.eq.s32.totalorder %v320, 72
    %vm357 = vcmp.eq.s32.totalorder %v321, 72
    %vm358 = vcmp.eq.s32.totalorder %v322, 72
    %vm359 = vcmp.eq.s32.totalorder %v323, 72
    %vm360 = vcmp.eq.s32.totalorder %v324, 72
    %vm361 = vcmp.eq.s32.totalorder %v325, 72
    %vm362 = vcmp.eq.s32.totalorder %v326, 72
    %vm363 = vcmp.eq.s32.totalorder %v327, 72
    %vm364 = vcmp.eq.s32.totalorder %v328, 72
    %vm365 = vcmp.eq.s32.totalorder %v329, 72
    %vm366 = vcmp.eq.s32.totalorder %v330, 72
    %vm367 = vmor %vm331, %vm349
    %vm368 = vmor %vm332, %vm350
    %vm369 = vmor %vm333, %vm351
    %vm370 = vmor %vm334, %vm352
    %vm371 = vmor %vm335, %vm353
    %vm372 = vmor %vm336, %vm354
    %vm373 = vmor %vm337, %vm355
    %vm374 = vmor %vm338, %vm356
    %vm375 = vmor %vm339, %vm357
    %vm376 = vmor %vm340, %vm358
    %vm377 = vmor %vm341, %vm359
    %vm378 = vmor %vm342, %vm360
    %vm379 = vmor %vm343, %vm361
    %vm380 = vmor %vm344, %vm362
    %vm381 = vmor %vm345, %vm363
    %vm382 = vmor %vm346, %vm364
    %vm383 = vmor %vm347, %vm365
    %vm384 = vmor %vm348, %vm366
    %v385 = vld [vmem:[%s1] sm:$0x1]
    %v387 = vlaneseq
    %v388 = vshrl.u32 %v387, 7
    %v389 = vsub.s32 0, %v388
    %v390 = vrot.slane %v385, %v389
    %v392 = vsel %vm367, %v390, %v242
    %v393 = vsel %vm368, %v390, %v245
    %v394 = vsel %vm369, %v390, %v250
    %v395 = vsel %vm370, %v390, %v253
    %v396 = vsel %vm371, %v390, %v258
    %v397 = vsel %vm372, %v390, %v261
    %v398 = vsel %vm373, %v390, %v266
    %v399 = vsel %vm374, %v390, %v269
    %v400 = vsel %vm375, %v390, %v274
    %v401 = vsel %vm376, %v390, %v277
    %v402 = vsel %vm377, %v390, %v282
    %v403 = vsel %vm378, %v390, %v285
    %v404 = vsel %vm379, %v390, %v290
    %v405 = vsel %vm380, %v390, %v293
    %v406 = vsel %vm381, %v390, %v298
    %v407 = vsel %vm382, %v390, %v301
    %v408 = vsel %vm383, %v390, %v306
    %v409 = vsel %vm384, %v390, %v309
    %v410 = vmax.f32 %v392, 0.0
    %v411 = vmax.f32 %v393, 0.0
    %v412 = vmax.f32 %v394, 0.0
    %v413 = vmax.f32 %v395, 0.0
    %v414 = vmax.f32 %v396, 0.0
    %v415 = vmax.f32 %v397, 0.0
    %v416 = vmax.f32 %v398, 0.0
    %v417 = vmax.f32 %v399, 0.0
    %v418 = vmax.f32 %v400, 0.0
    %v419 = vmax.f32 %v401, 0.0
    %v420 = vmax.f32 %v402, 0.0
    %v421 = vmax.f32 %v403, 0.0
    %v422 = vmax.f32 %v404, 0.0
    %v423 = vmax.f32 %v405, 0.0
    %v424 = vmax.f32 %v406, 0.0
    %v425 = vmax.f32 %v407, 0.0
    %v426 = vmax.f32 %v408, 0.0
    %v427 = vmax.f32 %v409, 0.0
    %v428 = vpack.c.bf16 %v411, %v410
    %v429 = vpack.c.bf16 %v413, %v412
    %v430 = vpack.c.bf16 %v415, %v414
    %v431 = vpack.c.bf16 %v417, %v416
    %v432 = vpack.c.bf16 %v419, %v418
    %v433 = vpack.c.bf16 %v421, %v420
    %v434 = vpack.c.bf16 %v423, %v422
    %v435 = vpack.c.bf16 %v425, %v424
    %v436 = vpack.c.bf16 %v427, %v426
    %v437 = vld [vmem:[%s4] sm:$0xf]
    %v438 = vld [vmem:[%s4 + $0x4] sm:$0xf]
    %v439 = vld [vmem:[%s5] sm:$0x1]
    %v441 = vlaneseq
    %v442 = vshrl.u32 %v441, 7
    %v443 = vsub.s32 0, %v442
    %v444 = vrot.slane %v439, %v443
    %v448 = vunpack.c.l.b16 %v437
    %v449 = vunpack.c.l.b16 %v438
    %v450 = vpack.c.b16 %v449, %v448
    %vm452 = vcmask 130048
    %v454 = vsel %vm452, %v428, 0
    %v457 = vsel %vm452, %v429, 0
    %v460 = vsel %vm452, %v430, 0
    %v463 = vsel %vm452, %v431, 0
    %v466 = vsel %vm452, %v432, 0
    %v469 = vsel %vm452, %v433, 0
    %v472 = vsel %vm452, %v434, 0
    %v475 = vsel %vm452, %v435, 0
    %v478 = vsel %vm452, %v436, 0
    %480 = vmatprep.subr.bf16.mxu0 0
    %481 = vmatpush1.bf16.msra.mxu0 %v450
    %482 = vmatprep.subr.bf16.mxu0 0
    %483 = vmatpush1.bf16.msra.mxu0 0
    %484 = vmatprep.subr.bf16.mxu0 0
    %485 = vmatpush1.bf16.msra.mxu0 0
    %486 = vmatprep.subr.bf16.mxu0 0
    %487 = vmatpush1.bf16.msra.mxu0 0
    %488 = vmatprep.subr.bf16.mxu0 0
    %489 = vmatpush1.bf16.msra.mxu0 0
    %490 = vmatprep.subr.bf16.mxu0 0
    %491 = vmatpush1.bf16.msra.mxu0 0
    %492 = vmatprep.subr.bf16.mxu0 0
    %493 = vmatpush1.bf16.msra.mxu0 0
    %494 = vmatprep.subr.bf16.mxu0 0
    %495 = vmatpush1.bf16.msra.mxu0 0
    %496 = vmatprep.subr.bf16.mxu0 0
    %497 = vmatpush1.bf16.msra.mxu0 0
    %498 = vmatprep.subr.bf16.mxu0 0
    %499 = vmatpush1.bf16.msra.mxu0 0
    %500 = vmatprep.subr.bf16.mxu0 0
    %501 = vmatpush1.bf16.msra.mxu0 0
    %502 = vmatprep.subr.bf16.mxu0 0
    %503 = vmatpush1.bf16.msra.mxu0 0
    %504 = vmatprep.subr.bf16.mxu0 0
    %505 = vmatpush1.bf16.msra.mxu0 0
    %506 = vmatprep.subr.bf16.mxu0 0
    %507 = vmatpush1.bf16.msra.mxu0 0
    %508 = vmatprep.subr.bf16.mxu0 0
    %509 = vmatpush1.bf16.msra.mxu0 0
    %510 = vmatprep.subr.bf16.mxu0 0
    %511 = vmatpush1.bf16.msra.mxu0 0
    %512 = vmatprep.mubr.bf16.mxu0 0
    %513 = vmatmul.mubr.bf16.gmra.mrb[0].mxu0 %v454
    %v514 = vpop.f32.mrb[0].mxu0
    %v515 = vadd.f32 %v444, %v514
    %v516 = vpop.f32.mrb[0].mxu0
    %v517 = vpop.f32.mrb[0].mxu0
    %v518 = vadd.f32 %v444, %v517
    %v519 = vpop.f32.mrb[0].mxu0
    %520 = vmatprep.mubr.bf16.mxu0 0
    %521 = vmatmul.mubr.bf16.gmra.mrb[0].mxu0 %v457
    %v522 = vpop.f32.mrb[0].mxu0
    %v523 = vadd.f32 %v444, %v522
    %v524 = vpop.f32.mrb[0].mxu0
    %v525 = vpop.f32.mrb[0].mxu0
    %v526 = vadd.f32 %v444, %v525
    %v527 = vpop.f32.mrb[0].mxu0
    %528 = vmatprep.mubr.bf16.mxu0 0
    %529 = vmatmul.mubr.bf16.gmra.mrb[0].mxu0 %v460
    %v530 = vpop.f32.mrb[0].mxu0
    %v531 = vadd.f32 %v444, %v530
    %v532 = vpop.f32.mrb[0].mxu0
    %v533 = vpop.f32.mrb[0].mxu0
    %v534 = vadd.f32 %v444, %v533
    %v535 = vpop.f32.mrb[0].mxu0
    %536 = vmatprep.mubr.bf16.mxu0 0
    %537 = vmatmul.mubr.bf16.gmra.mrb[0].mxu0 %v463
    %v538 = vpop.f32.mrb[0].mxu0
    %v539 = vadd.f32 %v444, %v538
    %v540 = vpop.f32.mrb[0].mxu0
    %v541 = vpop.f32.mrb[0].mxu0
    %v542 = vadd.f32 %v444, %v541
    %v543 = vpop.f32.mrb[0].mxu0
    %544 = vmatprep.mubr.bf16.mxu0 0
    %545 = vmatmul.mubr.bf16.gmra.mrb[0].mxu0 %v466
    %v546 = vpop.f32.mrb[0].mxu0
    %v547 = vadd.f32 %v444, %v546
    %v548 = vpop.f32.mrb[0].mxu0
    %v549 = vpop.f32.mrb[0].mxu0
    %v550 = vadd.f32 %v444, %v549
    %v551 = vpop.f32.mrb[0].mxu0
    %552 = vmatprep.mubr.bf16.mxu0 0
    %553 = vmatmul.mubr.bf16.gmra.mrb[0].mxu0 %v469
    %v554 = vpop.f32.mrb[0].mxu0
    %v555 = vadd.f32 %v444, %v554
    %v556 = vpop.f32.mrb[0].mxu0
    %v557 = vpop.f32.mrb[0].mxu0
    %v558 = vadd.f32 %v444, %v557
    %v559 = vpop.f32.mrb[0].mxu0
    %560 = vmatprep.mubr.bf16.mxu0 0
    %561 = vmatmul.mubr.bf16.gmra.mrb[0].mxu0 %v472
    %v562 = vpop.f32.mrb[0].mxu0
    %v563 = vadd.f32 %v444, %v562
    %v564 = vpop.f32.mrb[0].mxu0
    %v565 = vpop.f32.mrb[0].mxu0
    %v566 = vadd.f32 %v444, %v565
    %v567 = vpop.f32.mrb[0].mxu0
    %568 = vmatprep.mubr.bf16.mxu0 0
    %569 = vmatmul.mubr.bf16.gmra.mrb[0].mxu0 %v475
    %v570 = vpop.f32.mrb[0].mxu0
    %v571 = vadd.f32 %v444, %v570
    %v572 = vpop.f32.mrb[0].mxu0
    %v573 = vpop.f32.mrb[0].mxu0
    %v574 = vadd.f32 %v444, %v573
    %v575 = vpop.f32.mrb[0].mxu0
    %576 = vmatprep.mubr.bf16.mxu0 0
    %577 = vmatmul.mubr.bf16.gmra.mrb[0].mxu0 %v478
    %v578 = vpop.f32.mrb[0].mxu0
    %v579 = vadd.f32 %v444, %v578
    %v580 = vpop.f32.mrb[0].mxu0
    %v581 = vpop.f32.mrb[0].mxu0
    %v582 = vadd.f32 %v444, %v581
    %v583 = vpop.f32.mrb[0].mxu0
    %584 = vdwg.mxu0
    %v585 = vld [vmem:[%s8] sm:$0x1]
    %v586 = vld [vmem:[%s9] sm:$0x1]
    %v587 = vsel %vm452, %v515, 0.0
    %588 = vadd.xlane.f32.xlu0 %v587
    %v589 = vpop.xlane.xlu0 %588
    %v590 = vsel %vm452, %v518, 0.0
    %591 = vadd.xlane.f32.xlu0 %v590
    %v592 = vpop.xlane.xlu0 %591
    %v593 = vsel %vm452, %v523, 0.0
    %594 = vadd.xlane.f32.xlu0 %v593
    %v595 = vpop.xlane.xlu0 %594
    %v596 = vsel %vm452, %v526, 0.0
    %597 = vadd.xlane.f32.xlu0 %v596
    %v598 = vpop.xlane.xlu0 %597
    %v599 = vsel %vm452, %v531, 0.0
    %600 = vadd.xlane.f32.xlu0 %v599
    %v601 = vpop.xlane.xlu0 %600
    %v602 = vsel %vm452, %v534, 0.0
    %603 = vadd.xlane.f32.xlu0 %v602
    %v604 = vpop.xlane.xlu0 %603
    %v605 = vsel %vm452, %v539, 0.0
    %606 = vadd.xlane.f32.xlu0 %v605
    %v607 = vpop.xlane.xlu0 %606
    %v608 = vsel %vm452, %v542, 0.0
    %609 = vadd.xlane.f32.xlu0 %v608
    %v610 = vpop.xlane.xlu0 %609
    %v611 = vsel %vm452, %v547, 0.0
    %612 = vadd.xlane.f32.xlu0 %v611
    %v613 = vpop.xlane.xlu0 %612
    %v614 = vsel %vm452, %v550, 0.0
    %615 = vadd.xlane.f32.xlu0 %v614
    %v616 = vpop.xlane.xlu0 %615
    %v617 = vsel %vm452, %v555, 0.0
    %618 = vadd.xlane.f32.xlu0 %v617
    %v619 = vpop.xlane.xlu0 %618
    %v620 = vsel %vm452, %v558, 0.0
    %621 = vadd.xlane.f32.xlu0 %v620
    %v622 = vpop.xlane.xlu0 %621
    %v623 = vsel %vm452, %v563, 0.0
    %624 = vadd.xlane.f32.xlu0 %v623
    %v625 = vpop.xlane.xlu0 %624
    %v626 = vsel %vm452, %v566, 0.0
    %627 = vadd.xlane.f32.xlu0 %v626
    %v628 = vpop.xlane.xlu0 %627
    %v629 = vsel %vm452, %v571, 0.0
    %630 = vadd.xlane.f32.xlu0 %v629
    %v631 = vpop.xlane.xlu0 %630
    %v632 = vsel %vm452, %v574, 0.0
    %633 = vadd.xlane.f32.xlu0 %v632
    %v634 = vpop.xlane.xlu0 %633
    %v635 = vsel %vm452, %v579, 0.0
    %636 = vadd.xlane.f32.xlu0 %v635
    %v637 = vpop.xlane.xlu0 %636
    %v638 = vsel %vm452, %v582, 0.0
    %639 = vadd.xlane.f32.xlu0 %v638
    %v640 = vpop.xlane.xlu0 %639
    %v641 = vrcp.pop 16.0
    %v642 = vmul.f32 %v589, %v641
    %v643 = vmul.f32 %v592, %v641
    %v644 = vmul.f32 %v595, %v641
    %v645 = vmul.f32 %v598, %v641
    %v646 = vmul.f32 %v601, %v641
    %v647 = vmul.f32 %v604, %v641
    %v648 = vmul.f32 %v607, %v641
    %v649 = vmul.f32 %v610, %v641
    %v650 = vmul.f32 %v613, %v641
    %v651 = vmul.f32 %v616, %v641
    %v652 = vmul.f32 %v619, %v641
    %v653 = vmul.f32 %v622, %v641
    %v654 = vmul.f32 %v625, %v641
    %v655 = vmul.f32 %v628, %v641
    %v656 = vmul.f32 %v631, %v641
    %v657 = vmul.f32 %v634, %v641
    %v658 = vmul.f32 %v637, %v641
    %v659 = vmul.f32 %v640, %v641
    %v660 = vsub.f32 %v515, %v642
    %v661 = vsub.f32 %v518, %v643
    %v662 = vsub.f32 %v523, %v644
    %v663 = vsub.f32 %v526, %v645
    %v664 = vsub.f32 %v531, %v646
    %v665 = vsub.f32 %v534, %v647
    %v666 = vsub.f32 %v539, %v648
    %v667 = vsub.f32 %v542, %v649
    %v668 = vsub.f32 %v547, %v650
    %v669 = vsub.f32 %v550, %v651
    %v670 = vsub.f32 %v555, %v652
    %v671 = vsub.f32 %v558, %v653
    %v672 = vsub.f32 %v563, %v654
    %v673 = vsub.f32 %v566, %v655
    %v674 = vsub.f32 %v571, %v656
    %v675 = vsub.f32 %v574, %v657
    %v676 = vsub.f32 %v579, %v658
    %v677 = vsub.f32 %v582, %v659
    %v678 = vmul.f32 %v660, %v660
    %v679 = vmul.f32 %v661, %v661
    %v680 = vmul.f32 %v662, %v662
    %v681 = vmul.f32 %v663, %v663
    %v682 = vmul.f32 %v664, %v664
    %v683 = vmul.f32 %v665, %v665
    %v684 = vmul.f32 %v666, %v666
    %v685 = vmul.f32 %v667, %v667
    %v686 = vmul.f32 %v668, %v668
    %v687 = vmul.f32 %v669, %v669
    %v688 = vmul.f32 %v670, %v670
    %v689 = vmul.f32 %v671, %v671
    %v690 = vmul.f32 %v672, %v672
    %v691 = vmul.f32 %v673, %v673
    %v692 = vmul.f32 %v674, %v674
    %v693 = vmul.f32 %v675, %v675
    %v694 = vmul.f32 %v676, %v676
    %v695 = vmul.f32 %v677, %v677
    %v696 = vsel %vm452, %v678, 0.0
    %697 = vadd.xlane.f32.xlu0 %v696
    %v698 = vpop.xlane.xlu0 %697
    %v699 = vsel %vm452, %v679, 0.0
    %700 = vadd.xlane.f32.xlu0 %v699
    %v701 = vpop.xlane.xlu0 %700
    %v702 = vsel %vm452, %v680, 0.0
    %703 = vadd.xlane.f32.xlu0 %v702
    %v704 = vpop.xlane.xlu0 %703
    %v705 = vsel %vm452, %v681, 0.0
    %706 = vadd.xlane.f32.xlu0 %v705
    %v707 = vpop.xlane.xlu0 %706
    %v708 = vsel %vm452, %v682, 0.0
    %709 = vadd.xlane.f32.xlu0 %v708
    %v710 = vpop.xlane.xlu0 %709
    %v711 = vsel %vm452, %v683, 0.0
    %712 = vadd.xlane.f32.xlu0 %v711
    %v713 = vpop.xlane.xlu0 %712
    %v714 = vsel %vm452, %v684, 0.0
    %715 = vadd.xlane.f32.xlu0 %v714
    %v716 = vpop.xlane.xlu0 %715
    %v717 = vsel %vm452, %v685, 0.0
    %718 = vadd.xlane.f32.xlu0 %v717
    %v719 = vpop.xlane.xlu0 %718
    %v720 = vsel %vm452, %v686, 0.0
    %721 = vadd.xlane.f32.xlu0 %v720
    %v722 = vpop.xlane.xlu0 %721
    %v723 = vsel %vm452, %v687, 0.0
    %724 = vadd.xlane.f32.xlu0 %v723
    %v725 = vpop.xlane.xlu0 %724
    %v726 = vsel %vm452, %v688, 0.0
    %727 = vadd.xlane.f32.xlu0 %v726
    %v728 = vpop.xlane.xlu0 %727
    %v729 = vsel %vm452, %v689, 0.0
    %730 = vadd.xlane.f32.xlu0 %v729
    %v731 = vpop.xlane.xlu0 %730
    %v732 = vsel %vm452, %v690, 0.0
    %733 = vadd.xlane.f32.xlu0 %v732
    %v734 = vpop.xlane.xlu0 %733
    %v735 = vsel %vm452, %v691, 0.0
    %736 = vadd.xlane.f32.xlu0 %v735
    %v737 = vpop.xlane.xlu0 %736
    %v738 = vsel %vm452, %v692, 0.0
    %739 = vadd.xlane.f32.xlu0 %v738
    %v740 = vpop.xlane.xlu0 %739
    %v741 = vsel %vm452, %v693, 0.0
    %742 = vadd.xlane.f32.xlu0 %v741
    %v743 = vpop.xlane.xlu0 %742
    %v744 = vsel %vm452, %v694, 0.0
    %745 = vadd.xlane.f32.xlu0 %v744
    %v746 = vpop.xlane.xlu0 %745
    %v747 = vsel %vm452, %v695, 0.0
    %748 = vadd.xlane.f32.xlu0 %v747
    %v749 = vpop.xlane.xlu0 %748
    %v750 = vmul.f32 %v698, %v641
    %v751 = vmul.f32 %v701, %v641
    %v752 = vmul.f32 %v704, %v641
    %v753 = vmul.f32 %v707, %v641
    %v754 = vmul.f32 %v710, %v641
    %v755 = vmul.f32 %v713, %v641
    %v756 = vmul.f32 %v716, %v641
    %v757 = vmul.f32 %v719, %v641
    %v758 = vmul.f32 %v722, %v641
    %v759 = vmul.f32 %v725, %v641
    %v760 = vmul.f32 %v728, %v641
    %v761 = vmul.f32 %v731, %v641
    %v762 = vmul.f32 %v734, %v641
    %v763 = vmul.f32 %v737, %v641
    %v764 = vmul.f32 %v740, %v641
    %v765 = vmul.f32 %v743, %v641
    %v766 = vmul.f32 %v746, %v641
    %v767 = vmul.f32 %v749, %v641
    %v768 = vadd.f32 %v750, 1e-06
    %v769 = vadd.f32 %v751, 1e-06
    %v770 = vadd.f32 %v752, 1e-06
    %v771 = vadd.f32 %v753, 1e-06
    %v772 = vadd.f32 %v754, 1e-06
    %v773 = vadd.f32 %v755, 1e-06
    %v774 = vadd.f32 %v756, 1e-06
    %v775 = vadd.f32 %v757, 1e-06
    %v776 = vadd.f32 %v758, 1e-06
    %v777 = vadd.f32 %v759, 1e-06
    %v778 = vadd.f32 %v760, 1e-06
    %v779 = vadd.f32 %v761, 1e-06
    %v780 = vadd.f32 %v762, 1e-06
    %v781 = vadd.f32 %v763, 1e-06
    %v782 = vadd.f32 %v764, 1e-06
    %v783 = vadd.f32 %v765, 1e-06
    %v784 = vadd.f32 %v766, 1e-06
    %v785 = vadd.f32 %v767, 1e-06
    %v786 = vrsqrt.pop %v768
    %v787 = vrsqrt.pop %v769
    %v788 = vrsqrt.pop %v770
    %v789 = vrsqrt.pop %v771
    %v790 = vrsqrt.pop %v772
    %v791 = vrsqrt.pop %v773
    %v792 = vrsqrt.pop %v774
    %v793 = vrsqrt.pop %v775
    %v794 = vrsqrt.pop %v776
    %v795 = vrsqrt.pop %v777
    %v796 = vrsqrt.pop %v778
    %v797 = vrsqrt.pop %v779
    %v798 = vrsqrt.pop %v780
    %v799 = vrsqrt.pop %v781
    %v800 = vrsqrt.pop %v782
    %v801 = vrsqrt.pop %v783
    %v802 = vrsqrt.pop %v784
    %v803 = vrsqrt.pop %v785
    %v804 = vmul.f32 %v660, %v786
    %v805 = vmul.f32 %v661, %v787
    %v806 = vmul.f32 %v662, %v788
    %v807 = vmul.f32 %v663, %v789
    %v808 = vmul.f32 %v664, %v790
    %v809 = vmul.f32 %v665, %v791
    %v810 = vmul.f32 %v666, %v792
    %v811 = vmul.f32 %v667, %v793
    %v812 = vmul.f32 %v668, %v794
    %v813 = vmul.f32 %v669, %v795
    %v814 = vmul.f32 %v670, %v796
    %v815 = vmul.f32 %v671, %v797
    %v816 = vmul.f32 %v672, %v798
    %v817 = vmul.f32 %v673, %v799
    %v818 = vmul.f32 %v674, %v800
    %v819 = vmul.f32 %v675, %v801
    %v820 = vmul.f32 %v676, %v802
    %v821 = vmul.f32 %v677, %v803
    %v823 = vlaneseq
    %v824 = vshrl.u32 %v823, 7
    %v825 = vsub.s32 0, %v824
    %v826 = vrot.slane %v585, %v825
    %v828 = vmul.f32 %v804, %v826
    %v829 = vmul.f32 %v805, %v826
    %v830 = vmul.f32 %v806, %v826
    %v831 = vmul.f32 %v807, %v826
    %v832 = vmul.f32 %v808, %v826
    %v833 = vmul.f32 %v809, %v826
    %v834 = vmul.f32 %v810, %v826
    %v835 = vmul.f32 %v811, %v826
    %v836 = vmul.f32 %v812, %v826
    %v837 = vmul.f32 %v813, %v826
    %v838 = vmul.f32 %v814, %v826
    %v839 = vmul.f32 %v815, %v826
    %v840 = vmul.f32 %v816, %v826
    %v841 = vmul.f32 %v817, %v826
    %v842 = vmul.f32 %v818, %v826
    %v843 = vmul.f32 %v819, %v826
    %v844 = vmul.f32 %v820, %v826
    %v845 = vmul.f32 %v821, %v826
    %v847 = vlaneseq
    %v848 = vshrl.u32 %v847, 7
    %v849 = vsub.s32 0, %v848
    %v850 = vrot.slane %v586, %v849
    %v852 = vadd.f32 %v828, %v850
    %v853 = vadd.f32 %v829, %v850
    %v854 = vadd.f32 %v830, %v850
    %v855 = vadd.f32 %v831, %v850
    %v856 = vadd.f32 %v832, %v850
    %v857 = vadd.f32 %v833, %v850
    %v858 = vadd.f32 %v834, %v850
    %v859 = vadd.f32 %v835, %v850
    %v860 = vadd.f32 %v836, %v850
    %v861 = vadd.f32 %v837, %v850
    %v862 = vadd.f32 %v838, %v850
    %v863 = vadd.f32 %v839, %v850
    %v864 = vadd.f32 %v840, %v850
    %v865 = vadd.f32 %v841, %v850
    %v866 = vadd.f32 %v842, %v850
    %v867 = vadd.f32 %v843, %v850
    %v868 = vadd.f32 %v844, %v850
    %v869 = vadd.f32 %v845, %v850
    %v870 = vld [vmem:[%s6] sm:$0xf]
    %v871 = vld [vmem:[%s6 + $0x4] sm:$0xf]
    %v872 = vld [vmem:[%s7] sm:$0x1]
    %v874 = vlaneseq
    %v875 = vshrl.u32 %v874, 7
    %v876 = vsub.s32 0, %v875
    %v877 = vrot.slane %v872, %v876
    %v881 = vunpack.c.l.b16 %v870
    %v882 = vunpack.c.l.b16 %v871
    %v883 = vpack.c.b16 %v882, %v881
    %885 = vmatprep.subr.bf16.mxu0 0
    %886 = vmatpush1.bf16.msra.mxu0 %v883
    %887 = vmatprep.subr.bf16.mxu0 0
    %888 = vmatpush1.bf16.msra.mxu0 0
    %889 = vmatprep.subr.bf16.mxu0 0
    %890 = vmatpush1.bf16.msra.mxu0 0
    %891 = vmatprep.subr.bf16.mxu0 0
    %892 = vmatpush1.bf16.msra.mxu0 0
    %893 = vmatprep.subr.bf16.mxu0 0
    %894 = vmatpush1.bf16.msra.mxu0 0
    %895 = vmatprep.subr.bf16.mxu0 0
    %896 = vmatpush1.bf16.msra.mxu0 0
    %897 = vmatprep.subr.bf16.mxu0 0
    %898 = vmatpush1.bf16.msra.mxu0 0
    %899 = vmatprep.subr.bf16.mxu0 0
    %900 = vmatpush1.bf16.msra.mxu0 0
    %901 = vmatprep.subr.bf16.mxu0 0
    %902 = vmatpush1.bf16.msra.mxu0 0
    %903 = vmatprep.subr.bf16.mxu0 0
    %904 = vmatpush1.bf16.msra.mxu0 0
    %905 = vmatprep.subr.bf16.mxu0 0
    %906 = vmatpush1.bf16.msra.mxu0 0
    %907 = vmatprep.subr.bf16.mxu0 0
    %908 = vmatpush1.bf16.msra.mxu0 0
    %909 = vmatprep.subr.bf16.mxu0 0
    %910 = vmatpush1.bf16.msra.mxu0 0
    %911 = vmatprep.subr.bf16.mxu0 0
    %912 = vmatpush1.bf16.msra.mxu0 0
    %913 = vmatprep.subr.bf16.mxu0 0
    %914 = vmatpush1.bf16.msra.mxu0 0
    %915 = vmatprep.subr.bf16.mxu0 0
    %916 = vmatpush1.bf16.msra.mxu0 0
    %917 = vmatprep.mubr.bf16.mxu0 0
    %918 = vmatmul.mubr.bf16.gmra.mrb[0].mxu0 %v454
    %v919 = vpop.f32.mrb[0].mxu0
    %v920 = vadd.f32 %v877, %v919
    %v921 = vpop.f32.mrb[0].mxu0
    %v922 = vpop.f32.mrb[0].mxu0
    %v923 = vadd.f32 %v877, %v922
    %v924 = vpop.f32.mrb[0].mxu0
    %925 = vmatprep.mubr.bf16.mxu0 0
    %926 = vmatmul.mubr.bf16.gmra.mrb[0].mxu0 %v457
    %v927 = vpop.f32.mrb[0].mxu0
    %v928 = vadd.f32 %v877, %v927
    %v929 = vpop.f32.mrb[0].mxu0
    %v930 = vpop.f32.mrb[0].mxu0
    %v931 = vadd.f32 %v877, %v930
    %v932 = vpop.f32.mrb[0].mxu0
    %933 = vmatprep.mubr.bf16.mxu0 0
    %934 = vmatmul.mubr.bf16.gmra.mrb[0].mxu0 %v460
    %v935 = vpop.f32.mrb[0].mxu0
    %v936 = vadd.f32 %v877, %v935
    %v937 = vpop.f32.mrb[0].mxu0
    %v938 = vpop.f32.mrb[0].mxu0
    %v939 = vadd.f32 %v877, %v938
    %v940 = vpop.f32.mrb[0].mxu0
    %941 = vmatprep.mubr.bf16.mxu0 0
    %942 = vmatmul.mubr.bf16.gmra.mrb[0].mxu0 %v463
    %v943 = vpop.f32.mrb[0].mxu0
    %v944 = vadd.f32 %v877, %v943
    %v945 = vpop.f32.mrb[0].mxu0
    %v946 = vpop.f32.mrb[0].mxu0
    %v947 = vadd.f32 %v877, %v946
    %v948 = vpop.f32.mrb[0].mxu0
    %949 = vmatprep.mubr.bf16.mxu0 0
    %950 = vmatmul.mubr.bf16.gmra.mrb[0].mxu0 %v466
    %v951 = vpop.f32.mrb[0].mxu0
    %v952 = vadd.f32 %v877, %v951
    %v953 = vpop.f32.mrb[0].mxu0
    %v954 = vpop.f32.mrb[0].mxu0
    %v955 = vadd.f32 %v877, %v954
    %v956 = vpop.f32.mrb[0].mxu0
    %957 = vmatprep.mubr.bf16.mxu0 0
    %958 = vmatmul.mubr.bf16.gmra.mrb[0].mxu0 %v469
    %v959 = vpop.f32.mrb[0].mxu0
    %v960 = vadd.f32 %v877, %v959
    %v961 = vpop.f32.mrb[0].mxu0
    %v962 = vpop.f32.mrb[0].mxu0
    %v963 = vadd.f32 %v877, %v962
    %v964 = vpop.f32.mrb[0].mxu0
    %965 = vmatprep.mubr.bf16.mxu0 0
    %966 = vmatmul.mubr.bf16.gmra.mrb[0].mxu0 %v472
    %v967 = vpop.f32.mrb[0].mxu0
    %v968 = vadd.f32 %v877, %v967
    %v969 = vpop.f32.mrb[0].mxu0
    %v970 = vpop.f32.mrb[0].mxu0
    %v971 = vadd.f32 %v877, %v970
    %v972 = vpop.f32.mrb[0].mxu0
    %973 = vmatprep.mubr.bf16.mxu0 0
    %974 = vmatmul.mubr.bf16.gmra.mrb[0].mxu0 %v475
    %v975 = vpop.f32.mrb[0].mxu0
    %v976 = vadd.f32 %v877, %v975
    %v977 = vpop.f32.mrb[0].mxu0
    %v978 = vpop.f32.mrb[0].mxu0
    %v979 = vadd.f32 %v877, %v978
    %v980 = vpop.f32.mrb[0].mxu0
    %981 = vmatprep.mubr.bf16.mxu0 0
    %982 = vmatmul.mubr.bf16.gmra.mrb[0].mxu0 %v478
    %v983 = vpop.f32.mrb[0].mxu0
    %v984 = vadd.f32 %v877, %v983
    %v985 = vpop.f32.mrb[0].mxu0
    %v986 = vpop.f32.mrb[0].mxu0
    %v987 = vadd.f32 %v877, %v986
    %v988 = vpop.f32.mrb[0].mxu0
    %989 = vdwg.mxu0
    %v990 = vsel %vm452, %v920, 0.0
    %991 = vadd.xlane.f32.xlu0 %v990
    %v992 = vpop.xlane.xlu0 %991
    %v993 = vsel %vm452, %v923, 0.0
    %994 = vadd.xlane.f32.xlu0 %v993
    %v995 = vpop.xlane.xlu0 %994
    %v996 = vsel %vm452, %v928, 0.0
    %997 = vadd.xlane.f32.xlu0 %v996
    %v998 = vpop.xlane.xlu0 %997
    %v999 = vsel %vm452, %v931, 0.0
    %1000 = vadd.xlane.f32.xlu0 %v999
    %v1001 = vpop.xlane.xlu0 %1000
    %v1002 = vsel %vm452, %v936, 0.0
    %1003 = vadd.xlane.f32.xlu0 %v1002
    %v1004 = vpop.xlane.xlu0 %1003
    %v1005 = vsel %vm452, %v939, 0.0
    %1006 = vadd.xlane.f32.xlu0 %v1005
    %v1007 = vpop.xlane.xlu0 %1006
    %v1008 = vsel %vm452, %v944, 0.0
    %1009 = vadd.xlane.f32.xlu0 %v1008
    %v1010 = vpop.xlane.xlu0 %1009
    %v1011 = vsel %vm452, %v947, 0.0
    %1012 = vadd.xlane.f32.xlu0 %v1011
    %v1013 = vpop.xlane.xlu0 %1012
    %v1014 = vsel %vm452, %v952, 0.0
    %1015 = vadd.xlane.f32.xlu0 %v1014
    %v1016 = vpop.xlane.xlu0 %1015
    %v1017 = vsel %vm452, %v955, 0.0
    %1018 = vadd.xlane.f32.xlu0 %v1017
    %v1019 = vpop.xlane.xlu0 %1018
    %v1020 = vsel %vm452, %v960, 0.0
    %1021 = vadd.xlane.f32.xlu0 %v1020
    %v1022 = vpop.xlane.xlu0 %1021
    %v1023 = vsel %vm452, %v963, 0.0
    %1024 = vadd.xlane.f32.xlu0 %v1023
    %v1025 = vpop.xlane.xlu0 %1024
    %v1026 = vsel %vm452, %v968, 0.0
    %1027 = vadd.xlane.f32.xlu0 %v1026
    %v1028 = vpop.xlane.xlu0 %1027
    %v1029 = vsel %vm452, %v971, 0.0
    %1030 = vadd.xlane.f32.xlu0 %v1029
    %v1031 = vpop.xlane.xlu0 %1030
    %v1032 = vsel %vm452, %v976, 0.0
    %1033 = vadd.xlane.f32.xlu0 %v1032
    %v1034 = vpop.xlane.xlu0 %1033
    %v1035 = vsel %vm452, %v979, 0.0
    %1036 = vadd.xlane.f32.xlu0 %v1035
    %v1037 = vpop.xlane.xlu0 %1036
    %v1038 = vsel %vm452, %v984, 0.0
    %1039 = vadd.xlane.f32.xlu0 %v1038
    %v1040 = vpop.xlane.xlu0 %1039
    %v1041 = vsel %vm452, %v987, 0.0
    %1042 = vadd.xlane.f32.xlu0 %v1041
    %v1043 = vpop.xlane.xlu0 %1042
    %v1044 = vmul.f32 %v992, %v641
    %v1045 = vmul.f32 %v995, %v641
    %v1046 = vmul.f32 %v998, %v641
    %v1047 = vmul.f32 %v1001, %v641
    %v1048 = vmul.f32 %v1004, %v641
    %v1049 = vmul.f32 %v1007, %v641
    %v1050 = vmul.f32 %v1010, %v641
    %v1051 = vmul.f32 %v1013, %v641
    %v1052 = vmul.f32 %v1016, %v641
    %v1053 = vmul.f32 %v1019, %v641
    %v1054 = vmul.f32 %v1022, %v641
    %v1055 = vmul.f32 %v1025, %v641
    %v1056 = vmul.f32 %v1028, %v641
    %v1057 = vmul.f32 %v1031, %v641
    %v1058 = vmul.f32 %v1034, %v641
    %v1059 = vmul.f32 %v1037, %v641
    %v1060 = vmul.f32 %v1040, %v641
    %v1061 = vmul.f32 %v1043, %v641
    %v1062 = vsub.f32 %v920, %v1044
    %v1063 = vsub.f32 %v923, %v1045
    %v1064 = vsub.f32 %v928, %v1046
    %v1065 = vsub.f32 %v931, %v1047
    %v1066 = vsub.f32 %v936, %v1048
    %v1067 = vsub.f32 %v939, %v1049
    %v1068 = vsub.f32 %v944, %v1050
    %v1069 = vsub.f32 %v947, %v1051
    %v1070 = vsub.f32 %v952, %v1052
    %v1071 = vsub.f32 %v955, %v1053
    %v1072 = vsub.f32 %v960, %v1054
    %v1073 = vsub.f32 %v963, %v1055
    %v1074 = vsub.f32 %v968, %v1056
    %v1075 = vsub.f32 %v971, %v1057
    %v1076 = vsub.f32 %v976, %v1058
    %v1077 = vsub.f32 %v979, %v1059
    %v1078 = vsub.f32 %v984, %v1060
    %v1079 = vsub.f32 %v987, %v1061
    %v1080 = vmul.f32 %v1062, %v1062
    %v1081 = vmul.f32 %v1063, %v1063
    %v1082 = vmul.f32 %v1064, %v1064
    %v1083 = vmul.f32 %v1065, %v1065
    %v1084 = vmul.f32 %v1066, %v1066
    %v1085 = vmul.f32 %v1067, %v1067
    %v1086 = vmul.f32 %v1068, %v1068
    %v1087 = vmul.f32 %v1069, %v1069
    %v1088 = vmul.f32 %v1070, %v1070
    %v1089 = vmul.f32 %v1071, %v1071
    %v1090 = vmul.f32 %v1072, %v1072
    %v1091 = vmul.f32 %v1073, %v1073
    %v1092 = vmul.f32 %v1074, %v1074
    %v1093 = vmul.f32 %v1075, %v1075
    %v1094 = vmul.f32 %v1076, %v1076
    %v1095 = vmul.f32 %v1077, %v1077
    %v1096 = vmul.f32 %v1078, %v1078
    %v1097 = vmul.f32 %v1079, %v1079
    %v1098 = vsel %vm452, %v1080, 0.0
    %1099 = vadd.xlane.f32.xlu0 %v1098
    %v1100 = vpop.xlane.xlu0 %1099
    %v1101 = vsel %vm452, %v1081, 0.0
    %1102 = vadd.xlane.f32.xlu0 %v1101
    %v1103 = vpop.xlane.xlu0 %1102
    %v1104 = vsel %vm452, %v1082, 0.0
    %1105 = vadd.xlane.f32.xlu0 %v1104
    %v1106 = vpop.xlane.xlu0 %1105
    %v1107 = vsel %vm452, %v1083, 0.0
    %1108 = vadd.xlane.f32.xlu0 %v1107
    %v1109 = vpop.xlane.xlu0 %1108
    %v1110 = vsel %vm452, %v1084, 0.0
    %1111 = vadd.xlane.f32.xlu0 %v1110
    %v1112 = vpop.xlane.xlu0 %1111
    %v1113 = vsel %vm452, %v1085, 0.0
    %1114 = vadd.xlane.f32.xlu0 %v1113
    %v1115 = vpop.xlane.xlu0 %1114
    %v1116 = vsel %vm452, %v1086, 0.0
    %1117 = vadd.xlane.f32.xlu0 %v1116
    %v1118 = vpop.xlane.xlu0 %1117
    %v1119 = vsel %vm452, %v1087, 0.0
    %1120 = vadd.xlane.f32.xlu0 %v1119
    %v1121 = vpop.xlane.xlu0 %1120
    %v1122 = vsel %vm452, %v1088, 0.0
    %1123 = vadd.xlane.f32.xlu0 %v1122
    %v1124 = vpop.xlane.xlu0 %1123
    %v1125 = vsel %vm452, %v1089, 0.0
    %1126 = vadd.xlane.f32.xlu0 %v1125
    %v1127 = vpop.xlane.xlu0 %1126
    %v1128 = vsel %vm452, %v1090, 0.0
    %1129 = vadd.xlane.f32.xlu0 %v1128
    %v1130 = vpop.xlane.xlu0 %1129
    %v1131 = vsel %vm452, %v1091, 0.0
    %1132 = vadd.xlane.f32.xlu0 %v1131
    %v1133 = vpop.xlane.xlu0 %1132
    %v1134 = vsel %vm452, %v1092, 0.0
    %1135 = vadd.xlane.f32.xlu0 %v1134
    %v1136 = vpop.xlane.xlu0 %1135
    %v1137 = vsel %vm452, %v1093, 0.0
    %1138 = vadd.xlane.f32.xlu0 %v1137
    %v1139 = vpop.xlane.xlu0 %1138
    %v1140 = vsel %vm452, %v1094, 0.0
    %1141 = vadd.xlane.f32.xlu0 %v1140
    %v1142 = vpop.xlane.xlu0 %1141
    %v1143 = vsel %vm452, %v1095, 0.0
    %1144 = vadd.xlane.f32.xlu0 %v1143
    %v1145 = vpop.xlane.xlu0 %1144
    %v1146 = vsel %vm452, %v1096, 0.0
    %1147 = vadd.xlane.f32.xlu0 %v1146
    %v1148 = vpop.xlane.xlu0 %1147
    %v1149 = vsel %vm452, %v1097, 0.0
    %1150 = vadd.xlane.f32.xlu0 %v1149
    %v1151 = vpop.xlane.xlu0 %1150
    %v1152 = vmul.f32 %v1100, %v641
    %v1153 = vmul.f32 %v1103, %v641
    %v1154 = vmul.f32 %v1106, %v641
    %v1155 = vmul.f32 %v1109, %v641
    %v1156 = vmul.f32 %v1112, %v641
    %v1157 = vmul.f32 %v1115, %v641
    %v1158 = vmul.f32 %v1118, %v641
    %v1159 = vmul.f32 %v1121, %v641
    %v1160 = vmul.f32 %v1124, %v641
    %v1161 = vmul.f32 %v1127, %v641
    %v1162 = vmul.f32 %v1130, %v641
    %v1163 = vmul.f32 %v1133, %v641
    %v1164 = vmul.f32 %v1136, %v641
    %v1165 = vmul.f32 %v1139, %v641
    %v1166 = vmul.f32 %v1142, %v641
    %v1167 = vmul.f32 %v1145, %v641
    %v1168 = vmul.f32 %v1148, %v641
    %v1169 = vmul.f32 %v1151, %v641
    %v1170 = vadd.f32 %v1152, 1e-06
    %v1171 = vadd.f32 %v1153, 1e-06
    %v1172 = vadd.f32 %v1154, 1e-06
    %v1173 = vadd.f32 %v1155, 1e-06
    %v1174 = vadd.f32 %v1156, 1e-06
    %v1175 = vadd.f32 %v1157, 1e-06
    %v1176 = vadd.f32 %v1158, 1e-06
    %v1177 = vadd.f32 %v1159, 1e-06
    %v1178 = vadd.f32 %v1160, 1e-06
    %v1179 = vadd.f32 %v1161, 1e-06
    %v1180 = vadd.f32 %v1162, 1e-06
    %v1181 = vadd.f32 %v1163, 1e-06
    %v1182 = vadd.f32 %v1164, 1e-06
    %v1183 = vadd.f32 %v1165, 1e-06
    %v1184 = vadd.f32 %v1166, 1e-06
    %v1185 = vadd.f32 %v1167, 1e-06
    %v1186 = vadd.f32 %v1168, 1e-06
    %v1187 = vadd.f32 %v1169, 1e-06
    %v1188 = vrsqrt.pop %v1170
    %v1189 = vrsqrt.pop %v1171
    %v1190 = vrsqrt.pop %v1172
    %v1191 = vrsqrt.pop %v1173
    %v1192 = vrsqrt.pop %v1174
    %v1193 = vrsqrt.pop %v1175
    %v1194 = vrsqrt.pop %v1176
    %v1195 = vrsqrt.pop %v1177
    %v1196 = vrsqrt.pop %v1178
    %v1197 = vrsqrt.pop %v1179
    %v1198 = vrsqrt.pop %v1180
    %v1199 = vrsqrt.pop %v1181
    %v1200 = vrsqrt.pop %v1182
    %v1201 = vrsqrt.pop %v1183
    %v1202 = vrsqrt.pop %v1184
    %v1203 = vrsqrt.pop %v1185
    %v1204 = vrsqrt.pop %v1186
    %v1205 = vrsqrt.pop %v1187
    %v1206 = vmul.f32 %v1062, %v1188
    %v1207 = vmul.f32 %v1063, %v1189
    %v1208 = vmul.f32 %v1064, %v1190
    %v1209 = vmul.f32 %v1065, %v1191
    %v1210 = vmul.f32 %v1066, %v1192
    %v1211 = vmul.f32 %v1067, %v1193
    %v1212 = vmul.f32 %v1068, %v1194
    %v1213 = vmul.f32 %v1069, %v1195
    %v1214 = vmul.f32 %v1070, %v1196
    %v1215 = vmul.f32 %v1071, %v1197
    %v1216 = vmul.f32 %v1072, %v1198
    %v1217 = vmul.f32 %v1073, %v1199
    %v1218 = vmul.f32 %v1074, %v1200
    %v1219 = vmul.f32 %v1075, %v1201
    %v1220 = vmul.f32 %v1076, %v1202
    %v1221 = vmul.f32 %v1077, %v1203
    %v1222 = vmul.f32 %v1078, %v1204
    %v1223 = vmul.f32 %v1079, %v1205
    %v1224 = vmul.f32 %v1206, %v826
    %v1225 = vmul.f32 %v1207, %v826
    %v1226 = vmul.f32 %v1208, %v826
    %v1227 = vmul.f32 %v1209, %v826
    %v1228 = vmul.f32 %v1210, %v826
    %v1229 = vmul.f32 %v1211, %v826
    %v1230 = vmul.f32 %v1212, %v826
    %v1231 = vmul.f32 %v1213, %v826
    %v1232 = vmul.f32 %v1214, %v826
    %v1233 = vmul.f32 %v1215, %v826
    %v1234 = vmul.f32 %v1216, %v826
    %v1235 = vmul.f32 %v1217, %v826
    %v1236 = vmul.f32 %v1218, %v826
    %v1237 = vmul.f32 %v1219, %v826
    %v1238 = vmul.f32 %v1220, %v826
    %v1239 = vmul.f32 %v1221, %v826
    %v1240 = vmul.f32 %v1222, %v826
    %v1241 = vmul.f32 %v1223, %v826
    %v1242 = vadd.f32 %v1224, %v850
    %v1243 = vadd.f32 %v1225, %v850
    %v1244 = vadd.f32 %v1226, %v850
    %v1245 = vadd.f32 %v1227, %v850
    %v1246 = vadd.f32 %v1228, %v850
    %v1247 = vadd.f32 %v1229, %v850
    %v1248 = vadd.f32 %v1230, %v850
    %v1249 = vadd.f32 %v1231, %v850
    %v1250 = vadd.f32 %v1232, %v850
    %v1251 = vadd.f32 %v1233, %v850
    %v1252 = vadd.f32 %v1234, %v850
    %v1253 = vadd.f32 %v1235, %v850
    %v1254 = vadd.f32 %v1236, %v850
    %v1255 = vadd.f32 %v1237, %v850
    %v1256 = vadd.f32 %v1238, %v850
    %v1257 = vadd.f32 %v1239, %v850
    %v1258 = vadd.f32 %v1240, %v850
    %v1259 = vadd.f32 %v1241, %v850
    %v1260 = vpack.c.bf16 %v853, %v852
    %v1261 = vpack.c.bf16 %v855, %v854
    %v1262 = vpack.c.bf16 %v857, %v856
    %v1263 = vpack.c.bf16 %v859, %v858
    %v1264 = vpack.c.bf16 %v861, %v860
    %v1265 = vpack.c.bf16 %v863, %v862
    %v1266 = vpack.c.bf16 %v865, %v864
    %v1267 = vpack.c.bf16 %v867, %v866
    %v1268 = vpack.c.bf16 %v869, %v868
    %v1269 = vld [vmem:[%s12] sm:$0xf]
    %v1270 = vld [vmem:[%s12 + $0x4] sm:$0xf]
    %v1271 = vld [vmem:[%s13] sm:$0x1]
    %v1273 = vlaneseq
    %v1274 = vshrl.u32 %v1273, 7
    %v1275 = vsub.s32 0, %v1274
    %v1276 = vrot.slane %v1271, %v1275
    %v1280 = vunpack.c.l.b16 %v1269
    %v1281 = vunpack.c.l.b16 %v1270
    %v1282 = vpack.c.b16 %v1281, %v1280
    %v1285 = vsel %vm452, %v1260, 0
    %v1288 = vsel %vm452, %v1261, 0
    %v1291 = vsel %vm452, %v1262, 0
    %v1294 = vsel %vm452, %v1263, 0
    %v1297 = vsel %vm452, %v1264, 0
    %v1300 = vsel %vm452, %v1265, 0
    %v1303 = vsel %vm452, %v1266, 0
    %v1306 = vsel %vm452, %v1267, 0
    %v1309 = vsel %vm452, %v1268, 0
    %1311 = vmatprep.subr.bf16.mxu0 0
    %1312 = vmatpush1.bf16.msra.mxu0 %v1282
    %1313 = vmatprep.subr.bf16.mxu0 0
    %1314 = vmatpush1.bf16.msra.mxu0 0
    %1315 = vmatprep.subr.bf16.mxu0 0
    %1316 = vmatpush1.bf16.msra.mxu0 0
    %1317 = vmatprep.subr.bf16.mxu0 0
    %1318 = vmatpush1.bf16.msra.mxu0 0
    %1319 = vmatprep.subr.bf16.mxu0 0
    %1320 = vmatpush1.bf16.msra.mxu0 0
    %1321 = vmatprep.subr.bf16.mxu0 0
    %1322 = vmatpush1.bf16.msra.mxu0 0
    %1323 = vmatprep.subr.bf16.mxu0 0
    %1324 = vmatpush1.bf16.msra.mxu0 0
    %1325 = vmatprep.subr.bf16.mxu0 0
    %1326 = vmatpush1.bf16.msra.mxu0 0
    %1327 = vmatprep.subr.bf16.mxu0 0
    %1328 = vmatpush1.bf16.msra.mxu0 0
    %1329 = vmatprep.subr.bf16.mxu0 0
    %1330 = vmatpush1.bf16.msra.mxu0 0
    %1331 = vmatprep.subr.bf16.mxu0 0
    %1332 = vmatpush1.bf16.msra.mxu0 0
    %1333 = vmatprep.subr.bf16.mxu0 0
    %1334 = vmatpush1.bf16.msra.mxu0 0
    %1335 = vmatprep.subr.bf16.mxu0 0
    %1336 = vmatpush1.bf16.msra.mxu0 0
    %1337 = vmatprep.subr.bf16.mxu0 0
    %1338 = vmatpush1.bf16.msra.mxu0 0
    %1339 = vmatprep.subr.bf16.mxu0 0
    %1340 = vmatpush1.bf16.msra.mxu0 0
    %1341 = vmatprep.subr.bf16.mxu0 0
    %1342 = vmatpush1.bf16.msra.mxu0 0
    %1343 = vmatprep.mubr.bf16.mxu0 0
    %1344 = vmatmul.mubr.bf16.gmra.mrb[0].mxu0 %v1285
    %v1345 = vpop.f32.mrb[0].mxu0
    %v1346 = vadd.f32 %v1276, %v1345
    %v1347 = vpop.f32.mrb[0].mxu0
    %v1348 = vpop.f32.mrb[0].mxu0
    %v1349 = vadd.f32 %v1276, %v1348
    %v1350 = vpop.f32.mrb[0].mxu0
    %1351 = vmatprep.mubr.bf16.mxu0 0
    %1352 = vmatmul.mubr.bf16.gmra.mrb[0].mxu0 %v1288
    %v1353 = vpop.f32.mrb[0].mxu0
    %v1354 = vadd.f32 %v1276, %v1353
    %v1355 = vpop.f32.mrb[0].mxu0
    %v1356 = vpop.f32.mrb[0].mxu0
    %v1357 = vadd.f32 %v1276, %v1356
    %v1358 = vpop.f32.mrb[0].mxu0
    %1359 = vmatprep.mubr.bf16.mxu0 0
    %1360 = vmatmul.mubr.bf16.gmra.mrb[0].mxu0 %v1291
    %v1361 = vpop.f32.mrb[0].mxu0
    %v1362 = vadd.f32 %v1276, %v1361
    %v1363 = vpop.f32.mrb[0].mxu0
    %v1364 = vpop.f32.mrb[0].mxu0
    %v1365 = vadd.f32 %v1276, %v1364
    %v1366 = vpop.f32.mrb[0].mxu0
    %1367 = vmatprep.mubr.bf16.mxu0 0
    %1368 = vmatmul.mubr.bf16.gmra.mrb[0].mxu0 %v1294
    %v1369 = vpop.f32.mrb[0].mxu0
    %v1370 = vadd.f32 %v1276, %v1369
    %v1371 = vpop.f32.mrb[0].mxu0
    %v1372 = vpop.f32.mrb[0].mxu0
    %v1373 = vadd.f32 %v1276, %v1372
    %v1374 = vpop.f32.mrb[0].mxu0
    %1375 = vmatprep.mubr.bf16.mxu0 0
    %1376 = vmatmul.mubr.bf16.gmra.mrb[0].mxu0 %v1297
    %v1377 = vpop.f32.mrb[0].mxu0
    %v1378 = vadd.f32 %v1276, %v1377
    %v1379 = vpop.f32.mrb[0].mxu0
    %v1380 = vpop.f32.mrb[0].mxu0
    %v1381 = vadd.f32 %v1276, %v1380
    %v1382 = vpop.f32.mrb[0].mxu0
    %1383 = vmatprep.mubr.bf16.mxu0 0
    %1384 = vmatmul.mubr.bf16.gmra.mrb[0].mxu0 %v1300
    %v1385 = vpop.f32.mrb[0].mxu0
    %v1386 = vadd.f32 %v1276, %v1385
    %v1387 = vpop.f32.mrb[0].mxu0
    %v1388 = vpop.f32.mrb[0].mxu0
    %v1389 = vadd.f32 %v1276, %v1388
    %v1390 = vpop.f32.mrb[0].mxu0
    %1391 = vmatprep.mubr.bf16.mxu0 0
    %1392 = vmatmul.mubr.bf16.gmra.mrb[0].mxu0 %v1303
    %v1393 = vpop.f32.mrb[0].mxu0
    %v1394 = vadd.f32 %v1276, %v1393
    %v1395 = vpop.f32.mrb[0].mxu0
    %v1396 = vpop.f32.mrb[0].mxu0
    %v1397 = vadd.f32 %v1276, %v1396
    %v1398 = vpop.f32.mrb[0].mxu0
    %1399 = vmatprep.mubr.bf16.mxu0 0
    %1400 = vmatmul.mubr.bf16.gmra.mrb[0].mxu0 %v1306
    %v1401 = vpop.f32.mrb[0].mxu0
    %v1402 = vadd.f32 %v1276, %v1401
    %v1403 = vpop.f32.mrb[0].mxu0
    %v1404 = vpop.f32.mrb[0].mxu0
    %v1405 = vadd.f32 %v1276, %v1404
    %v1406 = vpop.f32.mrb[0].mxu0
    %1407 = vmatprep.mubr.bf16.mxu0 0
    %1408 = vmatmul.mubr.bf16.gmra.mrb[0].mxu0 %v1309
    %v1409 = vpop.f32.mrb[0].mxu0
    %v1410 = vadd.f32 %v1276, %v1409
    %v1411 = vpop.f32.mrb[0].mxu0
    %v1412 = vpop.f32.mrb[0].mxu0
    %v1413 = vadd.f32 %v1276, %v1412
    %v1414 = vpop.f32.mrb[0].mxu0
    %1415 = vdwg.mxu0
    %v1416 = vld [vmem:[%s14] sm:$0xf]
    %v1417 = vld [vmem:[%s14 + $0x4] sm:$0xf]
    %v1418 = vld [vmem:[%s15] sm:$0x1]
    %v1420 = vlaneseq
    %v1421 = vshrl.u32 %v1420, 7
    %v1422 = vsub.s32 0, %v1421
    %v1423 = vrot.slane %v1418, %v1422
    %v1427 = vunpack.c.l.b16 %v1416
    %v1428 = vunpack.c.l.b16 %v1417
    %v1429 = vpack.c.b16 %v1428, %v1427
    %1431 = vmatprep.subr.bf16.mxu0 0
    %1432 = vmatpush1.bf16.msra.mxu0 %v1429
    %1433 = vmatprep.subr.bf16.mxu0 0
    %1434 = vmatpush1.bf16.msra.mxu0 0
    %1435 = vmatprep.subr.bf16.mxu0 0
    %1436 = vmatpush1.bf16.msra.mxu0 0
    %1437 = vmatprep.subr.bf16.mxu0 0
    %1438 = vmatpush1.bf16.msra.mxu0 0
    %1439 = vmatprep.subr.bf16.mxu0 0
    %1440 = vmatpush1.bf16.msra.mxu0 0
    %1441 = vmatprep.subr.bf16.mxu0 0
    %1442 = vmatpush1.bf16.msra.mxu0 0
    %1443 = vmatprep.subr.bf16.mxu0 0
    %1444 = vmatpush1.bf16.msra.mxu0 0
    %1445 = vmatprep.subr.bf16.mxu0 0
    %1446 = vmatpush1.bf16.msra.mxu0 0
    %1447 = vmatprep.subr.bf16.mxu0 0
    %1448 = vmatpush1.bf16.msra.mxu0 0
    %1449 = vmatprep.subr.bf16.mxu0 0
    %1450 = vmatpush1.bf16.msra.mxu0 0
    %1451 = vmatprep.subr.bf16.mxu0 0
    %1452 = vmatpush1.bf16.msra.mxu0 0
    %1453 = vmatprep.subr.bf16.mxu0 0
    %1454 = vmatpush1.bf16.msra.mxu0 0
    %1455 = vmatprep.subr.bf16.mxu0 0
    %1456 = vmatpush1.bf16.msra.mxu0 0
    %1457 = vmatprep.subr.bf16.mxu0 0
    %1458 = vmatpush1.bf16.msra.mxu0 0
    %1459 = vmatprep.subr.bf16.mxu0 0
    %1460 = vmatpush1.bf16.msra.mxu0 0
    %1461 = vmatprep.subr.bf16.mxu0 0
    %1462 = vmatpush1.bf16.msra.mxu0 0
    %1463 = vmatprep.mubr.bf16.mxu0 0
    %1464 = vmatmul.mubr.bf16.gmra.mrb[0].mxu0 %v1285
    %v1465 = vpop.f32.mrb[0].mxu0
    %v1466 = vadd.f32 %v1423, %v1465
    %v1467 = vpop.f32.mrb[0].mxu0
    %v1468 = vpop.f32.mrb[0].mxu0
    %v1469 = vadd.f32 %v1423, %v1468
    %v1470 = vpop.f32.mrb[0].mxu0
    %1471 = vmatprep.mubr.bf16.mxu0 0
    %1472 = vmatmul.mubr.bf16.gmra.mrb[0].mxu0 %v1288
    %v1473 = vpop.f32.mrb[0].mxu0
    %v1474 = vadd.f32 %v1423, %v1473
    %v1475 = vpop.f32.mrb[0].mxu0
    %v1476 = vpop.f32.mrb[0].mxu0
    %v1477 = vadd.f32 %v1423, %v1476
    %v1478 = vpop.f32.mrb[0].mxu0
    %1479 = vmatprep.mubr.bf16.mxu0 0
    %1480 = vmatmul.mubr.bf16.gmra.mrb[0].mxu0 %v1291
    %v1481 = vpop.f32.mrb[0].mxu0
    %v1482 = vadd.f32 %v1423, %v1481
    %v1483 = vpop.f32.mrb[0].mxu0
    %v1484 = vpop.f32.mrb[0].mxu0
    %v1485 = vadd.f32 %v1423, %v1484
    %v1486 = vpop.f32.mrb[0].mxu0
    %1487 = vmatprep.mubr.bf16.mxu0 0
    %1488 = vmatmul.mubr.bf16.gmra.mrb[0].mxu0 %v1294
    %v1489 = vpop.f32.mrb[0].mxu0
    %v1490 = vadd.f32 %v1423, %v1489
    %v1491 = vpop.f32.mrb[0].mxu0
    %v1492 = vpop.f32.mrb[0].mxu0
    %v1493 = vadd.f32 %v1423, %v1492
    %v1494 = vpop.f32.mrb[0].mxu0
    %1495 = vmatprep.mubr.bf16.mxu0 0
    %1496 = vmatmul.mubr.bf16.gmra.mrb[0].mxu0 %v1297
    %v1497 = vpop.f32.mrb[0].mxu0
    %v1498 = vadd.f32 %v1423, %v1497
    %v1499 = vpop.f32.mrb[0].mxu0
    %v1500 = vpop.f32.mrb[0].mxu0
    %v1501 = vadd.f32 %v1423, %v1500
    %v1502 = vpop.f32.mrb[0].mxu0
    %1503 = vmatprep.mubr.bf16.mxu0 0
    %1504 = vmatmul.mubr.bf16.gmra.mrb[0].mxu0 %v1300
    %v1505 = vpop.f32.mrb[0].mxu0
    %v1506 = vadd.f32 %v1423, %v1505
    %v1507 = vpop.f32.mrb[0].mxu0
    %v1508 = vpop.f32.mrb[0].mxu0
    %v1509 = vadd.f32 %v1423, %v1508
    %v1510 = vpop.f32.mrb[0].mxu0
    %1511 = vmatprep.mubr.bf16.mxu0 0
    %1512 = vmatmul.mubr.bf16.gmra.mrb[0].mxu0 %v1303
    %v1513 = vpop.f32.mrb[0].mxu0
    %v1514 = vadd.f32 %v1423, %v1513
    %v1515 = vpop.f32.mrb[0].mxu0
    %v1516 = vpop.f32.mrb[0].mxu0
    %v1517 = vadd.f32 %v1423, %v1516
    %v1518 = vpop.f32.mrb[0].mxu0
    %1519 = vmatprep.mubr.bf16.mxu0 0
    %1520 = vmatmul.mubr.bf16.gmra.mrb[0].mxu0 %v1306
    %v1521 = vpop.f32.mrb[0].mxu0
    %v1522 = vadd.f32 %v1423, %v1521
    %v1523 = vpop.f32.mrb[0].mxu0
    %v1524 = vpop.f32.mrb[0].mxu0
    %v1525 = vadd.f32 %v1423, %v1524
    %v1526 = vpop.f32.mrb[0].mxu0
    %1527 = vmatprep.mubr.bf16.mxu0 0
    %1528 = vmatmul.mubr.bf16.gmra.mrb[0].mxu0 %v1309
    %v1529 = vpop.f32.mrb[0].mxu0
    %v1530 = vadd.f32 %v1423, %v1529
    %v1531 = vpop.f32.mrb[0].mxu0
    %v1532 = vpop.f32.mrb[0].mxu0
    %v1533 = vadd.f32 %v1423, %v1532
    %v1534 = vpop.f32.mrb[0].mxu0
    %1535 = vdwg.mxu0
    %s1536 = scalar_lea.vmem %s14, 8
    %v1537 = vld [vmem:[%s1536] sm:$0xf]
    %v1538 = vld [vmem:[%s1536 + $0x4] sm:$0xf]
    %s1539 = scalar_lea.vmem %s15, 1
    %v1540 = vld [vmem:[%s1539] sm:$0x1]
    %v1542 = vlaneseq
    %v1543 = vshrl.u32 %v1542, 7
    %v1544 = vsub.s32 0, %v1543
    %v1545 = vrot.slane %v1540, %v1544
    %v1549 = vunpack.c.l.b16 %v1537
    %v1550 = vunpack.c.l.b16 %v1538
    %v1551 = vpack.c.b16 %v1550, %v1549
    %1553 = vmatprep.subr.bf16.mxu0 0
    %1554 = vmatpush1.bf16.msra.mxu0 %v1551
    %1555 = vmatprep.subr.bf16.mxu0 0
    %1556 = vmatpush1.bf16.msra.mxu0 0
    %1557 = vmatprep.subr.bf16.mxu0 0
    %1558 = vmatpush1.bf16.msra.mxu0 0
    %1559 = vmatprep.subr.bf16.mxu0 0
    %1560 = vmatpush1.bf16.msra.mxu0 0
    %1561 = vmatprep.subr.bf16.mxu0 0
    %1562 = vmatpush1.bf16.msra.mxu0 0
    %1563 = vmatprep.subr.bf16.mxu0 0
    %1564 = vmatpush1.bf16.msra.mxu0 0
    %1565 = vmatprep.subr.bf16.mxu0 0
    %1566 = vmatpush1.bf16.msra.mxu0 0
    %1567 = vmatprep.subr.bf16.mxu0 0
    %1568 = vmatpush1.bf16.msra.mxu0 0
    %1569 = vmatprep.subr.bf16.mxu0 0
    %1570 = vmatpush1.bf16.msra.mxu0 0
    %1571 = vmatprep.subr.bf16.mxu0 0
    %1572 = vmatpush1.bf16.msra.mxu0 0
    %1573 = vmatprep.subr.bf16.mxu0 0
    %1574 = vmatpush1.bf16.msra.mxu0 0
    %1575 = vmatprep.subr.bf16.mxu0 0
    %1576 = vmatpush1.bf16.msra.mxu0 0
    %1577 = vmatprep.subr.bf16.mxu0 0
    %1578 = vmatpush1.bf16.msra.mxu0 0
    %1579 = vmatprep.subr.bf16.mxu0 0
    %1580 = vmatpush1.bf16.msra.mxu0 0
    %1581 = vmatprep.subr.bf16.mxu0 0
    %1582 = vmatpush1.bf16.msra.mxu0 0
    %1583 = vmatprep.subr.bf16.mxu0 0
    %1584 = vmatpush1.bf16.msra.mxu0 0
    %1585 = vmatprep.mubr.bf16.mxu0 0
    %1586 = vmatmul.mubr.bf16.gmra.mrb[0].mxu0 %v1285
    %v1587 = vpop.f32.mrb[0].mxu0
    %v1588 = vadd.f32 %v1545, %v1587
    %v1589 = vpop.f32.mrb[0].mxu0
    %v1590 = vpop.f32.mrb[0].mxu0
    %v1591 = vadd.f32 %v1545, %v1590
    %v1592 = vpop.f32.mrb[0].mxu0
    %1593 = vmatprep.mubr.bf16.mxu0 0
    %1594 = vmatmul.mubr.bf16.gmra.mrb[0].mxu0 %v1288
    %v1595 = vpop.f32.mrb[0].mxu0
    %v1596 = vadd.f32 %v1545, %v1595
    %v1597 = vpop.f32.mrb[0].mxu0
    %v1598 = vpop.f32.mrb[0].mxu0
    %v1599 = vadd.f32 %v1545, %v1598
    %v1600 = vpop.f32.mrb[0].mxu0
    %1601 = vmatprep.mubr.bf16.mxu0 0
    %1602 = vmatmul.mubr.bf16.gmra.mrb[0].mxu0 %v1291
    %v1603 = vpop.f32.mrb[0].mxu0
    %v1604 = vadd.f32 %v1545, %v1603
    %v1605 = vpop.f32.mrb[0].mxu0
    %v1606 = vpop.f32.mrb[0].mxu0
    %v1607 = vadd.f32 %v1545, %v1606
    %v1608 = vpop.f32.mrb[0].mxu0
    %1609 = vmatprep.mubr.bf16.mxu0 0
    %1610 = vmatmul.mubr.bf16.gmra.mrb[0].mxu0 %v1294
    %v1611 = vpop.f32.mrb[0].mxu0
    %v1612 = vadd.f32 %v1545, %v1611
    %v1613 = vpop.f32.mrb[0].mxu0
    %v1614 = vpop.f32.mrb[0].mxu0
    %v1615 = vadd.f32 %v1545, %v1614
    %v1616 = vpop.f32.mrb[0].mxu0
    %1617 = vmatprep.mubr.bf16.mxu0 0
    %1618 = vmatmul.mubr.bf16.gmra.mrb[0].mxu0 %v1297
    %v1619 = vpop.f32.mrb[0].mxu0
    %v1620 = vadd.f32 %v1545, %v1619
    %v1621 = vpop.f32.mrb[0].mxu0
    %v1622 = vpop.f32.mrb[0].mxu0
    %v1623 = vadd.f32 %v1545, %v1622
    %v1624 = vpop.f32.mrb[0].mxu0
    %1625 = vmatprep.mubr.bf16.mxu0 0
    %1626 = vmatmul.mubr.bf16.gmra.mrb[0].mxu0 %v1300
    %v1627 = vpop.f32.mrb[0].mxu0
    %v1628 = vadd.f32 %v1545, %v1627
    %v1629 = vpop.f32.mrb[0].mxu0
    %v1630 = vpop.f32.mrb[0].mxu0
    %v1631 = vadd.f32 %v1545, %v1630
    %v1632 = vpop.f32.mrb[0].mxu0
    %1633 = vmatprep.mubr.bf16.mxu0 0
    %1634 = vmatmul.mubr.bf16.gmra.mrb[0].mxu0 %v1303
    %v1635 = vpop.f32.mrb[0].mxu0
    %v1636 = vadd.f32 %v1545, %v1635
    %v1637 = vpop.f32.mrb[0].mxu0
    %v1638 = vpop.f32.mrb[0].mxu0
    %v1639 = vadd.f32 %v1545, %v1638
    %v1640 = vpop.f32.mrb[0].mxu0
    %1641 = vmatprep.mubr.bf16.mxu0 0
    %1642 = vmatmul.mubr.bf16.gmra.mrb[0].mxu0 %v1306
    %v1643 = vpop.f32.mrb[0].mxu0
    %v1644 = vadd.f32 %v1545, %v1643
    %v1645 = vpop.f32.mrb[0].mxu0
    %v1646 = vpop.f32.mrb[0].mxu0
    %v1647 = vadd.f32 %v1545, %v1646
    %v1648 = vpop.f32.mrb[0].mxu0
    %1649 = vmatprep.mubr.bf16.mxu0 0
    %1650 = vmatmul.mubr.bf16.gmra.mrb[0].mxu0 %v1309
    %v1651 = vpop.f32.mrb[0].mxu0
    %v1652 = vadd.f32 %v1545, %v1651
    %v1653 = vpop.f32.mrb[0].mxu0
    %v1654 = vpop.f32.mrb[0].mxu0
    %v1655 = vadd.f32 %v1545, %v1654
    %v1656 = vpop.f32.mrb[0].mxu0
    %1657 = vdwg.mxu0
    %v1658 = vpack.c.bf16 %v852, %v852
    %v1659 = vld [vmem:[%s10] sm:$0xf]
    %v1660 = vld [vmem:[%s10 + $0x4] sm:$0xf]
    %v1661 = vld [vmem:[%s11] sm:$0x1]
    %v1664 = vunpack.c.l.b16 %v1659
    %v1665 = vunpack.c.l.b16 %v1660
    %v1666 = vpack.c.b16 %v1665, %v1664
    %v1669 = vsel %vm452, %v1658, 0
    %1671 = vmatprep.subr.bf16.mxu0 0
    %1672 = vmatpush1.bf16.msra.mxu0 %v1666
    %1673 = vmatprep.subr.bf16.mxu0 0
    %1674 = vmatpush1.bf16.msra.mxu0 0
    %1675 = vmatprep.subr.bf16.mxu0 0
    %1676 = vmatpush1.bf16.msra.mxu0 0
    %1677 = vmatprep.subr.bf16.mxu0 0
    %1678 = vmatpush1.bf16.msra.mxu0 0
    %1679 = vmatprep.subr.bf16.mxu0 0
    %1680 = vmatpush1.bf16.msra.mxu0 0
    %1681 = vmatprep.subr.bf16.mxu0 0
    %1682 = vmatpush1.bf16.msra.mxu0 0
    %1683 = vmatprep.subr.bf16.mxu0 0
    %1684 = vmatpush1.bf16.msra.mxu0 0
    %1685 = vmatprep.subr.bf16.mxu0 0
    %1686 = vmatpush1.bf16.msra.mxu0 0
    %1687 = vmatprep.subr.bf16.mxu0 0
    %1688 = vmatpush1.bf16.msra.mxu0 0
    %1689 = vmatprep.subr.bf16.mxu0 0
    %1690 = vmatpush1.bf16.msra.mxu0 0
    %1691 = vmatprep.subr.bf16.mxu0 0
    %1692 = vmatpush1.bf16.msra.mxu0 0
    %1693 = vmatprep.subr.bf16.mxu0 0
    %1694 = vmatpush1.bf16.msra.mxu0 0
    %1695 = vmatprep.subr.bf16.mxu0 0
    %1696 = vmatpush1.bf16.msra.mxu0 0
    %1697 = vmatprep.subr.bf16.mxu0 0
    %1698 = vmatpush1.bf16.msra.mxu0 0
    %1699 = vmatprep.subr.bf16.mxu0 0
    %1700 = vmatpush1.bf16.msra.mxu0 0
    %1701 = vmatprep.subr.bf16.mxu0 0
    %1702 = vmatpush1.bf16.msra.mxu0 0
    %1703 = vmatprep.mubr.bf16.mxu0 0
    %1704 = vmatmul.mubr.bf16.gmra.mrb[0].mxu0 %v1669
    %v1705 = vpop.f32.mrb[0].mxu0
    %v1706 = vadd.f32 %v1661, %v1705
    %v1707 = vpop.f32.mrb[0].mxu0
    %v1708 = vpop.f32.mrb[0].mxu0
    %v1709 = vpop.f32.mrb[0].mxu0
    %1710 = vdwg.mxu0
    %v1711 = vld [vmem:[%s16] sm:$0x1]
    %v1712 = vlaneseq
    %v1713 = vand.u32 %v1712, 127
    %vm1714 = vcmp.ge.s32.totalorder %v1713, 0
    %vm1715 = vcmp.lt.s32.totalorder %v1713, 8
    %vm1716 = vmand %vm1714, %vm1715
    %v1717 = vsel %vm1716, %v1706, 0.0
    %v1719 = vsel %vm452, %v1717, 0
    %v1722 = vsel %vm452, %v1346, 0
    %v1725 = vsel %vm452, %v1349, 0
    %v1728 = vsel %vm452, %v1354, 0
    %v1731 = vsel %vm452, %v1357, 0
    %v1734 = vsel %vm452, %v1362, 0
    %v1737 = vsel %vm452, %v1365, 0
    %v1740 = vsel %vm452, %v1370, 0
    %v1743 = vsel %vm452, %v1373, 0
    %v1746 = vsel %vm452, %v1378, 0
    %1748 = vmatprep.subr.mxu0 0.0
    %1749 = vmatpush1.xpose.msra.mxu0 %v1722
    %1750 = vmatprep.subr.mxu0 0.0
    %1751 = vmatpush1.xpose.msra.mxu0 %v1725
    %1752 = vmatprep.subr.mxu0 0.0
    %1753 = vmatpush1.xpose.msra.mxu0 %v1728
    %1754 = vmatprep.subr.mxu0 0.0
    %1755 = vmatpush1.xpose.msra.mxu0 %v1731
    %1756 = vmatprep.subr.mxu0 0.0
    %1757 = vmatpush1.xpose.msra.mxu0 %v1734
    %1758 = vmatprep.subr.mxu0 0.0
    %1759 = vmatpush1.xpose.msra.mxu0 %v1737
    %1760 = vmatprep.subr.mxu0 0.0
    %1761 = vmatpush1.xpose.msra.mxu0 %v1740
    %1762 = vmatprep.subr.mxu0 0.0
    %1763 = vmatpush1.xpose.msra.mxu0 %v1743
    %1764 = vmatprep.subr.mxu0 0.0
    %1765 = vmatpush1.xpose.msra.mxu0 %v1746
    %1766 = vmatprep.subr.mxu0 0.0
    %1767 = vmatpush1.xpose.msra.mxu0 0.0
    %1768 = vmatprep.subr.mxu0 0.0
    %1769 = vmatpush1.xpose.msra.mxu0 0.0
    %1770 = vmatprep.subr.mxu0 0.0
    %1771 = vmatpush1.xpose.msra.mxu0 0.0
    %1772 = vmatprep.subr.mxu0 0.0
    %1773 = vmatpush1.xpose.msra.mxu0 0.0
    %1774 = vmatprep.subr.mxu0 0.0
    %1775 = vmatpush1.xpose.msra.mxu0 0.0
    %1776 = vmatprep.subr.mxu0 0.0
    %1777 = vmatpush1.xpose.msra.mxu0 0.0
    %1778 = vmatprep.subr.mxu0 0.0
    %1779 = vmatpush1.xpose.msra.mxu0 0.0
    %1780 = vmatprep.subr.mxu0 0.0
    %1781 = vmatpush1.xpose.msra.mxu0 0.0
    %1782 = vmatprep.subr.mxu0 0.0
    %1783 = vmatpush1.xpose.msra.mxu0 0.0
    %1784 = vmatprep.subr.mxu0 0.0
    %1785 = vmatpush1.xpose.msra.mxu0 0.0
    %1786 = vmatprep.subr.mxu0 0.0
    %1787 = vmatpush1.xpose.msra.mxu0 0.0
    %1788 = vmatprep.subr.mxu0 0.0
    %1789 = vmatpush1.xpose.msra.mxu0 0.0
    %1790 = vmatprep.subr.mxu0 0.0
    %1791 = vmatpush1.xpose.msra.mxu0 0.0
    %1792 = vmatprep.subr.mxu0 0.0
    %1793 = vmatpush1.xpose.msra.mxu0 0.0
    %1794 = vmatprep.subr.mxu0 0.0
    %1795 = vmatpush1.xpose.msra.mxu0 0.0
    %1796 = vmatprep.subr.mxu0 0.0
    %1797 = vmatpush1.xpose.msra.mxu0 0.0
    %1798 = vmatprep.subr.mxu0 0.0
    %1799 = vmatpush1.xpose.msra.mxu0 0.0
    %1800 = vmatprep.subr.mxu0 0.0
    %1801 = vmatpush1.xpose.msra.mxu0 0.0
    %1802 = vmatprep.subr.mxu0 0.0
    %1803 = vmatpush1.xpose.msra.mxu0 0.0
    %1804 = vmatprep.subr.mxu0 0.0
    %1805 = vmatpush1.xpose.msra.mxu0 0.0
    %1806 = vmatprep.subr.mxu0 0.0
    %1807 = vmatpush1.xpose.msra.mxu0 0.0
    %1808 = vmatprep.subr.mxu0 0.0
    %1809 = vmatpush1.xpose.msra.mxu0 0.0
    %1810 = vmatprep.subr.mxu0 0.0
    %1811 = vmatpush1.xpose.msra.mxu0 0.0
    %1812 = vmatprep.mubr.f32.mxu0 0.0
    %1813 = vmatmul.mubr.f32.gmra.mrb[0].mxu0 %v1719
    %v1814 = vpop.f32.mrb[0].mxu0
    %v1815 = vadd.f32 0.0, %v1814
    %v1816 = vpop.f32.mrb[0].mxu0
    %1817 = vdwg.mxu0
    %vm1818 = vcmask 524288
    %v1819 = vsel %vm1818, %v1815, -inf
    %1820 = vmax.xlane.f32.xlu0 %v1819
    %v1821 = vpop.xlane.xlu0 %1820
    %v1822 = vsub.f32 %v1815, %v1821
    %v1823 = vmul.f32 %v1822, 1.442695
    %v1824 = vpow.pop %v1823
    %v1825 = vsel %vm1818, %v1824, 0.0
    %1826 = vadd.xlane.f32.xlu0 %v1825
    %v1827 = vpop.xlane.xlu0 %1826
    %v1828 = vrcp.pop %v1827
    %v1829 = vmul.f32 %v1824, %v1828
    %v1830 = vpack.c.bf16 %v1829, %v1829
    %v1831 = vpack.c.bf16 %v1469, %v1466
    %v1832 = vpack.c.bf16 %v1477, %v1474
    %v1833 = vpack.c.bf16 %v1485, %v1482
    %v1834 = vpack.c.bf16 %v1493, %v1490
    %v1835 = vpack.c.bf16 %v1498, %v1498
    %vm1836 = vcmp.ge.s32.totalorder %v1713, 8
    %vm1837 = vcmp.lt.s32.totalorder %v1713, 16
    %vm1838 = vmand %vm1836, %vm1837
    %v1839 = vsel %vm1838, %v1706, 0.0
    %v1841 = vsel %vm452, %v1839, 0
    %1843 = vmatprep.subr.mxu0 0.0
    %1844 = vmatpush1.xpose.msra.mxu0 %v1722
    %1845 = vmatprep.subr.mxu0 0.0
    %1846 = vmatpush1.xpose.msra.mxu0 %v1725
    %1847 = vmatprep.subr.mxu0 0.0
    %1848 = vmatpush1.xpose.msra.mxu0 %v1728
    %1849 = vmatprep.subr.mxu0 0.0
    %1850 = vmatpush1.xpose.msra.mxu0 %v1731
    %1851 = vmatprep.subr.mxu0 0.0
    %1852 = vmatpush1.xpose.msra.mxu0 %v1734
    %1853 = vmatprep.subr.mxu0 0.0
    %1854 = vmatpush1.xpose.msra.mxu0 %v1737
    %1855 = vmatprep.subr.mxu0 0.0
    %1856 = vmatpush1.xpose.msra.mxu0 %v1740
    %1857 = vmatprep.subr.mxu0 0.0
    %1858 = vmatpush1.xpose.msra.mxu0 %v1743
    %1859 = vmatprep.subr.mxu0 0.0
    %1860 = vmatpush1.xpose.msra.mxu0 %v1746
    %1861 = vmatprep.subr.mxu0 0.0
    %1862 = vmatpush1.xpose.msra.mxu0 0.0
    %1863 = vmatprep.subr.mxu0 0.0
    %1864 = vmatpush1.xpose.msra.mxu0 0.0
    %1865 = vmatprep.subr.mxu0 0.0
    %1866 = vmatpush1.xpose.msra.mxu0 0.0
    %1867 = vmatprep.subr.mxu0 0.0
    %1868 = vmatpush1.xpose.msra.mxu0 0.0
    %1869 = vmatprep.subr.mxu0 0.0
    %1870 = vmatpush1.xpose.msra.mxu0 0.0
    %1871 = vmatprep.subr.mxu0 0.0
    %1872 = vmatpush1.xpose.msra.mxu0 0.0
    %1873 = vmatprep.subr.mxu0 0.0
    %1874 = vmatpush1.xpose.msra.mxu0 0.0
    %1875 = vmatprep.subr.mxu0 0.0
    %1876 = vmatpush1.xpose.msra.mxu0 0.0
    %1877 = vmatprep.subr.mxu0 0.0
    %1878 = vmatpush1.xpose.msra.mxu0 0.0
    %1879 = vmatprep.subr.mxu0 0.0
    %1880 = vmatpush1.xpose.msra.mxu0 0.0
    %1881 = vmatprep.subr.mxu0 0.0
    %1882 = vmatpush1.xpose.msra.mxu0 0.0
    %1883 = vmatprep.subr.mxu0 0.0
    %1884 = vmatpush1.xpose.msra.mxu0 0.0
    %1885 = vmatprep.subr.mxu0 0.0
    %1886 = vmatpush1.xpose.msra.mxu0 0.0
    %1887 = vmatprep.subr.mxu0 0.0
    %1888 = vmatpush1.xpose.msra.mxu0 0.0
    %1889 = vmatprep.subr.mxu0 0.0
    %1890 = vmatpush1.xpose.msra.mxu0 0.0
    %1891 = vmatprep.subr.mxu0 0.0
    %1892 = vmatpush1.xpose.msra.mxu0 0.0
    %1893 = vmatprep.subr.mxu0 0.0
    %1894 = vmatpush1.xpose.msra.mxu0 0.0
    %1895 = vmatprep.subr.mxu0 0.0
    %1896 = vmatpush1.xpose.msra.mxu0 0.0
    %1897 = vmatprep.subr.mxu0 0.0
    %1898 = vmatpush1.xpose.msra.mxu0 0.0
    %1899 = vmatprep.subr.mxu0 0.0
    %1900 = vmatpush1.xpose.msra.mxu0 0.0
    %1901 = vmatprep.subr.mxu0 0.0
    %1902 = vmatpush1.xpose.msra.mxu0 0.0
    %1903 = vmatprep.subr.mxu0 0.0
    %1904 = vmatpush1.xpose.msra.mxu0 0.0
    %1905 = vmatprep.subr.mxu0 0.0
    %1906 = vmatpush1.xpose.msra.mxu0 0.0
    %1907 = vmatprep.mubr.f32.mxu0 0.0
    %1908 = vmatmul.mubr.f32.gmra.mrb[0].mxu0 %v1841
    %v1909 = vpop.f32.mrb[0].mxu0
    %v1910 = vadd.f32 0.0, %v1909
    %v1911 = vpop.f32.mrb[0].mxu0
    %1912 = vdwg.mxu0
    %v1913 = vsel %vm1818, %v1910, -inf
    %1914 = vmax.xlane.f32.xlu0 %v1913
    %v1915 = vpop.xlane.xlu0 %1914
    %v1916 = vsub.f32 %v1910, %v1915
    %v1917 = vmul.f32 %v1916, 1.442695
    %v1918 = vpow.pop %v1917
    %v1919 = vsel %vm1818, %v1918, 0.0
    %1920 = vadd.xlane.f32.xlu0 %v1919
    %v1921 = vpop.xlane.xlu0 %1920
    %v1922 = vrcp.pop %v1921
    %v1923 = vmul.f32 %v1918, %v1922
    %v1924 = vpack.c.bf16 %v1923, %v1923
    %v1925 = vpack.c.bf16 %v1591, %v1588
    %v1926 = vpack.c.bf16 %v1599, %v1596
    %v1927 = vpack.c.bf16 %v1607, %v1604
    %v1928 = vpack.c.bf16 %v1615, %v1612
    %v1929 = vpack.c.bf16 %v1620, %v1620
    %vm1930 = vcmask 531456
    %v1932 = vsel %vm1930, %v1924, 0
    %vm1934 = vcmask 1040384
    %v1935 = vsel 0, 4294967295, 65535
    %v1936 = vsel %vm1934, %v1935, 0
    %v1938 = vand.u32 %v1929, %v1936
    %1940 = vmatprep.subr.bf16.mxu0 0
    %1941 = vmatpush1.bf16.msra.mxu0 %v1925
    %1942 = vmatprep.subr.bf16.mxu0 0
    %1943 = vmatpush1.bf16.msra.mxu0 %v1926
    %1944 = vmatprep.subr.bf16.mxu0 0
    %1945 = vmatpush1.bf16.msra.mxu0 %v1927
    %1946 = vmatprep.subr.bf16.mxu0 0
    %1947 = vmatpush1.bf16.msra.mxu0 %v1928
    %1948 = vmatprep.subr.bf16.mxu0 0
    %1949 = vmatpush1.bf16.msra.mxu0 %v1938
    %1950 = vmatprep.subr.bf16.mxu0 0
    %1951 = vmatpush1.bf16.msra.mxu0 0
    %1952 = vmatprep.subr.bf16.mxu0 0
    %1953 = vmatpush1.bf16.msra.mxu0 0
    %1954 = vmatprep.subr.bf16.mxu0 0
    %1955 = vmatpush1.bf16.msra.mxu0 0
    %1956 = vmatprep.subr.bf16.mxu0 0
    %1957 = vmatpush1.bf16.msra.mxu0 0
    %1958 = vmatprep.subr.bf16.mxu0 0
    %1959 = vmatpush1.bf16.msra.mxu0 0
    %1960 = vmatprep.subr.bf16.mxu0 0
    %1961 = vmatpush1.bf16.msra.mxu0 0
    %1962 = vmatprep.subr.bf16.mxu0 0
    %1963 = vmatpush1.bf16.msra.mxu0 0
    %1964 = vmatprep.subr.bf16.mxu0 0
    %1965 = vmatpush1.bf16.msra.mxu0 0
    %1966 = vmatprep.subr.bf16.mxu0 0
    %1967 = vmatpush1.bf16.msra.mxu0 0
    %1968 = vmatprep.subr.bf16.mxu0 0
    %1969 = vmatpush1.bf16.msra.mxu0 0
    %1970 = vmatprep.subr.bf16.mxu0 0
    %1971 = vmatpush1.bf16.msra.mxu0 0
    %1972 = vmatprep.mubr.bf16.mxu0 0
    %1973 = vmatmul.mubr.bf16.gmra.mrb[0].mxu0 %v1932
    %v1974 = vpop.f32.mrb[0].mxu0
    %v1975 = vadd.f32 0.0, %v1974
    %v1976 = vpop.f32.mrb[0].mxu0
    %v1977 = vpop.f32.mrb[0].mxu0
    %v1978 = vpop.f32.mrb[0].mxu0
    %1979 = vdwg.mxu0
    %v1981 = vsel %vm1930, %v1830, 0
    %v1984 = vand.u32 %v1835, %v1936
    %1986 = vmatprep.subr.bf16.mxu0 0
    %1987 = vmatpush1.bf16.msra.mxu0 %v1831
    %1988 = vmatprep.subr.bf16.mxu0 0
    %1989 = vmatpush1.bf16.msra.mxu0 %v1832
    %1990 = vmatprep.subr.bf16.mxu0 0
    %1991 = vmatpush1.bf16.msra.mxu0 %v1833
    %1992 = vmatprep.subr.bf16.mxu0 0
    %1993 = vmatpush1.bf16.msra.mxu0 %v1834
    %1994 = vmatprep.subr.bf16.mxu0 0
    %1995 = vmatpush1.bf16.msra.mxu0 %v1984
    %1996 = vmatprep.subr.bf16.mxu0 0
    %1997 = vmatpush1.bf16.msra.mxu0 0
    %1998 = vmatprep.subr.bf16.mxu0 0
    %1999 = vmatpush1.bf16.msra.mxu0 0
    %2000 = vmatprep.subr.bf16.mxu0 0
    %2001 = vmatpush1.bf16.msra.mxu0 0
    %2002 = vmatprep.subr.bf16.mxu0 0
    %2003 = vmatpush1.bf16.msra.mxu0 0
    %2004 = vmatprep.subr.bf16.mxu0 0
    %2005 = vmatpush1.bf16.msra.mxu0 0
    %2006 = vmatprep.subr.bf16.mxu0 0
    %2007 = vmatpush1.bf16.msra.mxu0 0
    %2008 = vmatprep.subr.bf16.mxu0 0
    %2009 = vmatpush1.bf16.msra.mxu0 0
    %2010 = vmatprep.subr.bf16.mxu0 0
    %2011 = vmatpush1.bf16.msra.mxu0 0
    %2012 = vmatprep.subr.bf16.mxu0 0
    %2013 = vmatpush1.bf16.msra.mxu0 0
    %2014 = vmatprep.subr.bf16.mxu0 0
    %2015 = vmatpush1.bf16.msra.mxu0 0
    %2016 = vmatprep.subr.bf16.mxu0 0
    %2017 = vmatpush1.bf16.msra.mxu0 0
    %2018 = vmatprep.mubr.bf16.mxu0 0
    %2019 = vmatmul.mubr.bf16.gmra.mrb[0].mxu0 %v1981
    %v2020 = vpop.f32.mrb[0].mxu0
    %v2021 = vadd.f32 %v1975, %v2020
    %v2022 = vpop.f32.mrb[0].mxu0
    %v2023 = vpop.f32.mrb[0].mxu0
    %v2024 = vpop.f32.mrb[0].mxu0
    %2025 = vdwg.mxu0
    %v2026 = vadd.f32 %v2021, %v1711
    %v2027 = vpack.c.bf16 %v861, %v861
    %v2029 = vsel %vm452, %v2027, 0
    %2031 = vmatprep.subr.bf16.mxu0 0
    %2032 = vmatpush1.bf16.msra.mxu0 %v1666
    %2033 = vmatprep.subr.bf16.mxu0 0
    %2034 = vmatpush1.bf16.msra.mxu0 0
    %2035 = vmatprep.subr.bf16.mxu0 0
    %2036 = vmatpush1.bf16.msra.mxu0 0
    %2037 = vmatprep.subr.bf16.mxu0 0
    %2038 = vmatpush1.bf16.msra.mxu0 0
    %2039 = vmatprep.subr.bf16.mxu0 0
    %2040 = vmatpush1.bf16.msra.mxu0 0
    %2041 = vmatprep.subr.bf16.mxu0 0
    %2042 = vmatpush1.bf16.msra.mxu0 0
    %2043 = vmatprep.subr.bf16.mxu0 0
    %2044 = vmatpush1.bf16.msra.mxu0 0
    %2045 = vmatprep.subr.bf16.mxu0 0
    %2046 = vmatpush1.bf16.msra.mxu0 0
    %2047 = vmatprep.subr.bf16.mxu0 0
    %2048 = vmatpush1.bf16.msra.mxu0 0
    %2049 = vmatprep.subr.bf16.mxu0 0
    %2050 = vmatpush1.bf16.msra.mxu0 0
    %2051 = vmatprep.subr.bf16.mxu0 0
    %2052 = vmatpush1.bf16.msra.mxu0 0
    %2053 = vmatprep.subr.bf16.mxu0 0
    %2054 = vmatpush1.bf16.msra.mxu0 0
    %2055 = vmatprep.subr.bf16.mxu0 0
    %2056 = vmatpush1.bf16.msra.mxu0 0
    %2057 = vmatprep.subr.bf16.mxu0 0
    %2058 = vmatpush1.bf16.msra.mxu0 0
    %2059 = vmatprep.subr.bf16.mxu0 0
    %2060 = vmatpush1.bf16.msra.mxu0 0
    %2061 = vmatprep.subr.bf16.mxu0 0
    %2062 = vmatpush1.bf16.msra.mxu0 0
    %2063 = vmatprep.mubr.bf16.mxu0 0
    %2064 = vmatmul.mubr.bf16.gmra.mrb[0].mxu0 %v2029
    %v2065 = vpop.f32.mrb[0].mxu0
    %v2066 = vadd.f32 %v1661, %v2065
    %v2067 = vpop.f32.mrb[0].mxu0
    %v2068 = vpop.f32.mrb[0].mxu0
    %v2069 = vpop.f32.mrb[0].mxu0
    %2070 = vdwg.mxu0
    %v2071 = vsel %vm1716, %v2066, 0.0
    %v2073 = vsel %vm452, %v2071, 0
    %v2076 = vsel %vm452, %v1381, 0
    %v2079 = vsel %vm452, %v1386, 0
    %v2082 = vsel %vm452, %v1389, 0
    %v2085 = vsel %vm452, %v1394, 0
    %v2088 = vsel %vm452, %v1397, 0
    %v2091 = vsel %vm452, %v1402, 0
    %v2094 = vsel %vm452, %v1405, 0
    %v2097 = vsel %vm452, %v1410, 0
    %v2100 = vsel %vm452, %v1413, 0
    %2102 = vmatprep.subr.mxu0 0.0
    %2103 = vmatpush1.xpose.msra.mxu0 %v2076
    %2104 = vmatprep.subr.mxu0 0.0
    %2105 = vmatpush1.xpose.msra.mxu0 %v2079
    %2106 = vmatprep.subr.mxu0 0.0
    %2107 = vmatpush1.xpose.msra.mxu0 %v2082
    %2108 = vmatprep.subr.mxu0 0.0
    %2109 = vmatpush1.xpose.msra.mxu0 %v2085
    %2110 = vmatprep.subr.mxu0 0.0
    %2111 = vmatpush1.xpose.msra.mxu0 %v2088
    %2112 = vmatprep.subr.mxu0 0.0
    %2113 = vmatpush1.xpose.msra.mxu0 %v2091
    %2114 = vmatprep.subr.mxu0 0.0
    %2115 = vmatpush1.xpose.msra.mxu0 %v2094
    %2116 = vmatprep.subr.mxu0 0.0
    %2117 = vmatpush1.xpose.msra.mxu0 %v2097
    %2118 = vmatprep.subr.mxu0 0.0
    %2119 = vmatpush1.xpose.msra.mxu0 %v2100
    %2120 = vmatprep.subr.mxu0 0.0
    %2121 = vmatpush1.xpose.msra.mxu0 0.0
    %2122 = vmatprep.subr.mxu0 0.0
    %2123 = vmatpush1.xpose.msra.mxu0 0.0
    %2124 = vmatprep.subr.mxu0 0.0
    %2125 = vmatpush1.xpose.msra.mxu0 0.0
    %2126 = vmatprep.subr.mxu0 0.0
    %2127 = vmatpush1.xpose.msra.mxu0 0.0
    %2128 = vmatprep.subr.mxu0 0.0
    %2129 = vmatpush1.xpose.msra.mxu0 0.0
    %2130 = vmatprep.subr.mxu0 0.0
    %2131 = vmatpush1.xpose.msra.mxu0 0.0
    %2132 = vmatprep.subr.mxu0 0.0
    %2133 = vmatpush1.xpose.msra.mxu0 0.0
    %2134 = vmatprep.subr.mxu0 0.0
    %2135 = vmatpush1.xpose.msra.mxu0 0.0
    %2136 = vmatprep.subr.mxu0 0.0
    %2137 = vmatpush1.xpose.msra.mxu0 0.0
    %2138 = vmatprep.subr.mxu0 0.0
    %2139 = vmatpush1.xpose.msra.mxu0 0.0
    %2140 = vmatprep.subr.mxu0 0.0
    %2141 = vmatpush1.xpose.msra.mxu0 0.0
    %2142 = vmatprep.subr.mxu0 0.0
    %2143 = vmatpush1.xpose.msra.mxu0 0.0
    %2144 = vmatprep.subr.mxu0 0.0
    %2145 = vmatpush1.xpose.msra.mxu0 0.0
    %2146 = vmatprep.subr.mxu0 0.0
    %2147 = vmatpush1.xpose.msra.mxu0 0.0
    %2148 = vmatprep.subr.mxu0 0.0
    %2149 = vmatpush1.xpose.msra.mxu0 0.0
    %2150 = vmatprep.subr.mxu0 0.0
    %2151 = vmatpush1.xpose.msra.mxu0 0.0
    %2152 = vmatprep.subr.mxu0 0.0
    %2153 = vmatpush1.xpose.msra.mxu0 0.0
    %2154 = vmatprep.subr.mxu0 0.0
    %2155 = vmatpush1.xpose.msra.mxu0 0.0
    %2156 = vmatprep.subr.mxu0 0.0
    %2157 = vmatpush1.xpose.msra.mxu0 0.0
    %2158 = vmatprep.subr.mxu0 0.0
    %2159 = vmatpush1.xpose.msra.mxu0 0.0
    %2160 = vmatprep.subr.mxu0 0.0
    %2161 = vmatpush1.xpose.msra.mxu0 0.0
    %2162 = vmatprep.subr.mxu0 0.0
    %2163 = vmatpush1.xpose.msra.mxu0 0.0
    %2164 = vmatprep.subr.mxu0 0.0
    %2165 = vmatpush1.xpose.msra.mxu0 0.0
    %2166 = vmatprep.mubr.f32.mxu0 0.0
    %2167 = vmatmul.mubr.f32.gmra.mrb[0].mxu0 %v2073
    %v2168 = vpop.f32.mrb[0].mxu0
    %v2169 = vadd.f32 0.0, %v2168
    %v2170 = vpop.f32.mrb[0].mxu0
    %2171 = vdwg.mxu0
    %v2172 = vsel %vm1818, %v2169, -inf
    %2173 = vmax.xlane.f32.xlu0 %v2172
    %v2174 = vpop.xlane.xlu0 %2173
    %v2175 = vsub.f32 %v2169, %v2174
    %v2176 = vmul.f32 %v2175, 1.442695
    %v2177 = vpow.pop %v2176
    %v2178 = vsel %vm1818, %v2177, 0.0
    %2179 = vadd.xlane.f32.xlu0 %v2178
    %v2180 = vpop.xlane.xlu0 %2179
    %v2181 = vrcp.pop %v2180
    %v2182 = vmul.f32 %v2177, %v2181
    %v2183 = vpack.c.bf16 %v2182, %v2182
    %v2184 = vpack.c.bf16 %v1506, %v1501
    %v2185 = vpack.c.bf16 %v1514, %v1509
    %v2186 = vpack.c.bf16 %v1522, %v1517
    %v2187 = vpack.c.bf16 %v1530, %v1525
    %v2188 = vpack.c.bf16 %v1533, %v1533
    %v2189 = vsel %vm1838, %v2066, 0.0
    %v2191 = vsel %vm452, %v2189, 0
    %2193 = vmatprep.subr.mxu0 0.0
    %2194 = vmatpush1.xpose.msra.mxu0 %v2076
    %2195 = vmatprep.subr.mxu0 0.0
    %2196 = vmatpush1.xpose.msra.mxu0 %v2079
    %2197 = vmatprep.subr.mxu0 0.0
    %2198 = vmatpush1.xpose.msra.mxu0 %v2082
    %2199 = vmatprep.subr.mxu0 0.0
    %2200 = vmatpush1.xpose.msra.mxu0 %v2085
    %2201 = vmatprep.subr.mxu0 0.0
    %2202 = vmatpush1.xpose.msra.mxu0 %v2088
    %2203 = vmatprep.subr.mxu0 0.0
    %2204 = vmatpush1.xpose.msra.mxu0 %v2091
    %2205 = vmatprep.subr.mxu0 0.0
    %2206 = vmatpush1.xpose.msra.mxu0 %v2094
    %2207 = vmatprep.subr.mxu0 0.0
    %2208 = vmatpush1.xpose.msra.mxu0 %v2097
    %2209 = vmatprep.subr.mxu0 0.0
    %2210 = vmatpush1.xpose.msra.mxu0 %v2100
    %2211 = vmatprep.subr.mxu0 0.0
    %2212 = vmatpush1.xpose.msra.mxu0 0.0
    %2213 = vmatprep.subr.mxu0 0.0
    %2214 = vmatpush1.xpose.msra.mxu0 0.0
    %2215 = vmatprep.subr.mxu0 0.0
    %2216 = vmatpush1.xpose.msra.mxu0 0.0
    %2217 = vmatprep.subr.mxu0 0.0
    %2218 = vmatpush1.xpose.msra.mxu0 0.0
    %2219 = vmatprep.subr.mxu0 0.0
    %2220 = vmatpush1.xpose.msra.mxu0 0.0
    %2221 = vmatprep.subr.mxu0 0.0
    %2222 = vmatpush1.xpose.msra.mxu0 0.0
    %2223 = vmatprep.subr.mxu0 0.0
    %2224 = vmatpush1.xpose.msra.mxu0 0.0
    %2225 = vmatprep.subr.mxu0 0.0
    %2226 = vmatpush1.xpose.msra.mxu0 0.0
    %2227 = vmatprep.subr.mxu0 0.0
    %2228 = vmatpush1.xpose.msra.mxu0 0.0
    %2229 = vmatprep.subr.mxu0 0.0
    %2230 = vmatpush1.xpose.msra.mxu0 0.0
    %2231 = vmatprep.subr.mxu0 0.0
    %2232 = vmatpush1.xpose.msra.mxu0 0.0
    %2233 = vmatprep.subr.mxu0 0.0
    %2234 = vmatpush1.xpose.msra.mxu0 0.0
    %2235 = vmatprep.subr.mxu0 0.0
    %2236 = vmatpush1.xpose.msra.mxu0 0.0
    %2237 = vmatprep.subr.mxu0 0.0
    %2238 = vmatpush1.xpose.msra.mxu0 0.0
    %2239 = vmatprep.subr.mxu0 0.0
    %2240 = vmatpush1.xpose.msra.mxu0 0.0
    %2241 = vmatprep.subr.mxu0 0.0
    %2242 = vmatpush1.xpose.msra.mxu0 0.0
    %2243 = vmatprep.subr.mxu0 0.0
    %2244 = vmatpush1.xpose.msra.mxu0 0.0
    %2245 = vmatprep.subr.mxu0 0.0
    %2246 = vmatpush1.xpose.msra.mxu0 0.0
    %2247 = vmatprep.subr.mxu0 0.0
    %2248 = vmatpush1.xpose.msra.mxu0 0.0
    %2249 = vmatprep.subr.mxu0 0.0
    %2250 = vmatpush1.xpose.msra.mxu0 0.0
    %2251 = vmatprep.subr.mxu0 0.0
    %2252 = vmatpush1.xpose.msra.mxu0 0.0
    %2253 = vmatprep.subr.mxu0 0.0
    %2254 = vmatpush1.xpose.msra.mxu0 0.0
    %2255 = vmatprep.subr.mxu0 0.0
    %2256 = vmatpush1.xpose.msra.mxu0 0.0
    %2257 = vmatprep.mubr.f32.mxu0 0.0
    %2258 = vmatmul.mubr.f32.gmra.mrb[0].mxu0 %v2191
    %v2259 = vpop.f32.mrb[0].mxu0
    %v2260 = vadd.f32 0.0, %v2259
    %v2261 = vpop.f32.mrb[0].mxu0
    %2262 = vdwg.mxu0
    %v2263 = vsel %vm1818, %v2260, -inf
    %2264 = vmax.xlane.f32.xlu0 %v2263
    %v2265 = vpop.xlane.xlu0 %2264
    %v2266 = vsub.f32 %v2260, %v2265
    %v2267 = vmul.f32 %v2266, 1.442695
    %v2268 = vpow.pop %v2267
    %v2269 = vsel %vm1818, %v2268, 0.0
    %2270 = vadd.xlane.f32.xlu0 %v2269
    %v2271 = vpop.xlane.xlu0 %2270
    %v2272 = vrcp.pop %v2271
    %v2273 = vmul.f32 %v2268, %v2272
    %v2274 = vpack.c.bf16 %v2273, %v2273
    %v2275 = vpack.c.bf16 %v1628, %v1623
    %v2276 = vpack.c.bf16 %v1636, %v1631
    %v2277 = vpack.c.bf16 %v1644, %v1639
    %v2278 = vpack.c.bf16 %v1652, %v1647
    %v2279 = vpack.c.bf16 %v1655, %v1655
    %v2281 = vsel %vm1930, %v2274, 0
    %v2284 = vand.u32 %v2279, %v1936
    %2286 = vmatprep.subr.bf16.mxu0 0
    %2287 = vmatpush1.bf16.msra.mxu0 %v2275
    %2288 = vmatprep.subr.bf16.mxu0 0
    %2289 = vmatpush1.bf16.msra.mxu0 %v2276
    %2290 = vmatprep.subr.bf16.mxu0 0
    %2291 = vmatpush1.bf16.msra.mxu0 %v2277
    %2292 = vmatprep.subr.bf16.mxu0 0
    %2293 = vmatpush1.bf16.msra.mxu0 %v2278
    %2294 = vmatprep.subr.bf16.mxu0 0
    %2295 = vmatpush1.bf16.msra.mxu0 %v2284
    %2296 = vmatprep.subr.bf16.mxu0 0
    %2297 = vmatpush1.bf16.msra.mxu0 0
    %2298 = vmatprep.subr.bf16.mxu0 0
    %2299 = vmatpush1.bf16.msra.mxu0 0
    %2300 = vmatprep.subr.bf16.mxu0 0
    %2301 = vmatpush1.bf16.msra.mxu0 0
    %2302 = vmatprep.subr.bf16.mxu0 0
    %2303 = vmatpush1.bf16.msra.mxu0 0
    %2304 = vmatprep.subr.bf16.mxu0 0
    %2305 = vmatpush1.bf16.msra.mxu0 0
    %2306 = vmatprep.subr.bf16.mxu0 0
    %2307 = vmatpush1.bf16.msra.mxu0 0
    %2308 = vmatprep.subr.bf16.mxu0 0
    %2309 = vmatpush1.bf16.msra.mxu0 0
    %2310 = vmatprep.subr.bf16.mxu0 0
    %2311 = vmatpush1.bf16.msra.mxu0 0
    %2312 = vmatprep.subr.bf16.mxu0 0
    %2313 = vmatpush1.bf16.msra.mxu0 0
    %2314 = vmatprep.subr.bf16.mxu0 0
    %2315 = vmatpush1.bf16.msra.mxu0 0
    %2316 = vmatprep.subr.bf16.mxu0 0
    %2317 = vmatpush1.bf16.msra.mxu0 0
    %2318 = vmatprep.mubr.bf16.mxu0 0
    %2319 = vmatmul.mubr.bf16.gmra.mrb[0].mxu0 %v2281
    %v2320 = vpop.f32.mrb[0].mxu0
    %v2321 = vadd.f32 0.0, %v2320
    %v2322 = vpop.f32.mrb[0].mxu0
    %v2323 = vpop.f32.mrb[0].mxu0
    %v2324 = vpop.f32.mrb[0].mxu0
    %2325 = vdwg.mxu0
    %v2327 = vsel %vm1930, %v2183, 0
    %v2330 = vand.u32 %v2188, %v1936
    %2332 = vmatprep.subr.bf16.mxu0 0
    %2333 = vmatpush1.bf16.msra.mxu0 %v2184
    %2334 = vmatprep.subr.bf16.mxu0 0
    %2335 = vmatpush1.bf16.msra.mxu0 %v2185
    %2336 = vmatprep.subr.bf16.mxu0 0
    %2337 = vmatpush1.bf16.msra.mxu0 %v2186
    %2338 = vmatprep.subr.bf16.mxu0 0
    %2339 = vmatpush1.bf16.msra.mxu0 %v2187
    %2340 = vmatprep.subr.bf16.mxu0 0
    %2341 = vmatpush1.bf16.msra.mxu0 %v2330
    %2342 = vmatprep.subr.bf16.mxu0 0
    %2343 = vmatpush1.bf16.msra.mxu0 0
    %2344 = vmatprep.subr.bf16.mxu0 0
    %2345 = vmatpush1.bf16.msra.mxu0 0
    %2346 = vmatprep.subr.bf16.mxu0 0
    %2347 = vmatpush1.bf16.msra.mxu0 0
    %2348 = vmatprep.subr.bf16.mxu0 0
    %2349 = vmatpush1.bf16.msra.mxu0 0
    %2350 = vmatprep.subr.bf16.mxu0 0
    %2351 = vmatpush1.bf16.msra.mxu0 0
    %2352 = vmatprep.subr.bf16.mxu0 0
    %2353 = vmatpush1.bf16.msra.mxu0 0
    %2354 = vmatprep.subr.bf16.mxu0 0
    %2355 = vmatpush1.bf16.msra.mxu0 0
    %2356 = vmatprep.subr.bf16.mxu0 0
    %2357 = vmatpush1.bf16.msra.mxu0 0
    %2358 = vmatprep.subr.bf16.mxu0 0
    %2359 = vmatpush1.bf16.msra.mxu0 0
    %2360 = vmatprep.subr.bf16.mxu0 0
    %2361 = vmatpush1.bf16.msra.mxu0 0
    %2362 = vmatprep.subr.bf16.mxu0 0
    %2363 = vmatpush1.bf16.msra.mxu0 0
    %2364 = vmatprep.mubr.bf16.mxu0 0
    %2365 = vmatmul.mubr.bf16.gmra.mrb[0].mxu0 %v2327
    %v2366 = vpop.f32.mrb[0].mxu0
    %v2367 = vadd.f32 %v2321, %v2366
    %v2368 = vpop.f32.mrb[0].mxu0
    %v2369 = vpop.f32.mrb[0].mxu0
    %v2370 = vpop.f32.mrb[0].mxu0
    %2371 = vdwg.mxu0
    %v2372 = vadd.f32 %v2367, %v1711
    %v2373 = vadd.f32 %v2026, %v1242
    %v2374 = vadd.f32 %v2372, %v1251
    %v2375 = vpack.c.bf16 %v1243, %v1242
    %v2376 = vpack.c.bf16 %v1245, %v1244
    %v2377 = vpack.c.bf16 %v1247, %v1246
    %v2378 = vpack.c.bf16 %v1249, %v1248
    %v2379 = vpack.c.bf16 %v1251, %v1250
    %v2380 = vpack.c.bf16 %v1253, %v1252
    %v2381 = vpack.c.bf16 %v1255, %v1254
    %v2382 = vpack.c.bf16 %v1257, %v1256
    %v2383 = vpack.c.bf16 %v1259, %v1258
    %v2384 = vld [vmem:[%s19] sm:$0xf]
    %v2385 = vld [vmem:[%s19 + $0x4] sm:$0xf]
    %v2386 = vld [vmem:[%s20] sm:$0x1]
    %v2388 = vlaneseq
    %v2389 = vshrl.u32 %v2388, 7
    %v2390 = vsub.s32 0, %v2389
    %v2391 = vrot.slane %v2386, %v2390
    %v2395 = vunpack.c.l.b16 %v2384
    %v2396 = vunpack.c.l.b16 %v2385
    %v2397 = vpack.c.b16 %v2396, %v2395
    %v2400 = vsel %vm452, %v2375, 0
    %v2403 = vsel %vm452, %v2376, 0
    %v2406 = vsel %vm452, %v2377, 0
    %v2409 = vsel %vm452, %v2378, 0
    %v2412 = vsel %vm452, %v2379, 0
    %v2415 = vsel %vm452, %v2380, 0
    %v2418 = vsel %vm452, %v2381, 0
    %v2421 = vsel %vm452, %v2382, 0
    %v2424 = vsel %vm452, %v2383, 0
    %2426 = vmatprep.subr.bf16.mxu0 0
    %2427 = vmatpush1.bf16.msra.mxu0 %v2397
    %2428 = vmatprep.subr.bf16.mxu0 0
    %2429 = vmatpush1.bf16.msra.mxu0 0
    %2430 = vmatprep.subr.bf16.mxu0 0
    %2431 = vmatpush1.bf16.msra.mxu0 0
    %2432 = vmatprep.subr.bf16.mxu0 0
    %2433 = vmatpush1.bf16.msra.mxu0 0
    %2434 = vmatprep.subr.bf16.mxu0 0
    %2435 = vmatpush1.bf16.msra.mxu0 0
    %2436 = vmatprep.subr.bf16.mxu0 0
    %2437 = vmatpush1.bf16.msra.mxu0 0
    %2438 = vmatprep.subr.bf16.mxu0 0
    %2439 = vmatpush1.bf16.msra.mxu0 0
    %2440 = vmatprep.subr.bf16.mxu0 0
    %2441 = vmatpush1.bf16.msra.mxu0 0
    %2442 = vmatprep.subr.bf16.mxu0 0
    %2443 = vmatpush1.bf16.msra.mxu0 0
    %2444 = vmatprep.subr.bf16.mxu0 0
    %2445 = vmatpush1.bf16.msra.mxu0 0
    %2446 = vmatprep.subr.bf16.mxu0 0
    %2447 = vmatpush1.bf16.msra.mxu0 0
    %2448 = vmatprep.subr.bf16.mxu0 0
    %2449 = vmatpush1.bf16.msra.mxu0 0
    %2450 = vmatprep.subr.bf16.mxu0 0
    %2451 = vmatpush1.bf16.msra.mxu0 0
    %2452 = vmatprep.subr.bf16.mxu0 0
    %2453 = vmatpush1.bf16.msra.mxu0 0
    %2454 = vmatprep.subr.bf16.mxu0 0
    %2455 = vmatpush1.bf16.msra.mxu0 0
    %2456 = vmatprep.subr.bf16.mxu0 0
    %2457 = vmatpush1.bf16.msra.mxu0 0
    %2458 = vmatprep.mubr.bf16.mxu0 0
    %2459 = vmatmul.mubr.bf16.gmra.mrb[0].mxu0 %v2400
    %v2460 = vpop.f32.mrb[0].mxu0
    %v2461 = vadd.f32 %v2391, %v2460
    %v2462 = vpop.f32.mrb[0].mxu0
    %v2463 = vpop.f32.mrb[0].mxu0
    %v2464 = vadd.f32 %v2391, %v2463
    %v2465 = vpop.f32.mrb[0].mxu0
    %2466 = vmatprep.mubr.bf16.mxu0 0
    %2467 = vmatmul.mubr.bf16.gmra.mrb[0].mxu0 %v2403
    %v2468 = vpop.f32.mrb[0].mxu0
    %v2469 = vadd.f32 %v2391, %v2468
    %v2470 = vpop.f32.mrb[0].mxu0
    %v2471 = vpop.f32.mrb[0].mxu0
    %v2472 = vadd.f32 %v2391, %v2471
    %v2473 = vpop.f32.mrb[0].mxu0
    %2474 = vmatprep.mubr.bf16.mxu0 0
    %2475 = vmatmul.mubr.bf16.gmra.mrb[0].mxu0 %v2406
    %v2476 = vpop.f32.mrb[0].mxu0
    %v2477 = vadd.f32 %v2391, %v2476
    %v2478 = vpop.f32.mrb[0].mxu0
    %v2479 = vpop.f32.mrb[0].mxu0
    %v2480 = vadd.f32 %v2391, %v2479
    %v2481 = vpop.f32.mrb[0].mxu0
    %2482 = vmatprep.mubr.bf16.mxu0 0
    %2483 = vmatmul.mubr.bf16.gmra.mrb[0].mxu0 %v2409
    %v2484 = vpop.f32.mrb[0].mxu0
    %v2485 = vadd.f32 %v2391, %v2484
    %v2486 = vpop.f32.mrb[0].mxu0
    %v2487 = vpop.f32.mrb[0].mxu0
    %v2488 = vadd.f32 %v2391, %v2487
    %v2489 = vpop.f32.mrb[0].mxu0
    %2490 = vmatprep.mubr.bf16.mxu0 0
    %2491 = vmatmul.mubr.bf16.gmra.mrb[0].mxu0 %v2412
    %v2492 = vpop.f32.mrb[0].mxu0
    %v2493 = vadd.f32 %v2391, %v2492
    %v2494 = vpop.f32.mrb[0].mxu0
    %v2495 = vpop.f32.mrb[0].mxu0
    %v2496 = vadd.f32 %v2391, %v2495
    %v2497 = vpop.f32.mrb[0].mxu0
    %2498 = vmatprep.mubr.bf16.mxu0 0
    %2499 = vmatmul.mubr.bf16.gmra.mrb[0].mxu0 %v2415
    %v2500 = vpop.f32.mrb[0].mxu0
    %v2501 = vadd.f32 %v2391, %v2500
    %v2502 = vpop.f32.mrb[0].mxu0
    %v2503 = vpop.f32.mrb[0].mxu0
    %v2504 = vadd.f32 %v2391, %v2503
    %v2505 = vpop.f32.mrb[0].mxu0
    %2506 = vmatprep.mubr.bf16.mxu0 0
    %2507 = vmatmul.mubr.bf16.gmra.mrb[0].mxu0 %v2418
    %v2508 = vpop.f32.mrb[0].mxu0
    %v2509 = vadd.f32 %v2391, %v2508
    %v2510 = vpop.f32.mrb[0].mxu0
    %v2511 = vpop.f32.mrb[0].mxu0
    %v2512 = vadd.f32 %v2391, %v2511
    %v2513 = vpop.f32.mrb[0].mxu0
    %2514 = vmatprep.mubr.bf16.mxu0 0
    %2515 = vmatmul.mubr.bf16.gmra.mrb[0].mxu0 %v2421
    %v2516 = vpop.f32.mrb[0].mxu0
    %v2517 = vadd.f32 %v2391, %v2516
    %v2518 = vpop.f32.mrb[0].mxu0
    %v2519 = vpop.f32.mrb[0].mxu0
    %v2520 = vadd.f32 %v2391, %v2519
    %v2521 = vpop.f32.mrb[0].mxu0
    %2522 = vmatprep.mubr.bf16.mxu0 0
    %2523 = vmatmul.mubr.bf16.gmra.mrb[0].mxu0 %v2424
    %v2524 = vpop.f32.mrb[0].mxu0
    %v2525 = vadd.f32 %v2391, %v2524
    %v2526 = vpop.f32.mrb[0].mxu0
    %v2527 = vpop.f32.mrb[0].mxu0
    %v2528 = vadd.f32 %v2391, %v2527
    %v2529 = vpop.f32.mrb[0].mxu0
    %2530 = vdwg.mxu0
    %v2531 = vld [vmem:[%s21] sm:$0xf]
    %v2532 = vld [vmem:[%s21 + $0x4] sm:$0xf]
    %v2533 = vld [vmem:[%s22] sm:$0x1]
    %v2535 = vlaneseq
    %v2536 = vshrl.u32 %v2535, 7
    %v2537 = vsub.s32 0, %v2536
    %v2538 = vrot.slane %v2533, %v2537
    %v2542 = vunpack.c.l.b16 %v2531
    %v2543 = vunpack.c.l.b16 %v2532
    %v2544 = vpack.c.b16 %v2543, %v2542
    %2546 = vmatprep.subr.bf16.mxu0 0
    %2547 = vmatpush1.bf16.msra.mxu0 %v2544
    %2548 = vmatprep.subr.bf16.mxu0 0
    %2549 = vmatpush1.bf16.msra.mxu0 0
    %2550 = vmatprep.subr.bf16.mxu0 0
    %2551 = vmatpush1.bf16.msra.mxu0 0
    %2552 = vmatprep.subr.bf16.mxu0 0
    %2553 = vmatpush1.bf16.msra.mxu0 0
    %2554 = vmatprep.subr.bf16.mxu0 0
    %2555 = vmatpush1.bf16.msra.mxu0 0
    %2556 = vmatprep.subr.bf16.mxu0 0
    %2557 = vmatpush1.bf16.msra.mxu0 0
    %2558 = vmatprep.subr.bf16.mxu0 0
    %2559 = vmatpush1.bf16.msra.mxu0 0
    %2560 = vmatprep.subr.bf16.mxu0 0
    %2561 = vmatpush1.bf16.msra.mxu0 0
    %2562 = vmatprep.subr.bf16.mxu0 0
    %2563 = vmatpush1.bf16.msra.mxu0 0
    %2564 = vmatprep.subr.bf16.mxu0 0
    %2565 = vmatpush1.bf16.msra.mxu0 0
    %2566 = vmatprep.subr.bf16.mxu0 0
    %2567 = vmatpush1.bf16.msra.mxu0 0
    %2568 = vmatprep.subr.bf16.mxu0 0
    %2569 = vmatpush1.bf16.msra.mxu0 0
    %2570 = vmatprep.subr.bf16.mxu0 0
    %2571 = vmatpush1.bf16.msra.mxu0 0
    %2572 = vmatprep.subr.bf16.mxu0 0
    %2573 = vmatpush1.bf16.msra.mxu0 0
    %2574 = vmatprep.subr.bf16.mxu0 0
    %2575 = vmatpush1.bf16.msra.mxu0 0
    %2576 = vmatprep.subr.bf16.mxu0 0
    %2577 = vmatpush1.bf16.msra.mxu0 0
    %2578 = vmatprep.mubr.bf16.mxu0 0
    %2579 = vmatmul.mubr.bf16.gmra.mrb[0].mxu0 %v2400
    %v2580 = vpop.f32.mrb[0].mxu0
    %v2581 = vadd.f32 %v2538, %v2580
    %v2582 = vpop.f32.mrb[0].mxu0
    %v2583 = vpop.f32.mrb[0].mxu0
    %v2584 = vadd.f32 %v2538, %v2583
    %v2585 = vpop.f32.mrb[0].mxu0
    %2586 = vmatprep.mubr.bf16.mxu0 0
    %2587 = vmatmul.mubr.bf16.gmra.mrb[0].mxu0 %v2403
    %v2588 = vpop.f32.mrb[0].mxu0
    %v2589 = vadd.f32 %v2538, %v2588
    %v2590 = vpop.f32.mrb[0].mxu0
    %v2591 = vpop.f32.mrb[0].mxu0
    %v2592 = vadd.f32 %v2538, %v2591
    %v2593 = vpop.f32.mrb[0].mxu0
    %2594 = vmatprep.mubr.bf16.mxu0 0
    %2595 = vmatmul.mubr.bf16.gmra.mrb[0].mxu0 %v2406
    %v2596 = vpop.f32.mrb[0].mxu0
    %v2597 = vadd.f32 %v2538, %v2596
    %v2598 = vpop.f32.mrb[0].mxu0
    %v2599 = vpop.f32.mrb[0].mxu0
    %v2600 = vadd.f32 %v2538, %v2599
    %v2601 = vpop.f32.mrb[0].mxu0
    %2602 = vmatprep.mubr.bf16.mxu0 0
    %2603 = vmatmul.mubr.bf16.gmra.mrb[0].mxu0 %v2409
    %v2604 = vpop.f32.mrb[0].mxu0
    %v2605 = vadd.f32 %v2538, %v2604
    %v2606 = vpop.f32.mrb[0].mxu0
    %v2607 = vpop.f32.mrb[0].mxu0
    %v2608 = vadd.f32 %v2538, %v2607
    %v2609 = vpop.f32.mrb[0].mxu0
    %2610 = vmatprep.mubr.bf16.mxu0 0
    %2611 = vmatmul.mubr.bf16.gmra.mrb[0].mxu0 %v2412
    %v2612 = vpop.f32.mrb[0].mxu0
    %v2613 = vadd.f32 %v2538, %v2612
    %v2614 = vpop.f32.mrb[0].mxu0
    %v2615 = vpop.f32.mrb[0].mxu0
    %v2616 = vadd.f32 %v2538, %v2615
    %v2617 = vpop.f32.mrb[0].mxu0
    %2618 = vmatprep.mubr.bf16.mxu0 0
    %2619 = vmatmul.mubr.bf16.gmra.mrb[0].mxu0 %v2415
    %v2620 = vpop.f32.mrb[0].mxu0
    %v2621 = vadd.f32 %v2538, %v2620
    %v2622 = vpop.f32.mrb[0].mxu0
    %v2623 = vpop.f32.mrb[0].mxu0
    %v2624 = vadd.f32 %v2538, %v2623
    %v2625 = vpop.f32.mrb[0].mxu0
    %2626 = vmatprep.mubr.bf16.mxu0 0
    %2627 = vmatmul.mubr.bf16.gmra.mrb[0].mxu0 %v2418
    %v2628 = vpop.f32.mrb[0].mxu0
    %v2629 = vadd.f32 %v2538, %v2628
    %v2630 = vpop.f32.mrb[0].mxu0
    %v2631 = vpop.f32.mrb[0].mxu0
    %v2632 = vadd.f32 %v2538, %v2631
    %v2633 = vpop.f32.mrb[0].mxu0
    %2634 = vmatprep.mubr.bf16.mxu0 0
    %2635 = vmatmul.mubr.bf16.gmra.mrb[0].mxu0 %v2421
    %v2636 = vpop.f32.mrb[0].mxu0
    %v2637 = vadd.f32 %v2538, %v2636
    %v2638 = vpop.f32.mrb[0].mxu0
    %v2639 = vpop.f32.mrb[0].mxu0
    %v2640 = vadd.f32 %v2538, %v2639
    %v2641 = vpop.f32.mrb[0].mxu0
    %2642 = vmatprep.mubr.bf16.mxu0 0
    %2643 = vmatmul.mubr.bf16.gmra.mrb[0].mxu0 %v2424
    %v2644 = vpop.f32.mrb[0].mxu0
    %v2645 = vadd.f32 %v2538, %v2644
    %v2646 = vpop.f32.mrb[0].mxu0
    %v2647 = vpop.f32.mrb[0].mxu0
    %v2648 = vadd.f32 %v2538, %v2647
    %v2649 = vpop.f32.mrb[0].mxu0
    %2650 = vdwg.mxu0
    %s2651 = scalar_lea.vmem %s21, 8
    %v2652 = vld [vmem:[%s2651] sm:$0xf]
    %v2653 = vld [vmem:[%s2651 + $0x4] sm:$0xf]
    %s2654 = scalar_lea.vmem %s22, 1
    %v2655 = vld [vmem:[%s2654] sm:$0x1]
    %v2657 = vlaneseq
    %v2658 = vshrl.u32 %v2657, 7
    %v2659 = vsub.s32 0, %v2658
    %v2660 = vrot.slane %v2655, %v2659
    %v2664 = vunpack.c.l.b16 %v2652
    %v2665 = vunpack.c.l.b16 %v2653
    %v2666 = vpack.c.b16 %v2665, %v2664
    %2668 = vmatprep.subr.bf16.mxu0 0
    %2669 = vmatpush1.bf16.msra.mxu0 %v2666
    %2670 = vmatprep.subr.bf16.mxu0 0
    %2671 = vmatpush1.bf16.msra.mxu0 0
    %2672 = vmatprep.subr.bf16.mxu0 0
    %2673 = vmatpush1.bf16.msra.mxu0 0
    %2674 = vmatprep.subr.bf16.mxu0 0
    %2675 = vmatpush1.bf16.msra.mxu0 0
    %2676 = vmatprep.subr.bf16.mxu0 0
    %2677 = vmatpush1.bf16.msra.mxu0 0
    %2678 = vmatprep.subr.bf16.mxu0 0
    %2679 = vmatpush1.bf16.msra.mxu0 0
    %2680 = vmatprep.subr.bf16.mxu0 0
    %2681 = vmatpush1.bf16.msra.mxu0 0
    %2682 = vmatprep.subr.bf16.mxu0 0
    %2683 = vmatpush1.bf16.msra.mxu0 0
    %2684 = vmatprep.subr.bf16.mxu0 0
    %2685 = vmatpush1.bf16.msra.mxu0 0
    %2686 = vmatprep.subr.bf16.mxu0 0
    %2687 = vmatpush1.bf16.msra.mxu0 0
    %2688 = vmatprep.subr.bf16.mxu0 0
    %2689 = vmatpush1.bf16.msra.mxu0 0
    %2690 = vmatprep.subr.bf16.mxu0 0
    %2691 = vmatpush1.bf16.msra.mxu0 0
    %2692 = vmatprep.subr.bf16.mxu0 0
    %2693 = vmatpush1.bf16.msra.mxu0 0
    %2694 = vmatprep.subr.bf16.mxu0 0
    %2695 = vmatpush1.bf16.msra.mxu0 0
    %2696 = vmatprep.subr.bf16.mxu0 0
    %2697 = vmatpush1.bf16.msra.mxu0 0
    %2698 = vmatprep.subr.bf16.mxu0 0
    %2699 = vmatpush1.bf16.msra.mxu0 0
    %2700 = vmatprep.mubr.bf16.mxu0 0
    %2701 = vmatmul.mubr.bf16.gmra.mrb[0].mxu0 %v2400
    %v2702 = vpop.f32.mrb[0].mxu0
    %v2703 = vadd.f32 %v2660, %v2702
    %v2704 = vpop.f32.mrb[0].mxu0
    %v2705 = vpop.f32.mrb[0].mxu0
    %v2706 = vadd.f32 %v2660, %v2705
    %v2707 = vpop.f32.mrb[0].mxu0
    %2708 = vmatprep.mubr.bf16.mxu0 0
    %2709 = vmatmul.mubr.bf16.gmra.mrb[0].mxu0 %v2403
    %v2710 = vpop.f32.mrb[0].mxu0
    %v2711 = vadd.f32 %v2660, %v2710
    %v2712 = vpop.f32.mrb[0].mxu0
    %v2713 = vpop.f32.mrb[0].mxu0
    %v2714 = vadd.f32 %v2660, %v2713
    %v2715 = vpop.f32.mrb[0].mxu0
    %2716 = vmatprep.mubr.bf16.mxu0 0
    %2717 = vmatmul.mubr.bf16.gmra.mrb[0].mxu0 %v2406
    %v2718 = vpop.f32.mrb[0].mxu0
    %v2719 = vadd.f32 %v2660, %v2718
    %v2720 = vpop.f32.mrb[0].mxu0
    %v2721 = vpop.f32.mrb[0].mxu0
    %v2722 = vadd.f32 %v2660, %v2721
    %v2723 = vpop.f32.mrb[0].mxu0
    %2724 = vmatprep.mubr.bf16.mxu0 0
    %2725 = vmatmul.mubr.bf16.gmra.mrb[0].mxu0 %v2409
    %v2726 = vpop.f32.mrb[0].mxu0
    %v2727 = vadd.f32 %v2660, %v2726
    %v2728 = vpop.f32.mrb[0].mxu0
    %v2729 = vpop.f32.mrb[0].mxu0
    %v2730 = vadd.f32 %v2660, %v2729
    %v2731 = vpop.f32.mrb[0].mxu0
    %2732 = vmatprep.mubr.bf16.mxu0 0
    %2733 = vmatmul.mubr.bf16.gmra.mrb[0].mxu0 %v2412
    %v2734 = vpop.f32.mrb[0].mxu0
    %v2735 = vadd.f32 %v2660, %v2734
    %v2736 = vpop.f32.mrb[0].mxu0
    %v2737 = vpop.f32.mrb[0].mxu0
    %v2738 = vadd.f32 %v2660, %v2737
    %v2739 = vpop.f32.mrb[0].mxu0
    %2740 = vmatprep.mubr.bf16.mxu0 0
    %2741 = vmatmul.mubr.bf16.gmra.mrb[0].mxu0 %v2415
    %v2742 = vpop.f32.mrb[0].mxu0
    %v2743 = vadd.f32 %v2660, %v2742
    %v2744 = vpop.f32.mrb[0].mxu0
    %v2745 = vpop.f32.mrb[0].mxu0
    %v2746 = vadd.f32 %v2660, %v2745
    %v2747 = vpop.f32.mrb[0].mxu0
    %2748 = vmatprep.mubr.bf16.mxu0 0
    %2749 = vmatmul.mubr.bf16.gmra.mrb[0].mxu0 %v2418
    %v2750 = vpop.f32.mrb[0].mxu0
    %v2751 = vadd.f32 %v2660, %v2750
    %v2752 = vpop.f32.mrb[0].mxu0
    %v2753 = vpop.f32.mrb[0].mxu0
    %v2754 = vadd.f32 %v2660, %v2753
    %v2755 = vpop.f32.mrb[0].mxu0
    %2756 = vmatprep.mubr.bf16.mxu0 0
    %2757 = vmatmul.mubr.bf16.gmra.mrb[0].mxu0 %v2421
    %v2758 = vpop.f32.mrb[0].mxu0
    %v2759 = vadd.f32 %v2660, %v2758
    %v2760 = vpop.f32.mrb[0].mxu0
    %v2761 = vpop.f32.mrb[0].mxu0
    %v2762 = vadd.f32 %v2660, %v2761
    %v2763 = vpop.f32.mrb[0].mxu0
    %2764 = vmatprep.mubr.bf16.mxu0 0
    %2765 = vmatmul.mubr.bf16.gmra.mrb[0].mxu0 %v2424
    %v2766 = vpop.f32.mrb[0].mxu0
    %v2767 = vadd.f32 %v2660, %v2766
    %v2768 = vpop.f32.mrb[0].mxu0
    %v2769 = vpop.f32.mrb[0].mxu0
    %v2770 = vadd.f32 %v2660, %v2769
    %v2771 = vpop.f32.mrb[0].mxu0
    %2772 = vdwg.mxu0
    %v2773 = vpack.c.bf16 %v1242, %v1242
    %v2774 = vld [vmem:[%s17] sm:$0xf]
    %v2775 = vld [vmem:[%s17 + $0x4] sm:$0xf]
    %v2776 = vld [vmem:[%s18] sm:$0x1]
    %v2779 = vunpack.c.l.b16 %v2774
    %v2780 = vunpack.c.l.b16 %v2775
    %v2781 = vpack.c.b16 %v2780, %v2779
    %v2784 = vsel %vm452, %v2773, 0
    %2786 = vmatprep.subr.bf16.mxu0 0
    %2787 = vmatpush1.bf16.msra.mxu0 %v2781
    %2788 = vmatprep.subr.bf16.mxu0 0
    %2789 = vmatpush1.bf16.msra.mxu0 0
    %2790 = vmatprep.subr.bf16.mxu0 0
    %2791 = vmatpush1.bf16.msra.mxu0 0
    %2792 = vmatprep.subr.bf16.mxu0 0
    %2793 = vmatpush1.bf16.msra.mxu0 0
    %2794 = vmatprep.subr.bf16.mxu0 0
    %2795 = vmatpush1.bf16.msra.mxu0 0
    %2796 = vmatprep.subr.bf16.mxu0 0
    %2797 = vmatpush1.bf16.msra.mxu0 0
    %2798 = vmatprep.subr.bf16.mxu0 0
    %2799 = vmatpush1.bf16.msra.mxu0 0
    %2800 = vmatprep.subr.bf16.mxu0 0
    %2801 = vmatpush1.bf16.msra.mxu0 0
    %2802 = vmatprep.subr.bf16.mxu0 0
    %2803 = vmatpush1.bf16.msra.mxu0 0
    %2804 = vmatprep.subr.bf16.mxu0 0
    %2805 = vmatpush1.bf16.msra.mxu0 0
    %2806 = vmatprep.subr.bf16.mxu0 0
    %2807 = vmatpush1.bf16.msra.mxu0 0
    %2808 = vmatprep.subr.bf16.mxu0 0
    %2809 = vmatpush1.bf16.msra.mxu0 0
    %2810 = vmatprep.subr.bf16.mxu0 0
    %2811 = vmatpush1.bf16.msra.mxu0 0
    %2812 = vmatprep.subr.bf16.mxu0 0
    %2813 = vmatpush1.bf16.msra.mxu0 0
    %2814 = vmatprep.subr.bf16.mxu0 0
    %2815 = vmatpush1.bf16.msra.mxu0 0
    %2816 = vmatprep.subr.bf16.mxu0 0
    %2817 = vmatpush1.bf16.msra.mxu0 0
    %2818 = vmatprep.mubr.bf16.mxu0 0
    %2819 = vmatmul.mubr.bf16.gmra.mrb[0].mxu0 %v2784
    %v2820 = vpop.f32.mrb[0].mxu0
    %v2821 = vadd.f32 %v2776, %v2820
    %v2822 = vpop.f32.mrb[0].mxu0
    %v2823 = vpop.f32.mrb[0].mxu0
    %v2824 = vpop.f32.mrb[0].mxu0
    %2825 = vdwg.mxu0
    %v2826 = vld [vmem:[%s23] sm:$0x1]
    %v2827 = vsel %vm1716, %v2821, 0.0
    %v2829 = vsel %vm452, %v2827, 0
    %v2832 = vsel %vm452, %v2461, 0
    %v2835 = vsel %vm452, %v2464, 0
    %v2838 = vsel %vm452, %v2469, 0
    %v2841 = vsel %vm452, %v2472, 0
    %v2844 = vsel %vm452, %v2477, 0
    %v2847 = vsel %vm452, %v2480, 0
    %v2850 = vsel %vm452, %v2485, 0
    %v2853 = vsel %vm452, %v2488, 0
    %v2856 = vsel %vm452, %v2493, 0
    %2858 = vmatprep.subr.mxu0 0.0
    %2859 = vmatpush1.xpose.msra.mxu0 %v2832
    %2860 = vmatprep.subr.mxu0 0.0
    %2861 = vmatpush1.xpose.msra.mxu0 %v2835
    %2862 = vmatprep.subr.mxu0 0.0
    %2863 = vmatpush1.xpose.msra.mxu0 %v2838
    %2864 = vmatprep.subr.mxu0 0.0
    %2865 = vmatpush1.xpose.msra.mxu0 %v2841
    %2866 = vmatprep.subr.mxu0 0.0
    %2867 = vmatpush1.xpose.msra.mxu0 %v2844
    %2868 = vmatprep.subr.mxu0 0.0
    %2869 = vmatpush1.xpose.msra.mxu0 %v2847
    %2870 = vmatprep.subr.mxu0 0.0
    %2871 = vmatpush1.xpose.msra.mxu0 %v2850
    %2872 = vmatprep.subr.mxu0 0.0
    %2873 = vmatpush1.xpose.msra.mxu0 %v2853
    %2874 = vmatprep.subr.mxu0 0.0
    %2875 = vmatpush1.xpose.msra.mxu0 %v2856
    %2876 = vmatprep.subr.mxu0 0.0
    %2877 = vmatpush1.xpose.msra.mxu0 0.0
    %2878 = vmatprep.subr.mxu0 0.0
    %2879 = vmatpush1.xpose.msra.mxu0 0.0
    %2880 = vmatprep.subr.mxu0 0.0
    %2881 = vmatpush1.xpose.msra.mxu0 0.0
    %2882 = vmatprep.subr.mxu0 0.0
    %2883 = vmatpush1.xpose.msra.mxu0 0.0
    %2884 = vmatprep.subr.mxu0 0.0
    %2885 = vmatpush1.xpose.msra.mxu0 0.0
    %2886 = vmatprep.subr.mxu0 0.0
    %2887 = vmatpush1.xpose.msra.mxu0 0.0
    %2888 = vmatprep.subr.mxu0 0.0
    %2889 = vmatpush1.xpose.msra.mxu0 0.0
    %2890 = vmatprep.subr.mxu0 0.0
    %2891 = vmatpush1.xpose.msra.mxu0 0.0
    %2892 = vmatprep.subr.mxu0 0.0
    %2893 = vmatpush1.xpose.msra.mxu0 0.0
    %2894 = vmatprep.subr.mxu0 0.0
    %2895 = vmatpush1.xpose.msra.mxu0 0.0
    %2896 = vmatprep.subr.mxu0 0.0
    %2897 = vmatpush1.xpose.msra.mxu0 0.0
    %2898 = vmatprep.subr.mxu0 0.0
    %2899 = vmatpush1.xpose.msra.mxu0 0.0
    %2900 = vmatprep.subr.mxu0 0.0
    %2901 = vmatpush1.xpose.msra.mxu0 0.0
    %2902 = vmatprep.subr.mxu0 0.0
    %2903 = vmatpush1.xpose.msra.mxu0 0.0
    %2904 = vmatprep.subr.mxu0 0.0
    %2905 = vmatpush1.xpose.msra.mxu0 0.0
    %2906 = vmatprep.subr.mxu0 0.0
    %2907 = vmatpush1.xpose.msra.mxu0 0.0
    %2908 = vmatprep.subr.mxu0 0.0
    %2909 = vmatpush1.xpose.msra.mxu0 0.0
    %2910 = vmatprep.subr.mxu0 0.0
    %2911 = vmatpush1.xpose.msra.mxu0 0.0
    %2912 = vmatprep.subr.mxu0 0.0
    %2913 = vmatpush1.xpose.msra.mxu0 0.0
    %2914 = vmatprep.subr.mxu0 0.0
    %2915 = vmatpush1.xpose.msra.mxu0 0.0
    %2916 = vmatprep.subr.mxu0 0.0
    %2917 = vmatpush1.xpose.msra.mxu0 0.0
    %2918 = vmatprep.subr.mxu0 0.0
    %2919 = vmatpush1.xpose.msra.mxu0 0.0
    %2920 = vmatprep.subr.mxu0 0.0
    %2921 = vmatpush1.xpose.msra.mxu0 0.0
    %2922 = vmatprep.mubr.f32.mxu0 0.0
    %2923 = vmatmul.mubr.f32.gmra.mrb[0].mxu0 %v2829
    %v2924 = vpop.f32.mrb[0].mxu0
    %v2925 = vadd.f32 0.0, %v2924
    %v2926 = vpop.f32.mrb[0].mxu0
    %2927 = vdwg.mxu0
    %v2928 = vsel %vm1818, %v2925, -inf
    %2929 = vmax.xlane.f32.xlu0 %v2928
    %v2930 = vpop.xlane.xlu0 %2929
    %v2931 = vsub.f32 %v2925, %v2930
    %v2932 = vmul.f32 %v2931, 1.442695
    %v2933 = vpow.pop %v2932
    %v2934 = vsel %vm1818, %v2933, 0.0
    %2935 = vadd.xlane.f32.xlu0 %v2934
    %v2936 = vpop.xlane.xlu0 %2935
    %v2937 = vrcp.pop %v2936
    %v2938 = vmul.f32 %v2933, %v2937
    %v2939 = vpack.c.bf16 %v2938, %v2938
    %v2940 = vpack.c.bf16 %v2584, %v2581
    %v2941 = vpack.c.bf16 %v2592, %v2589
    %v2942 = vpack.c.bf16 %v2600, %v2597
    %v2943 = vpack.c.bf16 %v2608, %v2605
    %v2944 = vpack.c.bf16 %v2613, %v2613
    %v2945 = vsel %vm1838, %v2821, 0.0
    %v2947 = vsel %vm452, %v2945, 0
    %2949 = vmatprep.subr.mxu0 0.0
    %2950 = vmatpush1.xpose.msra.mxu0 %v2832
    %2951 = vmatprep.subr.mxu0 0.0
    %2952 = vmatpush1.xpose.msra.mxu0 %v2835
    %2953 = vmatprep.subr.mxu0 0.0
    %2954 = vmatpush1.xpose.msra.mxu0 %v2838
    %2955 = vmatprep.subr.mxu0 0.0
    %2956 = vmatpush1.xpose.msra.mxu0 %v2841
    %2957 = vmatprep.subr.mxu0 0.0
    %2958 = vmatpush1.xpose.msra.mxu0 %v2844
    %2959 = vmatprep.subr.mxu0 0.0
    %2960 = vmatpush1.xpose.msra.mxu0 %v2847
    %2961 = vmatprep.subr.mxu0 0.0
    %2962 = vmatpush1.xpose.msra.mxu0 %v2850
    %2963 = vmatprep.subr.mxu0 0.0
    %2964 = vmatpush1.xpose.msra.mxu0 %v2853
    %2965 = vmatprep.subr.mxu0 0.0
    %2966 = vmatpush1.xpose.msra.mxu0 %v2856
    %2967 = vmatprep.subr.mxu0 0.0
    %2968 = vmatpush1.xpose.msra.mxu0 0.0
    %2969 = vmatprep.subr.mxu0 0.0
    %2970 = vmatpush1.xpose.msra.mxu0 0.0
    %2971 = vmatprep.subr.mxu0 0.0
    %2972 = vmatpush1.xpose.msra.mxu0 0.0
    %2973 = vmatprep.subr.mxu0 0.0
    %2974 = vmatpush1.xpose.msra.mxu0 0.0
    %2975 = vmatprep.subr.mxu0 0.0
    %2976 = vmatpush1.xpose.msra.mxu0 0.0
    %2977 = vmatprep.subr.mxu0 0.0
    %2978 = vmatpush1.xpose.msra.mxu0 0.0
    %2979 = vmatprep.subr.mxu0 0.0
    %2980 = vmatpush1.xpose.msra.mxu0 0.0
    %2981 = vmatprep.subr.mxu0 0.0
    %2982 = vmatpush1.xpose.msra.mxu0 0.0
    %2983 = vmatprep.subr.mxu0 0.0
    %2984 = vmatpush1.xpose.msra.mxu0 0.0
    %2985 = vmatprep.subr.mxu0 0.0
    %2986 = vmatpush1.xpose.msra.mxu0 0.0
    %2987 = vmatprep.subr.mxu0 0.0
    %2988 = vmatpush1.xpose.msra.mxu0 0.0
    %2989 = vmatprep.subr.mxu0 0.0
    %2990 = vmatpush1.xpose.msra.mxu0 0.0
    %2991 = vmatprep.subr.mxu0 0.0
    %2992 = vmatpush1.xpose.msra.mxu0 0.0
    %2993 = vmatprep.subr.mxu0 0.0
    %2994 = vmatpush1.xpose.msra.mxu0 0.0
    %2995 = vmatprep.subr.mxu0 0.0
    %2996 = vmatpush1.xpose.msra.mxu0 0.0
    %2997 = vmatprep.subr.mxu0 0.0
    %2998 = vmatpush1.xpose.msra.mxu0 0.0
    %2999 = vmatprep.subr.mxu0 0.0
    %3000 = vmatpush1.xpose.msra.mxu0 0.0
    %3001 = vmatprep.subr.mxu0 0.0
    %3002 = vmatpush1.xpose.msra.mxu0 0.0
    %3003 = vmatprep.subr.mxu0 0.0
    %3004 = vmatpush1.xpose.msra.mxu0 0.0
    %3005 = vmatprep.subr.mxu0 0.0
    %3006 = vmatpush1.xpose.msra.mxu0 0.0
    %3007 = vmatprep.subr.mxu0 0.0
    %3008 = vmatpush1.xpose.msra.mxu0 0.0
    %3009 = vmatprep.subr.mxu0 0.0
    %3010 = vmatpush1.xpose.msra.mxu0 0.0
    %3011 = vmatprep.subr.mxu0 0.0
    %3012 = vmatpush1.xpose.msra.mxu0 0.0
    %3013 = vmatprep.mubr.f32.mxu0 0.0
    %3014 = vmatmul.mubr.f32.gmra.mrb[0].mxu0 %v2947
    %v3015 = vpop.f32.mrb[0].mxu0
    %v3016 = vadd.f32 0.0, %v3015
    %v3017 = vpop.f32.mrb[0].mxu0
    %3018 = vdwg.mxu0
    %v3019 = vsel %vm1818, %v3016, -inf
    %3020 = vmax.xlane.f32.xlu0 %v3019
    %v3021 = vpop.xlane.xlu0 %3020
    %v3022 = vsub.f32 %v3016, %v3021
    %v3023 = vmul.f32 %v3022, 1.442695
    %v3024 = vpow.pop %v3023
    %v3025 = vsel %vm1818, %v3024, 0.0
    %3026 = vadd.xlane.f32.xlu0 %v3025
    %v3027 = vpop.xlane.xlu0 %3026
    %v3028 = vrcp.pop %v3027
    %v3029 = vmul.f32 %v3024, %v3028
    %v3030 = vpack.c.bf16 %v3029, %v3029
    %v3031 = vpack.c.bf16 %v2706, %v2703
    %v3032 = vpack.c.bf16 %v2714, %v2711
    %v3033 = vpack.c.bf16 %v2722, %v2719
    %v3034 = vpack.c.bf16 %v2730, %v2727
    %v3035 = vpack.c.bf16 %v2735, %v2735
    %v3037 = vsel %vm1930, %v3030, 0
    %v3040 = vand.u32 %v3035, %v1936
    %3042 = vmatprep.subr.bf16.mxu0 0
    %3043 = vmatpush1.bf16.msra.mxu0 %v3031
    %3044 = vmatprep.subr.bf16.mxu0 0
    %3045 = vmatpush1.bf16.msra.mxu0 %v3032
    %3046 = vmatprep.subr.bf16.mxu0 0
    %3047 = vmatpush1.bf16.msra.mxu0 %v3033
    %3048 = vmatprep.subr.bf16.mxu0 0
    %3049 = vmatpush1.bf16.msra.mxu0 %v3034
    %3050 = vmatprep.subr.bf16.mxu0 0
    %3051 = vmatpush1.bf16.msra.mxu0 %v3040
    %3052 = vmatprep.subr.bf16.mxu0 0
    %3053 = vmatpush1.bf16.msra.mxu0 0
    %3054 = vmatprep.subr.bf16.mxu0 0
    %3055 = vmatpush1.bf16.msra.mxu0 0
    %3056 = vmatprep.subr.bf16.mxu0 0
    %3057 = vmatpush1.bf16.msra.mxu0 0
    %3058 = vmatprep.subr.bf16.mxu0 0
    %3059 = vmatpush1.bf16.msra.mxu0 0
    %3060 = vmatprep.subr.bf16.mxu0 0
    %3061 = vmatpush1.bf16.msra.mxu0 0
    %3062 = vmatprep.subr.bf16.mxu0 0
    %3063 = vmatpush1.bf16.msra.mxu0 0
    %3064 = vmatprep.subr.bf16.mxu0 0
    %3065 = vmatpush1.bf16.msra.mxu0 0
    %3066 = vmatprep.subr.bf16.mxu0 0
    %3067 = vmatpush1.bf16.msra.mxu0 0
    %3068 = vmatprep.subr.bf16.mxu0 0
    %3069 = vmatpush1.bf16.msra.mxu0 0
    %3070 = vmatprep.subr.bf16.mxu0 0
    %3071 = vmatpush1.bf16.msra.mxu0 0
    %3072 = vmatprep.subr.bf16.mxu0 0
    %3073 = vmatpush1.bf16.msra.mxu0 0
    %3074 = vmatprep.mubr.bf16.mxu0 0
    %3075 = vmatmul.mubr.bf16.gmra.mrb[0].mxu0 %v3037
    %v3076 = vpop.f32.mrb[0].mxu0
    %v3077 = vadd.f32 0.0, %v3076
    %v3078 = vpop.f32.mrb[0].mxu0
    %v3079 = vpop.f32.mrb[0].mxu0
    %v3080 = vpop.f32.mrb[0].mxu0
    %3081 = vdwg.mxu0
    %v3083 = vsel %vm1930, %v2939, 0
    %v3086 = vand.u32 %v2944, %v1936
    %3088 = vmatprep.subr.bf16.mxu0 0
    %3089 = vmatpush1.bf16.msra.mxu0 %v2940
    %3090 = vmatprep.subr.bf16.mxu0 0
    %3091 = vmatpush1.bf16.msra.mxu0 %v2941
    %3092 = vmatprep.subr.bf16.mxu0 0
    %3093 = vmatpush1.bf16.msra.mxu0 %v2942
    %3094 = vmatprep.subr.bf16.mxu0 0
    %3095 = vmatpush1.bf16.msra.mxu0 %v2943
    %3096 = vmatprep.subr.bf16.mxu0 0
    %3097 = vmatpush1.bf16.msra.mxu0 %v3086
    %3098 = vmatprep.subr.bf16.mxu0 0
    %3099 = vmatpush1.bf16.msra.mxu0 0
    %3100 = vmatprep.subr.bf16.mxu0 0
    %3101 = vmatpush1.bf16.msra.mxu0 0
    %3102 = vmatprep.subr.bf16.mxu0 0
    %3103 = vmatpush1.bf16.msra.mxu0 0
    %3104 = vmatprep.subr.bf16.mxu0 0
    %3105 = vmatpush1.bf16.msra.mxu0 0
    %3106 = vmatprep.subr.bf16.mxu0 0
    %3107 = vmatpush1.bf16.msra.mxu0 0
    %3108 = vmatprep.subr.bf16.mxu0 0
    %3109 = vmatpush1.bf16.msra.mxu0 0
    %3110 = vmatprep.subr.bf16.mxu0 0
    %3111 = vmatpush1.bf16.msra.mxu0 0
    %3112 = vmatprep.subr.bf16.mxu0 0
    %3113 = vmatpush1.bf16.msra.mxu0 0
    %3114 = vmatprep.subr.bf16.mxu0 0
    %3115 = vmatpush1.bf16.msra.mxu0 0
    %3116 = vmatprep.subr.bf16.mxu0 0
    %3117 = vmatpush1.bf16.msra.mxu0 0
    %3118 = vmatprep.subr.bf16.mxu0 0
    %3119 = vmatpush1.bf16.msra.mxu0 0
    %3120 = vmatprep.mubr.bf16.mxu0 0
    %3121 = vmatmul.mubr.bf16.gmra.mrb[0].mxu0 %v3083
    %v3122 = vpop.f32.mrb[0].mxu0
    %v3123 = vadd.f32 %v3077, %v3122
    %v3124 = vpop.f32.mrb[0].mxu0
    %v3125 = vpop.f32.mrb[0].mxu0
    %v3126 = vpop.f32.mrb[0].mxu0
    %3127 = vdwg.mxu0
    %v3128 = vadd.f32 %v3123, %v2826
    %v3129 = vpack.c.bf16 %v1251, %v1251
    %v3131 = vsel %vm452, %v3129, 0
    %3133 = vmatprep.subr.bf16.mxu0 0
    %3134 = vmatpush1.bf16.msra.mxu0 %v2781
    %3135 = vmatprep.subr.bf16.mxu0 0
    %3136 = vmatpush1.bf16.msra.mxu0 0
    %3137 = vmatprep.subr.bf16.mxu0 0
    %3138 = vmatpush1.bf16.msra.mxu0 0
    %3139 = vmatprep.subr.bf16.mxu0 0
    %3140 = vmatpush1.bf16.msra.mxu0 0
    %3141 = vmatprep.subr.bf16.mxu0 0
    %3142 = vmatpush1.bf16.msra.mxu0 0
    %3143 = vmatprep.subr.bf16.mxu0 0
    %3144 = vmatpush1.bf16.msra.mxu0 0
    %3145 = vmatprep.subr.bf16.mxu0 0
    %3146 = vmatpush1.bf16.msra.mxu0 0
    %3147 = vmatprep.subr.bf16.mxu0 0
    %3148 = vmatpush1.bf16.msra.mxu0 0
    %3149 = vmatprep.subr.bf16.mxu0 0
    %3150 = vmatpush1.bf16.msra.mxu0 0
    %3151 = vmatprep.subr.bf16.mxu0 0
    %3152 = vmatpush1.bf16.msra.mxu0 0
    %3153 = vmatprep.subr.bf16.mxu0 0
    %3154 = vmatpush1.bf16.msra.mxu0 0
    %3155 = vmatprep.subr.bf16.mxu0 0
    %3156 = vmatpush1.bf16.msra.mxu0 0
    %3157 = vmatprep.subr.bf16.mxu0 0
    %3158 = vmatpush1.bf16.msra.mxu0 0
    %3159 = vmatprep.subr.bf16.mxu0 0
    %3160 = vmatpush1.bf16.msra.mxu0 0
    %3161 = vmatprep.subr.bf16.mxu0 0
    %3162 = vmatpush1.bf16.msra.mxu0 0
    %3163 = vmatprep.subr.bf16.mxu0 0
    %3164 = vmatpush1.bf16.msra.mxu0 0
    %3165 = vmatprep.mubr.bf16.mxu0 0
    %3166 = vmatmul.mubr.bf16.gmra.mrb[0].mxu0 %v3131
    %v3167 = vpop.f32.mrb[0].mxu0
    %v3168 = vadd.f32 %v2776, %v3167
    %v3169 = vpop.f32.mrb[0].mxu0
    %v3170 = vpop.f32.mrb[0].mxu0
    %v3171 = vpop.f32.mrb[0].mxu0
    %3172 = vdwg.mxu0
    %v3173 = vsel %vm1716, %v3168, 0.0
    %v3175 = vsel %vm452, %v3173, 0
    %v3178 = vsel %vm452, %v2496, 0
    %v3181 = vsel %vm452, %v2501, 0
    %v3184 = vsel %vm452, %v2504, 0
    %v3187 = vsel %vm452, %v2509, 0
    %v3190 = vsel %vm452, %v2512, 0
    %v3193 = vsel %vm452, %v2517, 0
    %v3196 = vsel %vm452, %v2520, 0
    %v3199 = vsel %vm452, %v2525, 0
    %v3202 = vsel %vm452, %v2528, 0
    %3204 = vmatprep.subr.mxu0 0.0
    %3205 = vmatpush1.xpose.msra.mxu0 %v3178
    %3206 = vmatprep.subr.mxu0 0.0
    %3207 = vmatpush1.xpose.msra.mxu0 %v3181
    %3208 = vmatprep.subr.mxu0 0.0
    %3209 = vmatpush1.xpose.msra.mxu0 %v3184
    %3210 = vmatprep.subr.mxu0 0.0
    %3211 = vmatpush1.xpose.msra.mxu0 %v3187
    %3212 = vmatprep.subr.mxu0 0.0
    %3213 = vmatpush1.xpose.msra.mxu0 %v3190
    %3214 = vmatprep.subr.mxu0 0.0
    %3215 = vmatpush1.xpose.msra.mxu0 %v3193
    %3216 = vmatprep.subr.mxu0 0.0
    %3217 = vmatpush1.xpose.msra.mxu0 %v3196
    %3218 = vmatprep.subr.mxu0 0.0
    %3219 = vmatpush1.xpose.msra.mxu0 %v3199
    %3220 = vmatprep.subr.mxu0 0.0
    %3221 = vmatpush1.xpose.msra.mxu0 %v3202
    %3222 = vmatprep.subr.mxu0 0.0
    %3223 = vmatpush1.xpose.msra.mxu0 0.0
    %3224 = vmatprep.subr.mxu0 0.0
    %3225 = vmatpush1.xpose.msra.mxu0 0.0
    %3226 = vmatprep.subr.mxu0 0.0
    %3227 = vmatpush1.xpose.msra.mxu0 0.0
    %3228 = vmatprep.subr.mxu0 0.0
    %3229 = vmatpush1.xpose.msra.mxu0 0.0
    %3230 = vmatprep.subr.mxu0 0.0
    %3231 = vmatpush1.xpose.msra.mxu0 0.0
    %3232 = vmatprep.subr.mxu0 0.0
    %3233 = vmatpush1.xpose.msra.mxu0 0.0
    %3234 = vmatprep.subr.mxu0 0.0
    %3235 = vmatpush1.xpose.msra.mxu0 0.0
    %3236 = vmatprep.subr.mxu0 0.0
    %3237 = vmatpush1.xpose.msra.mxu0 0.0
    %3238 = vmatprep.subr.mxu0 0.0
    %3239 = vmatpush1.xpose.msra.mxu0 0.0
    %3240 = vmatprep.subr.mxu0 0.0
    %3241 = vmatpush1.xpose.msra.mxu0 0.0
    %3242 = vmatprep.subr.mxu0 0.0
    %3243 = vmatpush1.xpose.msra.mxu0 0.0
    %3244 = vmatprep.subr.mxu0 0.0
    %3245 = vmatpush1.xpose.msra.mxu0 0.0
    %3246 = vmatprep.subr.mxu0 0.0
    %3247 = vmatpush1.xpose.msra.mxu0 0.0
    %3248 = vmatprep.subr.mxu0 0.0
    %3249 = vmatpush1.xpose.msra.mxu0 0.0
    %3250 = vmatprep.subr.mxu0 0.0
    %3251 = vmatpush1.xpose.msra.mxu0 0.0
    %3252 = vmatprep.subr.mxu0 0.0
    %3253 = vmatpush1.xpose.msra.mxu0 0.0
    %3254 = vmatprep.subr.mxu0 0.0
    %3255 = vmatpush1.xpose.msra.mxu0 0.0
    %3256 = vmatprep.subr.mxu0 0.0
    %3257 = vmatpush1.xpose.msra.mxu0 0.0
    %3258 = vmatprep.subr.mxu0 0.0
    %3259 = vmatpush1.xpose.msra.mxu0 0.0
    %3260 = vmatprep.subr.mxu0 0.0
    %3261 = vmatpush1.xpose.msra.mxu0 0.0
    %3262 = vmatprep.subr.mxu0 0.0
    %3263 = vmatpush1.xpose.msra.mxu0 0.0
    %3264 = vmatprep.subr.mxu0 0.0
    %3265 = vmatpush1.xpose.msra.mxu0 0.0
    %3266 = vmatprep.subr.mxu0 0.0
    %3267 = vmatpush1.xpose.msra.mxu0 0.0
    %3268 = vmatprep.mubr.f32.mxu0 0.0
    %3269 = vmatmul.mubr.f32.gmra.mrb[0].mxu0 %v3175
    %v3270 = vpop.f32.mrb[0].mxu0
    %v3271 = vadd.f32 0.0, %v3270
    %v3272 = vpop.f32.mrb[0].mxu0
    %3273 = vdwg.mxu0
    %v3274 = vsel %vm1818, %v3271, -inf
    %3275 = vmax.xlane.f32.xlu0 %v3274
    %v3276 = vpop.xlane.xlu0 %3275
    %v3277 = vsub.f32 %v3271, %v3276
    %v3278 = vmul.f32 %v3277, 1.442695
    %v3279 = vpow.pop %v3278
    %v3280 = vsel %vm1818, %v3279, 0.0
    %3281 = vadd.xlane.f32.xlu0 %v3280
    %v3282 = vpop.xlane.xlu0 %3281
    %v3283 = vrcp.pop %v3282
    %v3284 = vmul.f32 %v3279, %v3283
    %v3285 = vpack.c.bf16 %v3284, %v3284
    %v3286 = vpack.c.bf16 %v2621, %v2616
    %v3287 = vpack.c.bf16 %v2629, %v2624
    %v3288 = vpack.c.bf16 %v2637, %v2632
    %v3289 = vpack.c.bf16 %v2645, %v2640
    %v3290 = vpack.c.bf16 %v2648, %v2648
    %v3291 = vsel %vm1838, %v3168, 0.0
    %v3293 = vsel %vm452, %v3291, 0
    %3295 = vmatprep.subr.mxu0 0.0
    %3296 = vmatpush1.xpose.msra.mxu0 %v3178
    %3297 = vmatprep.subr.mxu0 0.0
    %3298 = vmatpush1.xpose.msra.mxu0 %v3181
    %3299 = vmatprep.subr.mxu0 0.0
    %3300 = vmatpush1.xpose.msra.mxu0 %v3184
    %3301 = vmatprep.subr.mxu0 0.0
    %3302 = vmatpush1.xpose.msra.mxu0 %v3187
    %3303 = vmatprep.subr.mxu0 0.0
    %3304 = vmatpush1.xpose.msra.mxu0 %v3190
    %3305 = vmatprep.subr.mxu0 0.0
    %3306 = vmatpush1.xpose.msra.mxu0 %v3193
    %3307 = vmatprep.subr.mxu0 0.0
    %3308 = vmatpush1.xpose.msra.mxu0 %v3196
    %3309 = vmatprep.subr.mxu0 0.0
    %3310 = vmatpush1.xpose.msra.mxu0 %v3199
    %3311 = vmatprep.subr.mxu0 0.0
    %3312 = vmatpush1.xpose.msra.mxu0 %v3202
    %3313 = vmatprep.subr.mxu0 0.0
    %3314 = vmatpush1.xpose.msra.mxu0 0.0
    %3315 = vmatprep.subr.mxu0 0.0
    %3316 = vmatpush1.xpose.msra.mxu0 0.0
    %3317 = vmatprep.subr.mxu0 0.0
    %3318 = vmatpush1.xpose.msra.mxu0 0.0
    %3319 = vmatprep.subr.mxu0 0.0
    %3320 = vmatpush1.xpose.msra.mxu0 0.0
    %3321 = vmatprep.subr.mxu0 0.0
    %3322 = vmatpush1.xpose.msra.mxu0 0.0
    %3323 = vmatprep.subr.mxu0 0.0
    %3324 = vmatpush1.xpose.msra.mxu0 0.0
    %3325 = vmatprep.subr.mxu0 0.0
    %3326 = vmatpush1.xpose.msra.mxu0 0.0
    %3327 = vmatprep.subr.mxu0 0.0
    %3328 = vmatpush1.xpose.msra.mxu0 0.0
    %3329 = vmatprep.subr.mxu0 0.0
    %3330 = vmatpush1.xpose.msra.mxu0 0.0
    %3331 = vmatprep.subr.mxu0 0.0
    %3332 = vmatpush1.xpose.msra.mxu0 0.0
    %3333 = vmatprep.subr.mxu0 0.0
    %3334 = vmatpush1.xpose.msra.mxu0 0.0
    %3335 = vmatprep.subr.mxu0 0.0
    %3336 = vmatpush1.xpose.msra.mxu0 0.0
    %3337 = vmatprep.subr.mxu0 0.0
    %3338 = vmatpush1.xpose.msra.mxu0 0.0
    %3339 = vmatprep.subr.mxu0 0.0
    %3340 = vmatpush1.xpose.msra.mxu0 0.0
    %3341 = vmatprep.subr.mxu0 0.0
    %3342 = vmatpush1.xpose.msra.mxu0 0.0
    %3343 = vmatprep.subr.mxu0 0.0
    %3344 = vmatpush1.xpose.msra.mxu0 0.0
    %3345 = vmatprep.subr.mxu0 0.0
    %3346 = vmatpush1.xpose.msra.mxu0 0.0
    %3347 = vmatprep.subr.mxu0 0.0
    %3348 = vmatpush1.xpose.msra.mxu0 0.0
    %3349 = vmatprep.subr.mxu0 0.0
    %3350 = vmatpush1.xpose.msra.mxu0 0.0
    %3351 = vmatprep.subr.mxu0 0.0
    %3352 = vmatpush1.xpose.msra.mxu0 0.0
    %3353 = vmatprep.subr.mxu0 0.0
    %3354 = vmatpush1.xpose.msra.mxu0 0.0
    %3355 = vmatprep.subr.mxu0 0.0
    %3356 = vmatpush1.xpose.msra.mxu0 0.0
    %3357 = vmatprep.subr.mxu0 0.0
    %3358 = vmatpush1.xpose.msra.mxu0 0.0
    %3359 = vmatprep.mubr.f32.mxu0 0.0
    %3360 = vmatmul.mubr.f32.gmra.mrb[0].mxu0 %v3293
    %v3361 = vpop.f32.mrb[0].mxu0
    %v3362 = vadd.f32 0.0, %v3361
    %v3363 = vpop.f32.mrb[0].mxu0
    %3364 = vdwg.mxu0
    %v3365 = vsel %vm1818, %v3362, -inf
    %3366 = vmax.xlane.f32.xlu0 %v3365
    %v3367 = vpop.xlane.xlu0 %3366
    %v3368 = vsub.f32 %v3362, %v3367
    %v3369 = vmul.f32 %v3368, 1.442695
    %v3370 = vpow.pop %v3369
    %v3371 = vsel %vm1818, %v3370, 0.0
    %3372 = vadd.xlane.f32.xlu0 %v3371
    %v3373 = vpop.xlane.xlu0 %3372
    %v3374 = vrcp.pop %v3373
    %v3375 = vmul.f32 %v3370, %v3374
    %v3376 = vpack.c.bf16 %v3375, %v3375
    %v3377 = vpack.c.bf16 %v2743, %v2738
    %v3378 = vpack.c.bf16 %v2751, %v2746
    %v3379 = vpack.c.bf16 %v2759, %v2754
    %v3380 = vpack.c.bf16 %v2767, %v2762
    %v3381 = vpack.c.bf16 %v2770, %v2770
    %v3383 = vsel %vm1930, %v3376, 0
    %v3386 = vand.u32 %v3381, %v1936
    %3388 = vmatprep.subr.bf16.mxu0 0
    %3389 = vmatpush1.bf16.msra.mxu0 %v3377
    %3390 = vmatprep.subr.bf16.mxu0 0
    %3391 = vmatpush1.bf16.msra.mxu0 %v3378
    %3392 = vmatprep.subr.bf16.mxu0 0
    %3393 = vmatpush1.bf16.msra.mxu0 %v3379
    %3394 = vmatprep.subr.bf16.mxu0 0
    %3395 = vmatpush1.bf16.msra.mxu0 %v3380
    %3396 = vmatprep.subr.bf16.mxu0 0
    %3397 = vmatpush1.bf16.msra.mxu0 %v3386
    %3398 = vmatprep.subr.bf16.mxu0 0
    %3399 = vmatpush1.bf16.msra.mxu0 0
    %3400 = vmatprep.subr.bf16.mxu0 0
    %3401 = vmatpush1.bf16.msra.mxu0 0
    %3402 = vmatprep.subr.bf16.mxu0 0
    %3403 = vmatpush1.bf16.msra.mxu0 0
    %3404 = vmatprep.subr.bf16.mxu0 0
    %3405 = vmatpush1.bf16.msra.mxu0 0
    %3406 = vmatprep.subr.bf16.mxu0 0
    %3407 = vmatpush1.bf16.msra.mxu0 0
    %3408 = vmatprep.subr.bf16.mxu0 0
    %3409 = vmatpush1.bf16.msra.mxu0 0
    %3410 = vmatprep.subr.bf16.mxu0 0
    %3411 = vmatpush1.bf16.msra.mxu0 0
    %3412 = vmatprep.subr.bf16.mxu0 0
    %3413 = vmatpush1.bf16.msra.mxu0 0
    %3414 = vmatprep.subr.bf16.mxu0 0
    %3415 = vmatpush1.bf16.msra.mxu0 0
    %3416 = vmatprep.subr.bf16.mxu0 0
    %3417 = vmatpush1.bf16.msra.mxu0 0
    %3418 = vmatprep.subr.bf16.mxu0 0
    %3419 = vmatpush1.bf16.msra.mxu0 0
    %3420 = vmatprep.mubr.bf16.mxu0 0
    %3421 = vmatmul.mubr.bf16.gmra.mrb[0].mxu0 %v3383
    %v3422 = vpop.f32.mrb[0].mxu0
    %v3423 = vadd.f32 0.0, %v3422
    %v3424 = vpop.f32.mrb[0].mxu0
    %v3425 = vpop.f32.mrb[0].mxu0
    %v3426 = vpop.f32.mrb[0].mxu0
    %3427 = vdwg.mxu0
    %v3429 = vsel %vm1930, %v3285, 0
    %v3432 = vand.u32 %v3290, %v1936
    %3434 = vmatprep.subr.bf16.mxu0 0
    %3435 = vmatpush1.bf16.msra.mxu0 %v3286
    %3436 = vmatprep.subr.bf16.mxu0 0
    %3437 = vmatpush1.bf16.msra.mxu0 %v3287
    %3438 = vmatprep.subr.bf16.mxu0 0
    %3439 = vmatpush1.bf16.msra.mxu0 %v3288
    %3440 = vmatprep.subr.bf16.mxu0 0
    %3441 = vmatpush1.bf16.msra.mxu0 %v3289
    %3442 = vmatprep.subr.bf16.mxu0 0
    %3443 = vmatpush1.bf16.msra.mxu0 %v3432
    %3444 = vmatprep.subr.bf16.mxu0 0
    %3445 = vmatpush1.bf16.msra.mxu0 0
    %3446 = vmatprep.subr.bf16.mxu0 0
    %3447 = vmatpush1.bf16.msra.mxu0 0
    %3448 = vmatprep.subr.bf16.mxu0 0
    %3449 = vmatpush1.bf16.msra.mxu0 0
    %3450 = vmatprep.subr.bf16.mxu0 0
    %3451 = vmatpush1.bf16.msra.mxu0 0
    %3452 = vmatprep.subr.bf16.mxu0 0
    %3453 = vmatpush1.bf16.msra.mxu0 0
    %3454 = vmatprep.subr.bf16.mxu0 0
    %3455 = vmatpush1.bf16.msra.mxu0 0
    %3456 = vmatprep.subr.bf16.mxu0 0
    %3457 = vmatpush1.bf16.msra.mxu0 0
    %3458 = vmatprep.subr.bf16.mxu0 0
    %3459 = vmatpush1.bf16.msra.mxu0 0
    %3460 = vmatprep.subr.bf16.mxu0 0
    %3461 = vmatpush1.bf16.msra.mxu0 0
    %3462 = vmatprep.subr.bf16.mxu0 0
    %3463 = vmatpush1.bf16.msra.mxu0 0
    %3464 = vmatprep.subr.bf16.mxu0 0
    %3465 = vmatpush1.bf16.msra.mxu0 0
    %3466 = vmatprep.mubr.bf16.mxu0 0
    %3467 = vmatmul.mubr.bf16.gmra.mrb[0].mxu0 %v3429
    %v3468 = vpop.f32.mrb[0].mxu0
    %v3469 = vadd.f32 %v3423, %v3468
    %v3470 = vpop.f32.mrb[0].mxu0
    %v3471 = vpop.f32.mrb[0].mxu0
    %v3472 = vpop.f32.mrb[0].mxu0
    %3473 = vdwg.mxu0
    %v3474 = vadd.f32 %v3469, %v2826
    %v3475 = vadd.f32 %v2373, %v3128
    %v3476 = vadd.f32 %v2374, %v3474
    %v3477 = vpack.c.bf16 %v2373, %v2373
    %v3478 = vld [vmem:[%s24] sm:$0xf]
    %v3479 = vld [vmem:[%s24 + $0x4] sm:$0xf]
    %v3480 = vpack.c.bf16 %v3475, %v3475
    %v3481 = vld [vmem:[%s24 + $0x8] sm:$0xf]
    %v3482 = vld [vmem:[%s24 + $0xc] sm:$0xf]
    %v3485 = vunpack.c.l.b16 %v3481
    %v3486 = vunpack.c.l.b16 %v3482
    %v3487 = vpack.c.b16 %v3486, %v3485
    %v3490 = vsel %vm452, %v3480, 0
    %3492 = vmatprep.subr.bf16.mxu0 0
    %3493 = vmatpush1.bf16.msra.mxu0 %v3487
    %3494 = vmatprep.subr.bf16.mxu0 0
    %3495 = vmatpush1.bf16.msra.mxu0 0
    %3496 = vmatprep.subr.bf16.mxu0 0
    %3497 = vmatpush1.bf16.msra.mxu0 0
    %3498 = vmatprep.subr.bf16.mxu0 0
    %3499 = vmatpush1.bf16.msra.mxu0 0
    %3500 = vmatprep.subr.bf16.mxu0 0
    %3501 = vmatpush1.bf16.msra.mxu0 0
    %3502 = vmatprep.subr.bf16.mxu0 0
    %3503 = vmatpush1.bf16.msra.mxu0 0
    %3504 = vmatprep.subr.bf16.mxu0 0
    %3505 = vmatpush1.bf16.msra.mxu0 0
    %3506 = vmatprep.subr.bf16.mxu0 0
    %3507 = vmatpush1.bf16.msra.mxu0 0
    %3508 = vmatprep.subr.bf16.mxu0 0
    %3509 = vmatpush1.bf16.msra.mxu0 0
    %3510 = vmatprep.subr.bf16.mxu0 0
    %3511 = vmatpush1.bf16.msra.mxu0 0
    %3512 = vmatprep.subr.bf16.mxu0 0
    %3513 = vmatpush1.bf16.msra.mxu0 0
    %3514 = vmatprep.subr.bf16.mxu0 0
    %3515 = vmatpush1.bf16.msra.mxu0 0
    %3516 = vmatprep.subr.bf16.mxu0 0
    %3517 = vmatpush1.bf16.msra.mxu0 0
    %3518 = vmatprep.subr.bf16.mxu0 0
    %3519 = vmatpush1.bf16.msra.mxu0 0
    %3520 = vmatprep.subr.bf16.mxu0 0
    %3521 = vmatpush1.bf16.msra.mxu0 0
    %3522 = vmatprep.subr.bf16.mxu0 0
    %3523 = vmatpush1.bf16.msra.mxu0 0
    %3524 = vmatprep.mubr.bf16.mxu0 0
    %3525 = vmatmul.mubr.bf16.gmra.mrb[0].mxu0 %v3490
    %v3526 = vpop.f32.mrb[0].mxu0
    %v3527 = vadd.f32 0.0, %v3526
    %v3528 = vpop.f32.mrb[0].mxu0
    %v3529 = vpop.f32.mrb[0].mxu0
    %v3530 = vpop.f32.mrb[0].mxu0
    %3531 = vdwg.mxu0
    %v3534 = vunpack.c.l.b16 %v3478
    %v3535 = vunpack.c.l.b16 %v3479
    %v3536 = vpack.c.b16 %v3535, %v3534
    %v3539 = vsel %vm452, %v3477, 0
    %3541 = vmatprep.subr.bf16.mxu0 0
    %3542 = vmatpush1.bf16.msra.mxu0 %v3536
    %3543 = vmatprep.subr.bf16.mxu0 0
    %3544 = vmatpush1.bf16.msra.mxu0 0
    %3545 = vmatprep.subr.bf16.mxu0 0
    %3546 = vmatpush1.bf16.msra.mxu0 0
    %3547 = vmatprep.subr.bf16.mxu0 0
    %3548 = vmatpush1.bf16.msra.mxu0 0
    %3549 = vmatprep.subr.bf16.mxu0 0
    %3550 = vmatpush1.bf16.msra.mxu0 0
    %3551 = vmatprep.subr.bf16.mxu0 0
    %3552 = vmatpush1.bf16.msra.mxu0 0
    %3553 = vmatprep.subr.bf16.mxu0 0
    %3554 = vmatpush1.bf16.msra.mxu0 0
    %3555 = vmatprep.subr.bf16.mxu0 0
    %3556 = vmatpush1.bf16.msra.mxu0 0
    %3557 = vmatprep.subr.bf16.mxu0 0
    %3558 = vmatpush1.bf16.msra.mxu0 0
    %3559 = vmatprep.subr.bf16.mxu0 0
    %3560 = vmatpush1.bf16.msra.mxu0 0
    %3561 = vmatprep.subr.bf16.mxu0 0
    %3562 = vmatpush1.bf16.msra.mxu0 0
    %3563 = vmatprep.subr.bf16.mxu0 0
    %3564 = vmatpush1.bf16.msra.mxu0 0
    %3565 = vmatprep.subr.bf16.mxu0 0
    %3566 = vmatpush1.bf16.msra.mxu0 0
    %3567 = vmatprep.subr.bf16.mxu0 0
    %3568 = vmatpush1.bf16.msra.mxu0 0
    %3569 = vmatprep.subr.bf16.mxu0 0
    %3570 = vmatpush1.bf16.msra.mxu0 0
    %3571 = vmatprep.subr.bf16.mxu0 0
    %3572 = vmatpush1.bf16.msra.mxu0 0
    %3573 = vmatprep.mubr.bf16.mxu0 0
    %3574 = vmatmul.mubr.bf16.gmra.mrb[0].mxu0 %v3539
    %v3575 = vpop.f32.mrb[0].mxu0
    %v3576 = vadd.f32 %v3527, %v3575
    %v3577 = vpop.f32.mrb[0].mxu0
    %v3578 = vpop.f32.mrb[0].mxu0
    %v3579 = vpop.f32.mrb[0].mxu0
    %3580 = vdwg.mxu0
    %v3581 = vld [vmem:[%s25] sm:$0x1]
    %v3582 = vadd.f32 %v3576, %v3581
    %vm3583 = vcmask 73728
    %3584 = vst.msk [vmem:[#allocation2] sm:$0x1] %vm3583, %v3582
    %v3585 = vpack.c.bf16 %v2374, %v2374
    %v3586 = vld [vmem:[%s24] sm:$0xf]
    %v3587 = vld [vmem:[%s24 + $0x4] sm:$0xf]
    %v3588 = vpack.c.bf16 %v3476, %v3476
    %v3589 = vld [vmem:[%s24 + $0x8] sm:$0xf]
    %v3590 = vld [vmem:[%s24 + $0xc] sm:$0xf]
    %v3593 = vunpack.c.l.b16 %v3589
    %v3594 = vunpack.c.l.b16 %v3590
    %v3595 = vpack.c.b16 %v3594, %v3593
    %v3598 = vsel %vm452, %v3588, 0
    %3600 = vmatprep.subr.bf16.mxu0 0
    %3601 = vmatpush1.bf16.msra.mxu0 %v3595
    %3602 = vmatprep.subr.bf16.mxu0 0
    %3603 = vmatpush1.bf16.msra.mxu0 0
    %3604 = vmatprep.subr.bf16.mxu0 0
    %3605 = vmatpush1.bf16.msra.mxu0 0
    %3606 = vmatprep.subr.bf16.mxu0 0
    %3607 = vmatpush1.bf16.msra.mxu0 0
    %3608 = vmatprep.subr.bf16.mxu0 0
    %3609 = vmatpush1.bf16.msra.mxu0 0
    %3610 = vmatprep.subr.bf16.mxu0 0
    %3611 = vmatpush1.bf16.msra.mxu0 0
    %3612 = vmatprep.subr.bf16.mxu0 0
    %3613 = vmatpush1.bf16.msra.mxu0 0
    %3614 = vmatprep.subr.bf16.mxu0 0
    %3615 = vmatpush1.bf16.msra.mxu0 0
    %3616 = vmatprep.subr.bf16.mxu0 0
    %3617 = vmatpush1.bf16.msra.mxu0 0
    %3618 = vmatprep.subr.bf16.mxu0 0
    %3619 = vmatpush1.bf16.msra.mxu0 0
    %3620 = vmatprep.subr.bf16.mxu0 0
    %3621 = vmatpush1.bf16.msra.mxu0 0
    %3622 = vmatprep.subr.bf16.mxu0 0
    %3623 = vmatpush1.bf16.msra.mxu0 0
    %3624 = vmatprep.subr.bf16.mxu0 0
    %3625 = vmatpush1.bf16.msra.mxu0 0
    %3626 = vmatprep.subr.bf16.mxu0 0
    %3627 = vmatpush1.bf16.msra.mxu0 0
    %3628 = vmatprep.subr.bf16.mxu0 0
    %3629 = vmatpush1.bf16.msra.mxu0 0
    %3630 = vmatprep.subr.bf16.mxu0 0
    %3631 = vmatpush1.bf16.msra.mxu0 0
    %3632 = vmatprep.mubr.bf16.mxu0 0
    %3633 = vmatmul.mubr.bf16.gmra.mrb[0].mxu0 %v3598
    %v3634 = vpop.f32.mrb[0].mxu0
    %v3635 = vadd.f32 0.0, %v3634
    %v3636 = vpop.f32.mrb[0].mxu0
    %v3637 = vpop.f32.mrb[0].mxu0
    %v3638 = vpop.f32.mrb[0].mxu0
    %3639 = vdwg.mxu0
    %v3642 = vunpack.c.l.b16 %v3586
    %v3643 = vunpack.c.l.b16 %v3587
    %v3644 = vpack.c.b16 %v3643, %v3642
    %v3647 = vsel %vm452, %v3585, 0
    %3649 = vmatprep.subr.bf16.mxu0 0
    %3650 = vmatpush1.bf16.msra.mxu0 %v3644
    %3651 = vmatprep.subr.bf16.mxu0 0
    %3652 = vmatpush1.bf16.msra.mxu0 0
    %3653 = vmatprep.subr.bf16.mxu0 0
    %3654 = vmatpush1.bf16.msra.mxu0 0
    %3655 = vmatprep.subr.bf16.mxu0 0
    %3656 = vmatpush1.bf16.msra.mxu0 0
    %3657 = vmatprep.subr.bf16.mxu0 0
    %3658 = vmatpush1.bf16.msra.mxu0 0
    %3659 = vmatprep.subr.bf16.mxu0 0
    %3660 = vmatpush1.bf16.msra.mxu0 0
    %3661 = vmatprep.subr.bf16.mxu0 0
    %3662 = vmatpush1.bf16.msra.mxu0 0
    %3663 = vmatprep.subr.bf16.mxu0 0
    %3664 = vmatpush1.bf16.msra.mxu0 0
    %3665 = vmatprep.subr.bf16.mxu0 0
    %3666 = vmatpush1.bf16.msra.mxu0 0
    %3667 = vmatprep.subr.bf16.mxu0 0
    %3668 = vmatpush1.bf16.msra.mxu0 0
    %3669 = vmatprep.subr.bf16.mxu0 0
    %3670 = vmatpush1.bf16.msra.mxu0 0
    %3671 = vmatprep.subr.bf16.mxu0 0
    %3672 = vmatpush1.bf16.msra.mxu0 0
    %3673 = vmatprep.subr.bf16.mxu0 0
    %3674 = vmatpush1.bf16.msra.mxu0 0
    %3675 = vmatprep.subr.bf16.mxu0 0
    %3676 = vmatpush1.bf16.msra.mxu0 0
    %3677 = vmatprep.subr.bf16.mxu0 0
    %3678 = vmatpush1.bf16.msra.mxu0 0
    %3679 = vmatprep.subr.bf16.mxu0 0
    %3680 = vmatpush1.bf16.msra.mxu0 0
    %3681 = vmatprep.mubr.bf16.mxu0 0
    %3682 = vmatmul.mubr.bf16.gmra.mrb[0].mxu0 %v3647
    %v3683 = vpop.f32.mrb[0].mxu0
    %v3684 = vadd.f32 %v3635, %v3683
    %v3685 = vpop.f32.mrb[0].mxu0
    %v3686 = vpop.f32.mrb[0].mxu0
    %v3687 = vpop.f32.mrb[0].mxu0
    %3688 = vdwg.mxu0
    %v3689 = vld [vmem:[%s25] sm:$0x1]
    %v3690 = vadd.f32 %v3684, %v3689
    %3691 = vst.msk [vmem:[#allocation2 + $0x1] sm:$0x1] %vm3583, %v3690
    // Predicated region
    $region106: #{vit_forward.1} parent=1 // pred_check
      _
    $region107: #{vit_forward.1} parent=1 // pred_check_branch
      %3693 = sbr.rel (0) target = $region109
    $region108: #{vit_forward.1} parent=1 // pred_region
      %s3695 = ssub.s32 32, 32
      %3696 = vsyncadd [#allocation3], %s3695
      %s3698 = sshll.u32 [#allocation2], 4
      %s3699 = int_to_ptr.vmem [resolvable:$true] %s3698
      %3701 = dma.vmem_to_hbm [thread:$0]  %s3699, 32, %s26, [#allocation3]
    $region109: #{vit_forward.1} parent=1 // pred_fallthru
      _
    // Predicated region
    $region110: #{vit_forward.1} parent=1 // pred_check
      _
    $region111: #{vit_forward.1} parent=1 // pred_check_branch
      %3703 = sbr.rel (0) target = $region113
    $region112: #{vit_forward.1} parent=1 // pred_region
      %3704 = dma.done [#allocation3], 32
    $region113: #{vit_forward.1} parent=1 // pred_fallthru
      _
    %3705 = vsyncpa [#allocation3], 1

</llo_original>
